<compile_context>
chip_gen: v7x
topology: tpu7x:2x2x1
jax: 0.10.0
libtpu: 0.0.40
codegen_flags: <defaults>
</compile_context>

<pallas_src>
import functools

import jax
import jax.numpy as jnp
import numpy as np
from jax.experimental import pallas as pl
from jax.experimental.pallas import tpu as pltpu

NUM_HW_LAYERS = 2


def _pick_row_tile(n, target=512):
    """Largest row tile <= target that divides n and is a multiple of 8."""
    if n <= target:
        return n
    tm = target
    while tm >= 8:
        if n % tm == 0:
            return tm
        tm -= 8
    return n


def _pick_time_tile(t, target=16):
    """Timesteps processed per grid step (multiple of 8, or the full T)."""
    if t <= target:
        return t
    for tt in (target, 8):
        if t % tt == 0:
            return tt
    return t


# ----------------------------------------------------------------------------
# Kernel 1: Highway network (2 layers) fused with the LSTM input projection.
#   x -> highway(x) -> G = highway(x) @ [W_ih_f | W_ih_b]   (per row)
# Tiled over rows of the flattened (B*T, D) matrix; weights use constant
# index maps so they stay resident.
# ----------------------------------------------------------------------------
def highway_proj_kernel(x_ref, wf_ref, bf_ref, wg_ref, bg_ref, wih_ref,
                        gf_ref, gb_ref, *, hidden):
    x = x_ref[...]                                            # (TM, D)
    for layer in range(NUM_HW_LAYERS):
        flow = jnp.maximum(
            jnp.dot(x, wf_ref[layer], preferred_element_type=jnp.float32)
            + bf_ref[layer], 0.0)
        gate = jax.nn.sigmoid(
            jnp.dot(x, wg_ref[layer], preferred_element_type=jnp.float32)
            + bg_ref[layer])
        x = gate * flow + (1.0 - gate) * x
    # One big, well-shaped MXU matmul: (TM, D) @ (D, 8H).
    g = jnp.dot(x, wih_ref[...], preferred_element_type=jnp.float32)
    gf_ref[...] = g[:, :4 * hidden]
    gb_ref[...] = g[:, 4 * hidden:]


def highway_proj(x_nd, wf_t, bf, wg_t, bg, wih_cat, hidden, *, row_tile=None):
    N, D = x_nd.shape
    H = hidden
    TM = row_tile if row_tile is not None else _pick_row_tile(N)
    assert N % TM == 0
    kernel = functools.partial(highway_proj_kernel, hidden=H)
    return pl.pallas_call(
        kernel,
        out_shape=(jax.ShapeDtypeStruct((N, 4 * H), jnp.float32),
                   jax.ShapeDtypeStruct((N, 4 * H), jnp.float32)),
        grid=(N // TM,),
        in_specs=[
            pl.BlockSpec((TM, D), lambda i: (i, 0)),
            pl.BlockSpec((NUM_HW_LAYERS, D, D), lambda i: (0, 0, 0)),
            pl.BlockSpec((NUM_HW_LAYERS, 1, D), lambda i: (0, 0, 0)),
            pl.BlockSpec((NUM_HW_LAYERS, D, D), lambda i: (0, 0, 0)),
            pl.BlockSpec((NUM_HW_LAYERS, 1, D), lambda i: (0, 0, 0)),
            pl.BlockSpec((D, 8 * H), lambda i: (0, 0)),
        ],
        out_specs=[
            pl.BlockSpec((TM, 4 * H), lambda i: (i, 0)),
            pl.BlockSpec((TM, 4 * H), lambda i: (i, 0)),
        ],
        compiler_params=pltpu.CompilerParams(
            dimension_semantics=("parallel",)),
    )(x_nd, wf_t, bf, wg_t, bg, wih_cat)


# ----------------------------------------------------------------------------
# Kernel 2: fused bidirectional LSTM recurrence.
# Grid over time chunks (TT timesteps / step).  The fwd direction consumes
# the chunk at block index i, the bwd direction the chunk at Tt-1-i (time
# reversal folded into the index maps).  Both recurrences share one
# block-diagonal matmul:  [h_f|h_b](B,2H) @ W_bd(2H,8H) -> (B,8H) gates.
# Gate order per direction follows PyTorch: i, f, g, o.
# ----------------------------------------------------------------------------
def bilstm_kernel(gf_ref, gb_ref, whh_ref, b_ref, of_ref, ob_ref,
                  h_sc, c_sc, *, hidden, tt):
    H = hidden

    @pl.when(pl.program_id(0) == 0)
    def _():
        h_sc[...] = jnp.zeros_like(h_sc)
        c_sc[...] = jnp.zeros_like(c_sc)

    h = h_sc[...]                                             # (B, 2H) [f|b]
    c = c_sc[...]                                             # (B, 2H) [f|b]
    w = whh_ref[...]                                          # (2H, 8H) blkdiag
    b = b_ref[...]                                            # (1, 8H)  [b_f|b_b]
    gf_blk = gf_ref[...]                                      # (B, TT, 4H)
    gb_blk = gb_ref[...]                                      # (B, TT, 4H)

    def gate_update(g4, c_dir):
        i_g = jax.nn.sigmoid(g4[:, 0 * H:1 * H])
        f_g = jax.nn.sigmoid(g4[:, 1 * H:2 * H])
        g_g = jnp.tanh(g4[:, 2 * H:3 * H])
        o_g = jax.nn.sigmoid(g4[:, 3 * H:4 * H])
        c_new = f_g * c_dir + i_g * g_g
        h_new = o_g * jnp.tanh(c_new)
        return h_new, c_new

    # Fully unrolled inner time loop (static indices -> static slices).
    for s in range(tt):
        rec = jnp.dot(h, w, preferred_element_type=jnp.float32) + b  # (B, 8H)
        hf, cf = gate_update(gf_blk[:, s, :] + rec[:, :4 * H], c[:, :H])
        hb, cb = gate_update(gb_blk[:, tt - 1 - s, :] + rec[:, 4 * H:], c[:, H:])
        h = jnp.concatenate([hf, hb], axis=-1)
        c = jnp.concatenate([cf, cb], axis=-1)
        of_ref[:, s, :] = hf
        ob_ref[:, tt - 1 - s, :] = hb

    h_sc[...] = h
    c_sc[...] = c


def bilstm(gf, gb, whh_bd, b_cat, hidden, *, time_tile=None):
    B, T, _ = gf.shape
    H = hidden
    TT = time_tile if time_tile is not None else _pick_time_tile(T)
    assert T % TT == 0
    Tt = T // TT
    kernel = functools.partial(bilstm_kernel, hidden=H, tt=TT)
    return pl.pallas_call(
        kernel,
        out_shape=(jax.ShapeDtypeStruct((B, T, H), jnp.float32),
                   jax.ShapeDtypeStruct((B, T, H), jnp.float32)),
        grid=(Tt,),
        in_specs=[
            pl.BlockSpec((B, TT, 4 * H), lambda i: (0, i, 0)),
            pl.BlockSpec((B, TT, 4 * H), lambda i: (0, Tt - 1 - i, 0)),
            pl.BlockSpec((2 * H, 8 * H), lambda i: (0, 0)),
            pl.BlockSpec((1, 8 * H), lambda i: (0, 0)),
        ],
        out_specs=[
            pl.BlockSpec((B, TT, H), lambda i: (0, i, 0)),
            pl.BlockSpec((B, TT, H), lambda i: (0, Tt - 1 - i, 0)),
        ],
        scratch_shapes=[
            pltpu.VMEM((B, 2 * H), jnp.float32),   # h = [h_f | h_b]
            pltpu.VMEM((B, 2 * H), jnp.float32),   # c = [c_f | c_b]
        ],
        compiler_params=pltpu.CompilerParams(
            dimension_semantics=("arbitrary",)),
    )(gf, gb, whh_bd, b_cat)


# ----------------------------------------------------------------------------
# Full ContextualEmbedding forward (batch_first in / batch_first out).
# ----------------------------------------------------------------------------
def contextual_embedding(x_btd, params, *, row_tile=None, time_tile=None):
    B, T, D = x_btd.shape
    H = params["whh_f_t"].shape[0]
    N = B * T

    # Derived, kernel-friendly weight layouts (tiny, built once per call).
    wih_cat = jnp.concatenate([params["wih_f_t"], params["wih_b_t"]], axis=1)
    whh_bd = jnp.zeros((2 * H, 8 * H), jnp.float32)
    whh_bd = whh_bd.at[:H, :4 * H].set(params["whh_f_t"])
    whh_bd = whh_bd.at[H:, 4 * H:].set(params["whh_b_t"])
    b_cat = jnp.concatenate([params["b_f"], params["b_b"]], axis=1)

    gf, gb = highway_proj(
        x_btd.reshape(N, D).astype(jnp.float32),
        params["hw_wf_t"], params["hw_bf"], params["hw_wg_t"], params["hw_bg"],
        wih_cat, H, row_tile=row_tile)
    gf = gf.reshape(B, T, 4 * H)          # free reshape (row-major)
    gb = gb.reshape(B, T, 4 * H)

    out_f, out_b = bilstm(gf, gb, whh_bd, b_cat, H, time_tile=time_tile)
    return jnp.concatenate([out_f, out_b], axis=-1)           # (B, T, 2H)


# ----------------------------------------------------------------------------
# Pure-JAX reference (same math) for verification.
# ----------------------------------------------------------------------------
def _ref_highway(x, wf_t, bf, wg_t, bg):
    for layer in range(NUM_HW_LAYERS):
        flow = jnp.maximum(x @ wf_t[layer] + bf[layer], 0.0)
        gate = jax.nn.sigmoid(x @ wg_t[layer] + bg[layer])
        x = gate * flow + (1.0 - gate) * x
    return x


def _ref_lstm_dir(x_tbd, wih_t, whh_t, b, reverse):
    T, B, D = x_tbd.shape
    H = whh_t.shape[0]
    xs = x_tbd[::-1] if reverse else x_tbd

    def step(carry, x_t):
        h, c = carry
        gates = x_t @ wih_t + h @ whh_t + b
        i_g = jax.nn.sigmoid(gates[:, :H])
        f_g = jax.nn.sigmoid(gates[:, H:2 * H])
        g_g = jnp.tanh(gates[:, 2 * H:3 * H])
        o_g = jax.nn.sigmoid(gates[:, 3 * H:])
        c = f_g * c + i_g * g_g
        h = o_g * jnp.tanh(c)
        return (h, c), h

    _, hs = jax.lax.scan(step, (jnp.zeros((B, H)), jnp.zeros((B, H))), xs)
    return hs[::-1] if reverse else hs


def _ref_forward(x_btd, p):
    B, T, D = x_btd.shape
    hw = _ref_highway(x_btd.reshape(B * T, D), p["hw_wf_t"], p["hw_bf"],
                      p["hw_wg_t"], p["hw_bg"]).reshape(B, T, D)
    x_tbd = jnp.transpose(hw, (1, 0, 2))
    of = _ref_lstm_dir(x_tbd, p["wih_f_t"], p["whh_f_t"], p["b_f"], False)
    ob = _ref_lstm_dir(x_tbd, p["wih_b_t"], p["whh_b_t"], p["b_b"], True)
    return jnp.transpose(jnp.concatenate([of, ob], -1), (1, 0, 2))


# ----------------------------------------------------------------------------
def init_params(key, input_dim, hidden_dim):
    D, H = input_dim, hidden_dim
    ks = jax.random.split(key, 12)
    u = lambda k, shape, bound: jax.random.uniform(
        k, shape, jnp.float32, -bound, bound)
    kd = 1.0 / np.sqrt(D)
    kh = 1.0 / np.sqrt(H)
    params = {
        # Highway: stacked [layer] weights, stored transposed (in, out).
        "hw_wf_t": u(ks[0], (NUM_HW_LAYERS, D, D), kd),
        "hw_bf":   u(ks[1], (NUM_HW_LAYERS, 1, D), kd),
        "hw_wg_t": u(ks[2], (NUM_HW_LAYERS, D, D), kd),
        "hw_bg":   u(ks[3], (NUM_HW_LAYERS, 1, D), kd),
        # LSTM forward direction (weights transposed; biases combined b_ih+b_hh).
        "wih_f_t": u(ks[4], (D, 4 * H), kh),
        "whh_f_t": u(ks[5], (H, 4 * H), kh),
        "b_f":     u(ks[6], (1, 4 * H), kh) + u(ks[7], (1, 4 * H), kh),
        # LSTM backward direction.
        "wih_b_t": u(ks[8], (D, 4 * H), kh),
        "whh_b_t": u(ks[9], (H, 4 * H), kh),
        "b_b":     u(ks[10], (1, 4 * H), kh) + u(ks[11], (1, 4 * H), kh),
    }
    return params


if __name__ == "__main__":
    B, T, INPUT_DIM, HIDDEN_DIM = 2, 16, 32, 32
    key = jax.random.PRNGKey(0)
    k_x, k_p = jax.random.split(key)
    x = jax.random.normal(k_x, (B, T, INPUT_DIM), jnp.float32)
    params = init_params(k_p, INPUT_DIM, HIDDEN_DIM)

    # Small explicit tiles so both kernels exercise multi-step grids
    # (row_tile=16 -> 2 highway tiles, time_tile=8 -> 2 LSTM time chunks).
    fwd = jax.jit(functools.partial(contextual_embedding,
                                    row_tile=16, time_tile=8))
    out = jax.block_until_ready(fwd(x, params))
    assert out.shape == (B, T, 2 * HIDDEN_DIM), out.shape

    ref = jax.block_until_ready(_ref_forward(x, params))
    np.testing.assert_allclose(np.asarray(out), np.asarray(ref),
                               rtol=1e-5, atol=1e-5)
    print("KERNEL_OK")
</pallas_src>

<mosaic_0001>
module attributes {stable_mosaic.version = 11 : i64} {
  func.func @highway_proj_kernel(%arg0: i32, %arg1: memref<16x32xf32, #tpu.memory_space<vmem>>, %arg2: memref<2x32x32xf32, #tpu.memory_space<vmem>>, %arg3: memref<2x1x32xf32, #tpu.memory_space<vmem>>, %arg4: memref<2x32x32xf32, #tpu.memory_space<vmem>>, %arg5: memref<2x1x32xf32, #tpu.memory_space<vmem>>, %arg6: memref<32x256xf32, #tpu.memory_space<vmem>>, %arg7: memref<16x128xf32, #tpu.memory_space<vmem>>, %arg8: memref<16x128xf32, #tpu.memory_space<vmem>>) attributes {dimension_semantics = [#tpu.dimension_semantics<parallel>], iteration_bounds = array<i64: 2>, scalar_prefetch = 0 : i64, scratch_operands = 0 : i64, tpu.core_type = #tpu.core_type<tc>, window_params = [{transform_indices = @transform_0, window_bounds = array<i64: 16, 32>}, {pipeline_mode = #tpu.pipeline_mode<synchronous>, transform_indices = @transform_1, window_bounds = array<i64: 2, 32, 32>}, {pipeline_mode = #tpu.pipeline_mode<synchronous>, transform_indices = @transform_2, window_bounds = array<i64: 2, 1, 32>}, {pipeline_mode = #tpu.pipeline_mode<synchronous>, transform_indices = @transform_3, window_bounds = array<i64: 2, 32, 32>}, {pipeline_mode = #tpu.pipeline_mode<synchronous>, transform_indices = @transform_4, window_bounds = array<i64: 2, 1, 32>}, {pipeline_mode = #tpu.pipeline_mode<synchronous>, transform_indices = @transform_5, window_bounds = array<i64: 32, 256>}, {transform_indices = @transform_6, window_bounds = array<i64: 16, 128>}, {transform_indices = @transform_7, window_bounds = array<i64: 16, 128>}]} {
    %c0 = arith.constant 0 : index
    %c0_0 = arith.constant 0 : index
    %0 = vector.load %arg1[%c0, %c0_0] : memref<16x32xf32, #tpu.memory_space<vmem>>, vector<16x32xf32>
    %c0_1 = arith.constant 0 : index
    %c0_2 = arith.constant 0 : index
    %c0_3 = arith.constant 0 : index
    %1 = vector.load %arg2[%c0_1, %c0_2, %c0_3] : memref<2x32x32xf32, #tpu.memory_space<vmem>>, vector<1x32x32xf32>
    %2 = vector.shape_cast %1 : vector<1x32x32xf32> to vector<32x32xf32>
    %cst = arith.constant dense<0.000000e+00> : vector<16x32xf32>
    %3 = tpu.matmul %0, %2, %cst {dimension_numbers = #tpu.dot_dimension_numbers<[1], [0], [0], [1], [0, 0, 1, 1], [], []>} : vector<16x32xf32>, vector<32x32xf32>, vector<16x32xf32> -> vector<16x32xf32>
    %c0_4 = arith.constant 0 : index
    %c0_5 = arith.constant 0 : index
    %c0_6 = arith.constant 0 : index
    %4 = vector.load %arg3[%c0_4, %c0_5, %c0_6] : memref<2x1x32xf32, #tpu.memory_space<vmem>>, vector<1x1x32xf32>
    %5 = vector.shape_cast %4 : vector<1x1x32xf32> to vector<1x32xf32>
    %6 = vector.broadcast %5 : vector<1x32xf32> to vector<16x32xf32>
    %7 = arith.addf %3, %6 : vector<16x32xf32>
    %cst_7 = arith.constant 0.000000e+00 : f32
    %8 = vector.broadcast %cst_7 : f32 to vector<16x32xf32>
    %9 = arith.maximumf %7, %8 : vector<16x32xf32>
    %c0_8 = arith.constant 0 : index
    %c0_9 = arith.constant 0 : index
    %c0_10 = arith.constant 0 : index
    %10 = vector.load %arg4[%c0_8, %c0_9, %c0_10] : memref<2x32x32xf32, #tpu.memory_space<vmem>>, vector<1x32x32xf32>
    %11 = vector.shape_cast %10 : vector<1x32x32xf32> to vector<32x32xf32>
    %cst_11 = arith.constant dense<0.000000e+00> : vector<16x32xf32>
    %12 = tpu.matmul %0, %11, %cst_11 {dimension_numbers = #tpu.dot_dimension_numbers<[1], [0], [0], [1], [0, 0, 1, 1], [], []>} : vector<16x32xf32>, vector<32x32xf32>, vector<16x32xf32> -> vector<16x32xf32>
    %c0_12 = arith.constant 0 : index
    %c0_13 = arith.constant 0 : index
    %c0_14 = arith.constant 0 : index
    %13 = vector.load %arg5[%c0_12, %c0_13, %c0_14] : memref<2x1x32xf32, #tpu.memory_space<vmem>>, vector<1x1x32xf32>
    %14 = vector.shape_cast %13 : vector<1x1x32xf32> to vector<1x32xf32>
    %15 = vector.broadcast %14 : vector<1x32xf32> to vector<16x32xf32>
    %16 = arith.addf %12, %15 : vector<16x32xf32>
    %17 = arith.negf %16 : vector<16x32xf32>
    %18 = math.exp %17 : vector<16x32xf32>
    %cst_15 = arith.constant 1.000000e+00 : f32
    %19 = vector.broadcast %cst_15 : f32 to vector<16x32xf32>
    %20 = arith.addf %19, %18 : vector<16x32xf32>
    %21 = arith.divf %19, %20 : vector<16x32xf32>
    %22 = arith.mulf %21, %9 : vector<16x32xf32>
    %cst_16 = arith.constant 1.000000e+00 : f32
    %23 = vector.broadcast %cst_16 : f32 to vector<16x32xf32>
    %24 = arith.subf %23, %21 : vector<16x32xf32>
    %25 = arith.mulf %24, %0 : vector<16x32xf32>
    %26 = arith.addf %22, %25 : vector<16x32xf32>
    %c1 = arith.constant 1 : index
    %c0_17 = arith.constant 0 : index
    %c0_18 = arith.constant 0 : index
    %27 = vector.load %arg2[%c1, %c0_17, %c0_18] : memref<2x32x32xf32, #tpu.memory_space<vmem>>, vector<1x32x32xf32>
    %28 = vector.shape_cast %27 : vector<1x32x32xf32> to vector<32x32xf32>
    %cst_19 = arith.constant dense<0.000000e+00> : vector<16x32xf32>
    %29 = tpu.matmul %26, %28, %cst_19 {dimension_numbers = #tpu.dot_dimension_numbers<[1], [0], [0], [1], [0, 0, 1, 1], [], []>} : vector<16x32xf32>, vector<32x32xf32>, vector<16x32xf32> -> vector<16x32xf32>
    %c1_20 = arith.constant 1 : index
    %c0_21 = arith.constant 0 : index
    %c0_22 = arith.constant 0 : index
    %30 = vector.load %arg3[%c1_20, %c0_21, %c0_22] : memref<2x1x32xf32, #tpu.memory_space<vmem>>, vector<1x1x32xf32>
    %31 = vector.shape_cast %30 : vector<1x1x32xf32> to vector<1x32xf32>
    %32 = vector.broadcast %31 : vector<1x32xf32> to vector<16x32xf32>
    %33 = arith.addf %29, %32 : vector<16x32xf32>
    %cst_23 = arith.constant 0.000000e+00 : f32
    %34 = vector.broadcast %cst_23 : f32 to vector<16x32xf32>
    %35 = arith.maximumf %33, %34 : vector<16x32xf32>
    %c1_24 = arith.constant 1 : index
    %c0_25 = arith.constant 0 : index
    %c0_26 = arith.constant 0 : index
    %36 = vector.load %arg4[%c1_24, %c0_25, %c0_26] : memref<2x32x32xf32, #tpu.memory_space<vmem>>, vector<1x32x32xf32>
    %37 = vector.shape_cast %36 : vector<1x32x32xf32> to vector<32x32xf32>
    %cst_27 = arith.constant dense<0.000000e+00> : vector<16x32xf32>
    %38 = tpu.matmul %26, %37, %cst_27 {dimension_numbers = #tpu.dot_dimension_numbers<[1], [0], [0], [1], [0, 0, 1, 1], [], []>} : vector<16x32xf32>, vector<32x32xf32>, vector<16x32xf32> -> vector<16x32xf32>
    %c1_28 = arith.constant 1 : index
    %c0_29 = arith.constant 0 : index
    %c0_30 = arith.constant 0 : index
    %39 = vector.load %arg5[%c1_28, %c0_29, %c0_30] : memref<2x1x32xf32, #tpu.memory_space<vmem>>, vector<1x1x32xf32>
    %40 = vector.shape_cast %39 : vector<1x1x32xf32> to vector<1x32xf32>
    %41 = vector.broadcast %40 : vector<1x32xf32> to vector<16x32xf32>
    %42 = arith.addf %38, %41 : vector<16x32xf32>
    %43 = arith.negf %42 : vector<16x32xf32>
    %44 = math.exp %43 : vector<16x32xf32>
    %cst_31 = arith.constant 1.000000e+00 : f32
    %45 = vector.broadcast %cst_31 : f32 to vector<16x32xf32>
    %46 = arith.addf %45, %44 : vector<16x32xf32>
    %47 = arith.divf %45, %46 : vector<16x32xf32>
    %48 = arith.mulf %47, %35 : vector<16x32xf32>
    %cst_32 = arith.constant 1.000000e+00 : f32
    %49 = vector.broadcast %cst_32 : f32 to vector<16x32xf32>
    %50 = arith.subf %49, %47 : vector<16x32xf32>
    %51 = arith.mulf %50, %26 : vector<16x32xf32>
    %52 = arith.addf %48, %51 : vector<16x32xf32>
    %c0_33 = arith.constant 0 : index
    %c0_34 = arith.constant 0 : index
    %53 = vector.load %arg6[%c0_33, %c0_34] : memref<32x256xf32, #tpu.memory_space<vmem>>, vector<32x256xf32>
    %cst_35 = arith.constant dense<0.000000e+00> : vector<16x256xf32>
    %54 = tpu.matmul %52, %53, %cst_35 {dimension_numbers = #tpu.dot_dimension_numbers<[1], [0], [0], [1], [0, 0, 1, 1], [], []>} : vector<16x32xf32>, vector<32x256xf32>, vector<16x256xf32> -> vector<16x256xf32>
    %55 = vector.extract_strided_slice %54 {offsets = [0, 0], sizes = [16, 128], strides = [1, 1]} : vector<16x256xf32> to vector<16x128xf32>
    %c0_36 = arith.constant 0 : index
    %c0_37 = arith.constant 0 : index
    %56 = vector.load %arg7[%c0_36, %c0_37] : memref<16x128xf32, #tpu.memory_space<vmem>>, vector<16x128xf32>
    tpu.vector_store %arg7[%c0_36, %c0_37], %55 {strides = array<i32>} : memref<16x128xf32, #tpu.memory_space<vmem>>, vector<16x128xf32>,
    %57 = vector.extract_strided_slice %54 {offsets = [0, 128], sizes = [16, 128], strides = [1, 1]} : vector<16x256xf32> to vector<16x128xf32>
    %c0_38 = arith.constant 0 : index
    %c0_39 = arith.constant 0 : index
    %58 = vector.load %arg8[%c0_38, %c0_39] : memref<16x128xf32, #tpu.memory_space<vmem>>, vector<16x128xf32>
    tpu.vector_store %arg8[%c0_38, %c0_39], %57 {strides = array<i32>} : memref<16x128xf32, #tpu.memory_space<vmem>>, vector<16x128xf32>,
    return
  }
  func.func @transform_0(%arg0: i32) -> (i32, i32) {
    %c0_i32 = arith.constant 0 : i32
    %c0_i32_0 = arith.constant 0 : i32
    return %arg0, %c0_i32 : i32, i32
  }
  func.func @transform_1(%arg0: i32) -> (i32, i32, i32) {
    %c0_i32 = arith.constant 0 : i32
    %c0_i32_0 = arith.constant 0 : i32
    %c0_i32_1 = arith.constant 0 : i32
    %c0_i32_2 = arith.constant 0 : i32
    return %c0_i32, %c0_i32_0, %c0_i32_1 : i32, i32, i32
  }
  func.func @transform_2(%arg0: i32) -> (i32, i32, i32) {
    %c0_i32 = arith.constant 0 : i32
    %c0_i32_0 = arith.constant 0 : i32
    %c0_i32_1 = arith.constant 0 : i32
    %c0_i32_2 = arith.constant 0 : i32
    return %c0_i32, %c0_i32_0, %c0_i32_1 : i32, i32, i32
  }
  func.func @transform_3(%arg0: i32) -> (i32, i32, i32) {
    %c0_i32 = arith.constant 0 : i32
    %c0_i32_0 = arith.constant 0 : i32
    %c0_i32_1 = arith.constant 0 : i32
    %c0_i32_2 = arith.constant 0 : i32
    return %c0_i32, %c0_i32_0, %c0_i32_1 : i32, i32, i32
  }
  func.func @transform_4(%arg0: i32) -> (i32, i32, i32) {
    %c0_i32 = arith.constant 0 : i32
    %c0_i32_0 = arith.constant 0 : i32
    %c0_i32_1 = arith.constant 0 : i32
    %c0_i32_2 = arith.constant 0 : i32
    return %c0_i32, %c0_i32_0, %c0_i32_1 : i32, i32, i32
  }
  func.func @transform_5(%arg0: i32) -> (i32, i32) {
    %c0_i32 = arith.constant 0 : i32
    %c0_i32_0 = arith.constant 0 : i32
    %c0_i32_1 = arith.constant 0 : i32
    return %c0_i32, %c0_i32_0 : i32, i32
  }
  func.func @transform_6(%arg0: i32) -> (i32, i32) {
    %c0_i32 = arith.constant 0 : i32
    %c0_i32_0 = arith.constant 0 : i32
    return %arg0, %c0_i32 : i32, i32
  }
  func.func @transform_7(%arg0: i32) -> (i32, i32) {
    %c0_i32 = arith.constant 0 : i32
    %c0_i32_0 = arith.constant 0 : i32
    return %arg0, %c0_i32 : i32, i32
  }
}

module attributes {stable_mosaic.version = 11 : i64} {
  func.func @bilstm_kernel(%arg0: i32, %arg1: memref<2x8x128xf32, #tpu.memory_space<vmem>>, %arg2: memref<2x8x128xf32, #tpu.memory_space<vmem>>, %arg3: memref<64x256xf32, #tpu.memory_space<vmem>>, %arg4: memref<1x256xf32, #tpu.memory_space<vmem>>, %arg5: memref<2x8x32xf32, #tpu.memory_space<vmem>>, %arg6: memref<2x8x32xf32, #tpu.memory_space<vmem>>, %arg7: memref<2x64xf32, #tpu.memory_space<vmem>>, %arg8: memref<2x64xf32, #tpu.memory_space<vmem>>) attributes {dimension_semantics = [#tpu.dimension_semantics<arbitrary>], iteration_bounds = array<i64: 2>, scalar_prefetch = 0 : i64, scratch_operands = 2 : i64, tpu.core_type = #tpu.core_type<tc>, window_params = [{transform_indices = @transform_0, window_bounds = array<i64: 2, 8, 128>}, {transform_indices = @transform_1, window_bounds = array<i64: 2, 8, 128>}, {pipeline_mode = #tpu.pipeline_mode<synchronous>, transform_indices = @transform_2, window_bounds = array<i64: 64, 256>}, {pipeline_mode = #tpu.pipeline_mode<synchronous>, transform_indices = @transform_3, window_bounds = array<i64: 1, 256>}, {transform_indices = @transform_4, window_bounds = array<i64: 2, 8, 32>}, {transform_indices = @transform_5, window_bounds = array<i64: 2, 8, 32>}]} {
    %c0_i32 = arith.constant 0 : i32
    %0 = arith.cmpi eq, %arg0, %c0_i32 : i32
    %1 = arith.extui %0 : i1 to i32
    %c0_i32_0 = arith.constant 0 : i32
    %2 = arith.cmpi ne, %1, %c0_i32_0 : i32
    scf.if %2 {
      %cst_114 = arith.constant 0.000000e+00 : f32
      %579 = vector.broadcast %cst_114 : f32 to vector<2x64xf32>
      %c0_115 = arith.constant 0 : index
      %c0_116 = arith.constant 0 : index
      %580 = vector.load %arg7[%c0_115, %c0_116] : memref<2x64xf32, #tpu.memory_space<vmem>>, vector<2x64xf32>
      tpu.vector_store %arg7[%c0_115, %c0_116], %579 {strides = array<i32>} : memref<2x64xf32, #tpu.memory_space<vmem>>, vector<2x64xf32>,
      %cst_117 = arith.constant 0.000000e+00 : f32
      %581 = vector.broadcast %cst_117 : f32 to vector<2x64xf32>
      %c0_118 = arith.constant 0 : index
      %c0_119 = arith.constant 0 : index
      %582 = vector.load %arg8[%c0_118, %c0_119] : memref<2x64xf32, #tpu.memory_space<vmem>>, vector<2x64xf32>
      tpu.vector_store %arg8[%c0_118, %c0_119], %581 {strides = array<i32>} : memref<2x64xf32, #tpu.memory_space<vmem>>, vector<2x64xf32>,
    } else {
    }
    %c0 = arith.constant 0 : index
    %c0_1 = arith.constant 0 : index
    %3 = vector.load %arg7[%c0, %c0_1] : memref<2x64xf32, #tpu.memory_space<vmem>>, vector<2x64xf32>
    %c0_2 = arith.constant 0 : index
    %c0_3 = arith.constant 0 : index
    %4 = vector.load %arg8[%c0_2, %c0_3] : memref<2x64xf32, #tpu.memory_space<vmem>>, vector<2x64xf32>
    %c0_4 = arith.constant 0 : index
    %c0_5 = arith.constant 0 : index
    %5 = vector.load %arg3[%c0_4, %c0_5] : memref<64x256xf32, #tpu.memory_space<vmem>>, vector<64x256xf32>
    %c0_6 = arith.constant 0 : index
    %c0_7 = arith.constant 0 : index
    %6 = vector.load %arg4[%c0_6, %c0_7] : memref<1x256xf32, #tpu.memory_space<vmem>>, vector<1x256xf32>
    %c0_8 = arith.constant 0 : index
    %c0_9 = arith.constant 0 : index
    %c0_10 = arith.constant 0 : index
    %7 = vector.load %arg1[%c0_8, %c0_9, %c0_10] : memref<2x8x128xf32, #tpu.memory_space<vmem>>, vector<2x8x128xf32>
    %c0_11 = arith.constant 0 : index
    %c0_12 = arith.constant 0 : index
    %c0_13 = arith.constant 0 : index
    %8 = vector.load %arg2[%c0_11, %c0_12, %c0_13] : memref<2x8x128xf32, #tpu.memory_space<vmem>>, vector<2x8x128xf32>
    %cst = arith.constant dense<0.000000e+00> : vector<2x256xf32>
    %9 = tpu.matmul %3, %5, %cst {dimension_numbers = #tpu.dot_dimension_numbers<[1], [0], [0], [1], [0, 0, 1, 1], [], []>} : vector<2x64xf32>, vector<64x256xf32>, vector<2x256xf32> -> vector<2x256xf32>
    %10 = vector.broadcast %6 : vector<1x256xf32> to vector<2x256xf32>
    %11 = arith.addf %9, %10 : vector<2x256xf32>
    %12 = vector.extract_strided_slice %7 {offsets = [0, 0, 0], sizes = [2, 1, 128], strides = [1, 1, 1]} : vector<2x8x128xf32> to vector<2x1x128xf32>
    %13 = vector.shape_cast %12 : vector<2x1x128xf32> to vector<2x128xf32>
    %14 = vector.extract_strided_slice %11 {offsets = [0, 0], sizes = [2, 128], strides = [1, 1]} : vector<2x256xf32> to vector<2x128xf32>
    %15 = arith.addf %13, %14 : vector<2x128xf32>
    %16 = vector.extract_strided_slice %4 {offsets = [0, 0], sizes = [2, 32], strides = [1, 1]} : vector<2x64xf32> to vector<2x32xf32>
    %17 = vector.extract_strided_slice %15 {offsets = [0, 0], sizes = [2, 32], strides = [1, 1]} : vector<2x128xf32> to vector<2x32xf32>
    %18 = arith.negf %17 : vector<2x32xf32>
    %19 = math.exp %18 : vector<2x32xf32>
    %cst_14 = arith.constant 1.000000e+00 : f32
    %20 = vector.broadcast %cst_14 : f32 to vector<2x32xf32>
    %21 = arith.addf %20, %19 : vector<2x32xf32>
    %22 = arith.divf %20, %21 : vector<2x32xf32>
    %23 = vector.extract_strided_slice %15 {offsets = [0, 32], sizes = [2, 32], strides = [1, 1]} : vector<2x128xf32> to vector<2x32xf32>
    %24 = arith.negf %23 : vector<2x32xf32>
    %25 = math.exp %24 : vector<2x32xf32>
    %cst_15 = arith.constant 1.000000e+00 : f32
    %26 = vector.broadcast %cst_15 : f32 to vector<2x32xf32>
    %27 = arith.addf %26, %25 : vector<2x32xf32>
    %28 = arith.divf %26, %27 : vector<2x32xf32>
    %29 = vector.extract_strided_slice %15 {offsets = [0, 64], sizes = [2, 32], strides = [1, 1]} : vector<2x128xf32> to vector<2x32xf32>
    %30 = math.tanh %29 : vector<2x32xf32>
    %31 = vector.extract_strided_slice %15 {offsets = [0, 96], sizes = [2, 32], strides = [1, 1]} : vector<2x128xf32> to vector<2x32xf32>
    %32 = arith.negf %31 : vector<2x32xf32>
    %33 = math.exp %32 : vector<2x32xf32>
    %cst_16 = arith.constant 1.000000e+00 : f32
    %34 = vector.broadcast %cst_16 : f32 to vector<2x32xf32>
    %35 = arith.addf %34, %33 : vector<2x32xf32>
    %36 = arith.divf %34, %35 : vector<2x32xf32>
    %37 = arith.mulf %28, %16 : vector<2x32xf32>
    %38 = arith.mulf %22, %30 : vector<2x32xf32>
    %39 = arith.addf %37, %38 : vector<2x32xf32>
    %40 = math.tanh %39 : vector<2x32xf32>
    %41 = arith.mulf %36, %40 : vector<2x32xf32>
    %42 = vector.extract_strided_slice %8 {offsets = [0, 7, 0], sizes = [2, 1, 128], strides = [1, 1, 1]} : vector<2x8x128xf32> to vector<2x1x128xf32>
    %43 = vector.shape_cast %42 : vector<2x1x128xf32> to vector<2x128xf32>
    %44 = vector.extract_strided_slice %11 {offsets = [0, 128], sizes = [2, 128], strides = [1, 1]} : vector<2x256xf32> to vector<2x128xf32>
    %45 = arith.addf %43, %44 : vector<2x128xf32>
    %46 = vector.extract_strided_slice %4 {offsets = [0, 32], sizes = [2, 32], strides = [1, 1]} : vector<2x64xf32> to vector<2x32xf32>
    %47 = vector.extract_strided_slice %45 {offsets = [0, 0], sizes = [2, 32], strides = [1, 1]} : vector<2x128xf32> to vector<2x32xf32>
    %48 = arith.negf %47 : vector<2x32xf32>
    %49 = math.exp %48 : vector<2x32xf32>
    %cst_17 = arith.constant 1.000000e+00 : f32
    %50 = vector.broadcast %cst_17 : f32 to vector<2x32xf32>
    %51 = arith.addf %50, %49 : vector<2x32xf32>
    %52 = arith.divf %50, %51 : vector<2x32xf32>
    %53 = vector.extract_strided_slice %45 {offsets = [0, 32], sizes = [2, 32], strides = [1, 1]} : vector<2x128xf32> to vector<2x32xf32>
    %54 = arith.negf %53 : vector<2x32xf32>
    %55 = math.exp %54 : vector<2x32xf32>
    %cst_18 = arith.constant 1.000000e+00 : f32
    %56 = vector.broadcast %cst_18 : f32 to vector<2x32xf32>
    %57 = arith.addf %56, %55 : vector<2x32xf32>
    %58 = arith.divf %56, %57 : vector<2x32xf32>
    %59 = vector.extract_strided_slice %45 {offsets = [0, 64], sizes = [2, 32], strides = [1, 1]} : vector<2x128xf32> to vector<2x32xf32>
    %60 = math.tanh %59 : vector<2x32xf32>
    %61 = vector.extract_strided_slice %45 {offsets = [0, 96], sizes = [2, 32], strides = [1, 1]} : vector<2x128xf32> to vector<2x32xf32>
    %62 = arith.negf %61 : vector<2x32xf32>
    %63 = math.exp %62 : vector<2x32xf32>
    %cst_19 = arith.constant 1.000000e+00 : f32
    %64 = vector.broadcast %cst_19 : f32 to vector<2x32xf32>
    %65 = arith.addf %64, %63 : vector<2x32xf32>
    %66 = arith.divf %64, %65 : vector<2x32xf32>
    %67 = arith.mulf %58, %46 : vector<2x32xf32>
    %68 = arith.mulf %52, %60 : vector<2x32xf32>
    %69 = arith.addf %67, %68 : vector<2x32xf32>
    %70 = math.tanh %69 : vector<2x32xf32>
    %71 = arith.mulf %66, %70 : vector<2x32xf32>
    %72 = tpu.concatenate %41, %71 in 1 : vector<2x32xf32>, vector<2x32xf32> -> vector<2x64xf32>
    %73 = tpu.concatenate %39, %69 in 1 : vector<2x32xf32>, vector<2x32xf32> -> vector<2x64xf32>
    %c0_20 = arith.constant 0 : index
    %c0_21 = arith.constant 0 : index
    %c0_22 = arith.constant 0 : index
    %74 = vector.load %arg5[%c0_20, %c0_21, %c0_22] : memref<2x8x32xf32, #tpu.memory_space<vmem>>, vector<2x1x32xf32>
    %75 = vector.shape_cast %74 : vector<2x1x32xf32> to vector<2x32xf32>
    %76 = vector.shape_cast %41 : vector<2x32xf32> to vector<2x1x32xf32>
    tpu.vector_store %arg5[%c0_20, %c0_21, %c0_22], %76 {strides = array<i32>} : memref<2x8x32xf32, #tpu.memory_space<vmem>>, vector<2x1x32xf32>,
    %c0_23 = arith.constant 0 : index
    %c7 = arith.constant 7 : index
    %c0_24 = arith.constant 0 : index
    %77 = vector.load %arg6[%c0_23, %c7, %c0_24] : memref<2x8x32xf32, #tpu.memory_space<vmem>>, vector<2x1x32xf32>
    %78 = vector.shape_cast %77 : vector<2x1x32xf32> to vector<2x32xf32>
    %79 = vector.shape_cast %71 : vector<2x32xf32> to vector<2x1x32xf32>
    tpu.vector_store %arg6[%c0_23, %c7, %c0_24], %79 {strides = array<i32>} : memref<2x8x32xf32, #tpu.memory_space<vmem>>, vector<2x1x32xf32>,
    %cst_25 = arith.constant dense<0.000000e+00> : vector<2x256xf32>
    %80 = tpu.matmul %72, %5, %cst_25 {dimension_numbers = #tpu.dot_dimension_numbers<[1], [0], [0], [1], [0, 0, 1, 1], [], []>} : vector<2x64xf32>, vector<64x256xf32>, vector<2x256xf32> -> vector<2x256xf32>
    %81 = vector.broadcast %6 : vector<1x256xf32> to vector<2x256xf32>
    %82 = arith.addf %80, %81 : vector<2x256xf32>
    %83 = vector.extract_strided_slice %7 {offsets = [0, 1, 0], sizes = [2, 1, 128], strides = [1, 1, 1]} : vector<2x8x128xf32> to vector<2x1x128xf32>
    %84 = vector.shape_cast %83 : vector<2x1x128xf32> to vector<2x128xf32>
    %85 = vector.extract_strided_slice %82 {offsets = [0, 0], sizes = [2, 128], strides = [1, 1]} : vector<2x256xf32> to vector<2x128xf32>
    %86 = arith.addf %84, %85 : vector<2x128xf32>
    %87 = vector.extract_strided_slice %73 {offsets = [0, 0], sizes = [2, 32], strides = [1, 1]} : vector<2x64xf32> to vector<2x32xf32>
    %88 = vector.extract_strided_slice %86 {offsets = [0, 0], sizes = [2, 32], strides = [1, 1]} : vector<2x128xf32> to vector<2x32xf32>
    %89 = arith.negf %88 : vector<2x32xf32>
    %90 = math.exp %89 : vector<2x32xf32>
    %cst_26 = arith.constant 1.000000e+00 : f32
    %91 = vector.broadcast %cst_26 : f32 to vector<2x32xf32>
    %92 = arith.addf %91, %90 : vector<2x32xf32>
    %93 = arith.divf %91, %92 : vector<2x32xf32>
    %94 = vector.extract_strided_slice %86 {offsets = [0, 32], sizes = [2, 32], strides = [1, 1]} : vector<2x128xf32> to vector<2x32xf32>
    %95 = arith.negf %94 : vector<2x32xf32>
    %96 = math.exp %95 : vector<2x32xf32>
    %cst_27 = arith.constant 1.000000e+00 : f32
    %97 = vector.broadcast %cst_27 : f32 to vector<2x32xf32>
    %98 = arith.addf %97, %96 : vector<2x32xf32>
    %99 = arith.divf %97, %98 : vector<2x32xf32>
    %100 = vector.extract_strided_slice %86 {offsets = [0, 64], sizes = [2, 32], strides = [1, 1]} : vector<2x128xf32> to vector<2x32xf32>
    %101 = math.tanh %100 : vector<2x32xf32>
    %102 = vector.extract_strided_slice %86 {offsets = [0, 96], sizes = [2, 32], strides = [1, 1]} : vector<2x128xf32> to vector<2x32xf32>
    %103 = arith.negf %102 : vector<2x32xf32>
    %104 = math.exp %103 : vector<2x32xf32>
    %cst_28 = arith.constant 1.000000e+00 : f32
    %105 = vector.broadcast %cst_28 : f32 to vector<2x32xf32>
    %106 = arith.addf %105, %104 : vector<2x32xf32>
    %107 = arith.divf %105, %106 : vector<2x32xf32>
    %108 = arith.mulf %99, %87 : vector<2x32xf32>
    %109 = arith.mulf %93, %101 : vector<2x32xf32>
    %110 = arith.addf %108, %109 : vector<2x32xf32>
    %111 = math.tanh %110 : vector<2x32xf32>
    %112 = arith.mulf %107, %111 : vector<2x32xf32>
    %113 = vector.extract_strided_slice %8 {offsets = [0, 6, 0], sizes = [2, 1, 128], strides = [1, 1, 1]} : vector<2x8x128xf32> to vector<2x1x128xf32>
    %114 = vector.shape_cast %113 : vector<2x1x128xf32> to vector<2x128xf32>
    %115 = vector.extract_strided_slice %82 {offsets = [0, 128], sizes = [2, 128], strides = [1, 1]} : vector<2x256xf32> to vector<2x128xf32>
    %116 = arith.addf %114, %115 : vector<2x128xf32>
    %117 = vector.extract_strided_slice %73 {offsets = [0, 32], sizes = [2, 32], strides = [1, 1]} : vector<2x64xf32> to vector<2x32xf32>
    %118 = vector.extract_strided_slice %116 {offsets = [0, 0], sizes = [2, 32], strides = [1, 1]} : vector<2x128xf32> to vector<2x32xf32>
    %119 = arith.negf %118 : vector<2x32xf32>
    %120 = math.exp %119 : vector<2x32xf32>
    %cst_29 = arith.constant 1.000000e+00 : f32
    %121 = vector.broadcast %cst_29 : f32 to vector<2x32xf32>
    %122 = arith.addf %121, %120 : vector<2x32xf32>
    %123 = arith.divf %121, %122 : vector<2x32xf32>
    %124 = vector.extract_strided_slice %116 {offsets = [0, 32], sizes = [2, 32], strides = [1, 1]} : vector<2x128xf32> to vector<2x32xf32>
    %125 = arith.negf %124 : vector<2x32xf32>
    %126 = math.exp %125 : vector<2x32xf32>
    %cst_30 = arith.constant 1.000000e+00 : f32
    %127 = vector.broadcast %cst_30 : f32 to vector<2x32xf32>
    %128 = arith.addf %127, %126 : vector<2x32xf32>
    %129 = arith.divf %127, %128 : vector<2x32xf32>
    %130 = vector.extract_strided_slice %116 {offsets = [0, 64], sizes = [2, 32], strides = [1, 1]} : vector<2x128xf32> to vector<2x32xf32>
    %131 = math.tanh %130 : vector<2x32xf32>
    %132 = vector.extract_strided_slice %116 {offsets = [0, 96], sizes = [2, 32], strides = [1, 1]} : vector<2x128xf32> to vector<2x32xf32>
    %133 = arith.negf %132 : vector<2x32xf32>
    %134 = math.exp %133 : vector<2x32xf32>
    %cst_31 = arith.constant 1.000000e+00 : f32
    %135 = vector.broadcast %cst_31 : f32 to vector<2x32xf32>
    %136 = arith.addf %135, %134 : vector<2x32xf32>
    %137 = arith.divf %135, %136 : vector<2x32xf32>
    %138 = arith.mulf %129, %117 : vector<2x32xf32>
    %139 = arith.mulf %123, %131 : vector<2x32xf32>
    %140 = arith.addf %138, %139 : vector<2x32xf32>
    %141 = math.tanh %140 : vector<2x32xf32>
    %142 = arith.mulf %137, %141 : vector<2x32xf32>
    %143 = tpu.concatenate %112, %142 in 1 : vector<2x32xf32>, vector<2x32xf32> -> vector<2x64xf32>
    %144 = tpu.concatenate %110, %140 in 1 : vector<2x32xf32>, vector<2x32xf32> -> vector<2x64xf32>
    %c0_32 = arith.constant 0 : index
    %c1 = arith.constant 1 : index
    %c0_33 = arith.constant 0 : index
    %145 = vector.load %arg5[%c0_32, %c1, %c0_33] : memref<2x8x32xf32, #tpu.memory_space<vmem>>, vector<2x1x32xf32>
    %146 = vector.shape_cast %145 : vector<2x1x32xf32> to vector<2x32xf32>
    %147 = vector.shape_cast %112 : vector<2x32xf32> to vector<2x1x32xf32>
    tpu.vector_store %arg5[%c0_32, %c1, %c0_33], %147 {strides = array<i32>} : memref<2x8x32xf32, #tpu.memory_space<vmem>>, vector<2x1x32xf32>,
    %c0_34 = arith.constant 0 : index
    %c6 = arith.constant 6 : index
    %c0_35 = arith.constant 0 : index
    %148 = vector.load %arg6[%c0_34, %c6, %c0_35] : memref<2x8x32xf32, #tpu.memory_space<vmem>>, vector<2x1x32xf32>
    %149 = vector.shape_cast %148 : vector<2x1x32xf32> to vector<2x32xf32>
    %150 = vector.shape_cast %142 : vector<2x32xf32> to vector<2x1x32xf32>
    tpu.vector_store %arg6[%c0_34, %c6, %c0_35], %150 {strides = array<i32>} : memref<2x8x32xf32, #tpu.memory_space<vmem>>, vector<2x1x32xf32>,
    %cst_36 = arith.constant dense<0.000000e+00> : vector<2x256xf32>
    %151 = tpu.matmul %143, %5, %cst_36 {dimension_numbers = #tpu.dot_dimension_numbers<[1], [0], [0], [1], [0, 0, 1, 1], [], []>} : vector<2x64xf32>, vector<64x256xf32>, vector<2x256xf32> -> vector<2x256xf32>
    %152 = vector.broadcast %6 : vector<1x256xf32> to vector<2x256xf32>
    %153 = arith.addf %151, %152 : vector<2x256xf32>
    %154 = vector.extract_strided_slice %7 {offsets = [0, 2, 0], sizes = [2, 1, 128], strides = [1, 1, 1]} : vector<2x8x128xf32> to vector<2x1x128xf32>
    %155 = vector.shape_cast %154 : vector<2x1x128xf32> to vector<2x128xf32>
    %156 = vector.extract_strided_slice %153 {offsets = [0, 0], sizes = [2, 128], strides = [1, 1]} : vector<2x256xf32> to vector<2x128xf32>
    %157 = arith.addf %155, %156 : vector<2x128xf32>
    %158 = vector.extract_strided_slice %144 {offsets = [0, 0], sizes = [2, 32], strides = [1, 1]} : vector<2x64xf32> to vector<2x32xf32>
    %159 = vector.extract_strided_slice %157 {offsets = [0, 0], sizes = [2, 32], strides = [1, 1]} : vector<2x128xf32> to vector<2x32xf32>
    %160 = arith.negf %159 : vector<2x32xf32>
    %161 = math.exp %160 : vector<2x32xf32>
    %cst_37 = arith.constant 1.000000e+00 : f32
    %162 = vector.broadcast %cst_37 : f32 to vector<2x32xf32>
    %163 = arith.addf %162, %161 : vector<2x32xf32>
    %164 = arith.divf %162, %163 : vector<2x32xf32>
    %165 = vector.extract_strided_slice %157 {offsets = [0, 32], sizes = [2, 32], strides = [1, 1]} : vector<2x128xf32> to vector<2x32xf32>
    %166 = arith.negf %165 : vector<2x32xf32>
    %167 = math.exp %166 : vector<2x32xf32>
    %cst_38 = arith.constant 1.000000e+00 : f32
    %168 = vector.broadcast %cst_38 : f32 to vector<2x32xf32>
    %169 = arith.addf %168, %167 : vector<2x32xf32>
    %170 = arith.divf %168, %169 : vector<2x32xf32>
    %171 = vector.extract_strided_slice %157 {offsets = [0, 64], sizes = [2, 32], strides = [1, 1]} : vector<2x128xf32> to vector<2x32xf32>
    %172 = math.tanh %171 : vector<2x32xf32>
    %173 = vector.extract_strided_slice %157 {offsets = [0, 96], sizes = [2, 32], strides = [1, 1]} : vector<2x128xf32> to vector<2x32xf32>
    %174 = arith.negf %173 : vector<2x32xf32>
    %175 = math.exp %174 : vector<2x32xf32>
    %cst_39 = arith.constant 1.000000e+00 : f32
    %176 = vector.broadcast %cst_39 : f32 to vector<2x32xf32>
    %177 = arith.addf %176, %175 : vector<2x32xf32>
    %178 = arith.divf %176, %177 : vector<2x32xf32>
    %179 = arith.mulf %170, %158 : vector<2x32xf32>
    %180 = arith.mulf %164, %172 : vector<2x32xf32>
    %181 = arith.addf %179, %180 : vector<2x32xf32>
    %182 = math.tanh %181 : vector<2x32xf32>
    %183 = arith.mulf %178, %182 : vector<2x32xf32>
    %184 = vector.extract_strided_slice %8 {offsets = [0, 5, 0], sizes = [2, 1, 128], strides = [1, 1, 1]} : vector<2x8x128xf32> to vector<2x1x128xf32>
    %185 = vector.shape_cast %184 : vector<2x1x128xf32> to vector<2x128xf32>
    %186 = vector.extract_strided_slice %153 {offsets = [0, 128], sizes = [2, 128], strides = [1, 1]} : vector<2x256xf32> to vector<2x128xf32>
    %187 = arith.addf %185, %186 : vector<2x128xf32>
    %188 = vector.extract_strided_slice %144 {offsets = [0, 32], sizes = [2, 32], strides = [1, 1]} : vector<2x64xf32> to vector<2x32xf32>
    %189 = vector.extract_strided_slice %187 {offsets = [0, 0], sizes = [2, 32], strides = [1, 1]} : vector<2x128xf32> to vector<2x32xf32>
    %190 = arith.negf %189 : vector<2x32xf32>
    %191 = math.exp %190 : vector<2x32xf32>
    %cst_40 = arith.constant 1.000000e+00 : f32
    %192 = vector.broadcast %cst_40 : f32 to vector<2x32xf32>
    %193 = arith.addf %192, %191 : vector<2x32xf32>
    %194 = arith.divf %192, %193 : vector<2x32xf32>
    %195 = vector.extract_strided_slice %187 {offsets = [0, 32], sizes = [2, 32], strides = [1, 1]} : vector<2x128xf32> to vector<2x32xf32>
    %196 = arith.negf %195 : vector<2x32xf32>
    %197 = math.exp %196 : vector<2x32xf32>
    %cst_41 = arith.constant 1.000000e+00 : f32
    %198 = vector.broadcast %cst_41 : f32 to vector<2x32xf32>
    %199 = arith.addf %198, %197 : vector<2x32xf32>
    %200 = arith.divf %198, %199 : vector<2x32xf32>
    %201 = vector.extract_strided_slice %187 {offsets = [0, 64], sizes = [2, 32], strides = [1, 1]} : vector<2x128xf32> to vector<2x32xf32>
    %202 = math.tanh %201 : vector<2x32xf32>
    %203 = vector.extract_strided_slice %187 {offsets = [0, 96], sizes = [2, 32], strides = [1, 1]} : vector<2x128xf32> to vector<2x32xf32>
    %204 = arith.negf %203 : vector<2x32xf32>
    %205 = math.exp %204 : vector<2x32xf32>
    %cst_42 = arith.constant 1.000000e+00 : f32
    %206 = vector.broadcast %cst_42 : f32 to vector<2x32xf32>
    %207 = arith.addf %206, %205 : vector<2x32xf32>
    %208 = arith.divf %206, %207 : vector<2x32xf32>
    %209 = arith.mulf %200, %188 : vector<2x32xf32>
    %210 = arith.mulf %194, %202 : vector<2x32xf32>
    %211 = arith.addf %209, %210 : vector<2x32xf32>
    %212 = math.tanh %211 : vector<2x32xf32>
    %213 = arith.mulf %208, %212 : vector<2x32xf32>
    %214 = tpu.concatenate %183, %213 in 1 : vector<2x32xf32>, vector<2x32xf32> -> vector<2x64xf32>
    %215 = tpu.concatenate %181, %211 in 1 : vector<2x32xf32>, vector<2x32xf32> -> vector<2x64xf32>
    %c0_43 = arith.constant 0 : index
    %c2 = arith.constant 2 : index
    %c0_44 = arith.constant 0 : index
    %216 = vector.load %arg5[%c0_43, %c2, %c0_44] : memref<2x8x32xf32, #tpu.memory_space<vmem>>, vector<2x1x32xf32>
    %217 = vector.shape_cast %216 : vector<2x1x32xf32> to vector<2x32xf32>
    %218 = vector.shape_cast %183 : vector<2x32xf32> to vector<2x1x32xf32>
    tpu.vector_store %arg5[%c0_43, %c2, %c0_44], %218 {strides = array<i32>} : memref<2x8x32xf32, #tpu.memory_space<vmem>>, vector<2x1x32xf32>,
    %c0_45 = arith.constant 0 : index
    %c5 = arith.constant 5 : index
    %c0_46 = arith.constant 0 : index
    %219 = vector.load %arg6[%c0_45, %c5, %c0_46] : memref<2x8x32xf32, #tpu.memory_space<vmem>>, vector<2x1x32xf32>
    %220 = vector.shape_cast %219 : vector<2x1x32xf32> to vector<2x32xf32>
    %221 = vector.shape_cast %213 : vector<2x32xf32> to vector<2x1x32xf32>
    tpu.vector_store %arg6[%c0_45, %c5, %c0_46], %221 {strides = array<i32>} : memref<2x8x32xf32, #tpu.memory_space<vmem>>, vector<2x1x32xf32>,
    %cst_47 = arith.constant dense<0.000000e+00> : vector<2x256xf32>
    %222 = tpu.matmul %214, %5, %cst_47 {dimension_numbers = #tpu.dot_dimension_numbers<[1], [0], [0], [1], [0, 0, 1, 1], [], []>} : vector<2x64xf32>, vector<64x256xf32>, vector<2x256xf32> -> vector<2x256xf32>
    %223 = vector.broadcast %6 : vector<1x256xf32> to vector<2x256xf32>
    %224 = arith.addf %222, %223 : vector<2x256xf32>
    %225 = vector.extract_strided_slice %7 {offsets = [0, 3, 0], sizes = [2, 1, 128], strides = [1, 1, 1]} : vector<2x8x128xf32> to vector<2x1x128xf32>
    %226 = vector.shape_cast %225 : vector<2x1x128xf32> to vector<2x128xf32>
    %227 = vector.extract_strided_slice %224 {offsets = [0, 0], sizes = [2, 128], strides = [1, 1]} : vector<2x256xf32> to vector<2x128xf32>
    %228 = arith.addf %226, %227 : vector<2x128xf32>
    %229 = vector.extract_strided_slice %215 {offsets = [0, 0], sizes = [2, 32], strides = [1, 1]} : vector<2x64xf32> to vector<2x32xf32>
    %230 = vector.extract_strided_slice %228 {offsets = [0, 0], sizes = [2, 32], strides = [1, 1]} : vector<2x128xf32> to vector<2x32xf32>
    %231 = arith.negf %230 : vector<2x32xf32>
    %232 = math.exp %231 : vector<2x32xf32>
    %cst_48 = arith.constant 1.000000e+00 : f32
    %233 = vector.broadcast %cst_48 : f32 to vector<2x32xf32>
    %234 = arith.addf %233, %232 : vector<2x32xf32>
    %235 = arith.divf %233, %234 : vector<2x32xf32>
    %236 = vector.extract_strided_slice %228 {offsets = [0, 32], sizes = [2, 32], strides = [1, 1]} : vector<2x128xf32> to vector<2x32xf32>
    %237 = arith.negf %236 : vector<2x32xf32>
    %238 = math.exp %237 : vector<2x32xf32>
    %cst_49 = arith.constant 1.000000e+00 : f32
    %239 = vector.broadcast %cst_49 : f32 to vector<2x32xf32>
    %240 = arith.addf %239, %238 : vector<2x32xf32>
    %241 = arith.divf %239, %240 : vector<2x32xf32>
    %242 = vector.extract_strided_slice %228 {offsets = [0, 64], sizes = [2, 32], strides = [1, 1]} : vector<2x128xf32> to vector<2x32xf32>
    %243 = math.tanh %242 : vector<2x32xf32>
    %244 = vector.extract_strided_slice %228 {offsets = [0, 96], sizes = [2, 32], strides = [1, 1]} : vector<2x128xf32> to vector<2x32xf32>
    %245 = arith.negf %244 : vector<2x32xf32>
    %246 = math.exp %245 : vector<2x32xf32>
    %cst_50 = arith.constant 1.000000e+00 : f32
    %247 = vector.broadcast %cst_50 : f32 to vector<2x32xf32>
    %248 = arith.addf %247, %246 : vector<2x32xf32>
    %249 = arith.divf %247, %248 : vector<2x32xf32>
    %250 = arith.mulf %241, %229 : vector<2x32xf32>
    %251 = arith.mulf %235, %243 : vector<2x32xf32>
    %252 = arith.addf %250, %251 : vector<2x32xf32>
    %253 = math.tanh %252 : vector<2x32xf32>
    %254 = arith.mulf %249, %253 : vector<2x32xf32>
    %255 = vector.extract_strided_slice %8 {offsets = [0, 4, 0], sizes = [2, 1, 128], strides = [1, 1, 1]} : vector<2x8x128xf32> to vector<2x1x128xf32>
    %256 = vector.shape_cast %255 : vector<2x1x128xf32> to vector<2x128xf32>
    %257 = vector.extract_strided_slice %224 {offsets = [0, 128], sizes = [2, 128], strides = [1, 1]} : vector<2x256xf32> to vector<2x128xf32>
    %258 = arith.addf %256, %257 : vector<2x128xf32>
    %259 = vector.extract_strided_slice %215 {offsets = [0, 32], sizes = [2, 32], strides = [1, 1]} : vector<2x64xf32> to vector<2x32xf32>
    %260 = vector.extract_strided_slice %258 {offsets = [0, 0], sizes = [2, 32], strides = [1, 1]} : vector<2x128xf32> to vector<2x32xf32>
    %261 = arith.negf %260 : vector<2x32xf32>
    %262 = math.exp %261 : vector<2x32xf32>
    %cst_51 = arith.constant 1.000000e+00 : f32
    %263 = vector.broadcast %cst_51 : f32 to vector<2x32xf32>
    %264 = arith.addf %263, %262 : vector<2x32xf32>
    %265 = arith.divf %263, %264 : vector<2x32xf32>
    %266 = vector.extract_strided_slice %258 {offsets = [0, 32], sizes = [2, 32], strides = [1, 1]} : vector<2x128xf32> to vector<2x32xf32>
    %267 = arith.negf %266 : vector<2x32xf32>
    %268 = math.exp %267 : vector<2x32xf32>
    %cst_52 = arith.constant 1.000000e+00 : f32
    %269 = vector.broadcast %cst_52 : f32 to vector<2x32xf32>
    %270 = arith.addf %269, %268 : vector<2x32xf32>
    %271 = arith.divf %269, %270 : vector<2x32xf32>
    %272 = vector.extract_strided_slice %258 {offsets = [0, 64], sizes = [2, 32], strides = [1, 1]} : vector<2x128xf32> to vector<2x32xf32>
    %273 = math.tanh %272 : vector<2x32xf32>
    %274 = vector.extract_strided_slice %258 {offsets = [0, 96], sizes = [2, 32], strides = [1, 1]} : vector<2x128xf32> to vector<2x32xf32>
    %275 = arith.negf %274 : vector<2x32xf32>
    %276 = math.exp %275 : vector<2x32xf32>
    %cst_53 = arith.constant 1.000000e+00 : f32
    %277 = vector.broadcast %cst_53 : f32 to vector<2x32xf32>
    %278 = arith.addf %277, %276 : vector<2x32xf32>
    %279 = arith.divf %277, %278 : vector<2x32xf32>
    %280 = arith.mulf %271, %259 : vector<2x32xf32>
    %281 = arith.mulf %265, %273 : vector<2x32xf32>
    %282 = arith.addf %280, %281 : vector<2x32xf32>
    %283 = math.tanh %282 : vector<2x32xf32>
    %284 = arith.mulf %279, %283 : vector<2x32xf32>
    %285 = tpu.concatenate %254, %284 in 1 : vector<2x32xf32>, vector<2x32xf32> -> vector<2x64xf32>
    %286 = tpu.concatenate %252, %282 in 1 : vector<2x32xf32>, vector<2x32xf32> -> vector<2x64xf32>
    %c0_54 = arith.constant 0 : index
    %c3 = arith.constant 3 : index
    %c0_55 = arith.constant 0 : index
    %287 = vector.load %arg5[%c0_54, %c3, %c0_55] : memref<2x8x32xf32, #tpu.memory_space<vmem>>, vector<2x1x32xf32>
    %288 = vector.shape_cast %287 : vector<2x1x32xf32> to vector<2x32xf32>
    %289 = vector.shape_cast %254 : vector<2x32xf32> to vector<2x1x32xf32>
    tpu.vector_store %arg5[%c0_54, %c3, %c0_55], %289 {strides = array<i32>} : memref<2x8x32xf32, #tpu.memory_space<vmem>>, vector<2x1x32xf32>,
    %c0_56 = arith.constant 0 : index
    %c4 = arith.constant 4 : index
    %c0_57 = arith.constant 0 : index
    %290 = vector.load %arg6[%c0_56, %c4, %c0_57] : memref<2x8x32xf32, #tpu.memory_space<vmem>>, vector<2x1x32xf32>
    %291 = vector.shape_cast %290 : vector<2x1x32xf32> to vector<2x32xf32>
    %292 = vector.shape_cast %284 : vector<2x32xf32> to vector<2x1x32xf32>
    tpu.vector_store %arg6[%c0_56, %c4, %c0_57], %292 {strides = array<i32>} : memref<2x8x32xf32, #tpu.memory_space<vmem>>, vector<2x1x32xf32>,
    %cst_58 = arith.constant dense<0.000000e+00> : vector<2x256xf32>
    %293 = tpu.matmul %285, %5, %cst_58 {dimension_numbers = #tpu.dot_dimension_numbers<[1], [0], [0], [1], [0, 0, 1, 1], [], []>} : vector<2x64xf32>, vector<64x256xf32>, vector<2x256xf32> -> vector<2x256xf32>
    %294 = vector.broadcast %6 : vector<1x256xf32> to vector<2x256xf32>
    %295 = arith.addf %293, %294 : vector<2x256xf32>
    %296 = vector.extract_strided_slice %7 {offsets = [0, 4, 0], sizes = [2, 1, 128], strides = [1, 1, 1]} : vector<2x8x128xf32> to vector<2x1x128xf32>
    %297 = vector.shape_cast %296 : vector<2x1x128xf32> to vector<2x128xf32>
    %298 = vector.extract_strided_slice %295 {offsets = [0, 0], sizes = [2, 128], strides = [1, 1]} : vector<2x256xf32> to vector<2x128xf32>
    %299 = arith.addf %297, %298 : vector<2x128xf32>
    %300 = vector.extract_strided_slice %286 {offsets = [0, 0], sizes = [2, 32], strides = [1, 1]} : vector<2x64xf32> to vector<2x32xf32>
    %301 = vector.extract_strided_slice %299 {offsets = [0, 0], sizes = [2, 32], strides = [1, 1]} : vector<2x128xf32> to vector<2x32xf32>
    %302 = arith.negf %301 : vector<2x32xf32>
    %303 = math.exp %302 : vector<2x32xf32>
    %cst_59 = arith.constant 1.000000e+00 : f32
    %304 = vector.broadcast %cst_59 : f32 to vector<2x32xf32>
    %305 = arith.addf %304, %303 : vector<2x32xf32>
    %306 = arith.divf %304, %305 : vector<2x32xf32>
    %307 = vector.extract_strided_slice %299 {offsets = [0, 32], sizes = [2, 32], strides = [1, 1]} : vector<2x128xf32> to vector<2x32xf32>
    %308 = arith.negf %307 : vector<2x32xf32>
    %309 = math.exp %308 : vector<2x32xf32>
    %cst_60 = arith.constant 1.000000e+00 : f32
    %310 = vector.broadcast %cst_60 : f32 to vector<2x32xf32>
    %311 = arith.addf %310, %309 : vector<2x32xf32>
    %312 = arith.divf %310, %311 : vector<2x32xf32>
    %313 = vector.extract_strided_slice %299 {offsets = [0, 64], sizes = [2, 32], strides = [1, 1]} : vector<2x128xf32> to vector<2x32xf32>
    %314 = math.tanh %313 : vector<2x32xf32>
    %315 = vector.extract_strided_slice %299 {offsets = [0, 96], sizes = [2, 32], strides = [1, 1]} : vector<2x128xf32> to vector<2x32xf32>
    %316 = arith.negf %315 : vector<2x32xf32>
    %317 = math.exp %316 : vector<2x32xf32>
    %cst_61 = arith.constant 1.000000e+00 : f32
    %318 = vector.broadcast %cst_61 : f32 to vector<2x32xf32>
    %319 = arith.addf %318, %317 : vector<2x32xf32>
    %320 = arith.divf %318, %319 : vector<2x32xf32>
    %321 = arith.mulf %312, %300 : vector<2x32xf32>
    %322 = arith.mulf %306, %314 : vector<2x32xf32>
    %323 = arith.addf %321, %322 : vector<2x32xf32>
    %324 = math.tanh %323 : vector<2x32xf32>
    %325 = arith.mulf %320, %324 : vector<2x32xf32>
    %326 = vector.extract_strided_slice %8 {offsets = [0, 3, 0], sizes = [2, 1, 128], strides = [1, 1, 1]} : vector<2x8x128xf32> to vector<2x1x128xf32>
    %327 = vector.shape_cast %326 : vector<2x1x128xf32> to vector<2x128xf32>
    %328 = vector.extract_strided_slice %295 {offsets = [0, 128], sizes = [2, 128], strides = [1, 1]} : vector<2x256xf32> to vector<2x128xf32>
    %329 = arith.addf %327, %328 : vector<2x128xf32>
    %330 = vector.extract_strided_slice %286 {offsets = [0, 32], sizes = [2, 32], strides = [1, 1]} : vector<2x64xf32> to vector<2x32xf32>
    %331 = vector.extract_strided_slice %329 {offsets = [0, 0], sizes = [2, 32], strides = [1, 1]} : vector<2x128xf32> to vector<2x32xf32>
    %332 = arith.negf %331 : vector<2x32xf32>
    %333 = math.exp %332 : vector<2x32xf32>
    %cst_62 = arith.constant 1.000000e+00 : f32
    %334 = vector.broadcast %cst_62 : f32 to vector<2x32xf32>
    %335 = arith.addf %334, %333 : vector<2x32xf32>
    %336 = arith.divf %334, %335 : vector<2x32xf32>
    %337 = vector.extract_strided_slice %329 {offsets = [0, 32], sizes = [2, 32], strides = [1, 1]} : vector<2x128xf32> to vector<2x32xf32>
    %338 = arith.negf %337 : vector<2x32xf32>
    %339 = math.exp %338 : vector<2x32xf32>
    %cst_63 = arith.constant 1.000000e+00 : f32
    %340 = vector.broadcast %cst_63 : f32 to vector<2x32xf32>
    %341 = arith.addf %340, %339 : vector<2x32xf32>
    %342 = arith.divf %340, %341 : vector<2x32xf32>
    %343 = vector.extract_strided_slice %329 {offsets = [0, 64], sizes = [2, 32], strides = [1, 1]} : vector<2x128xf32> to vector<2x32xf32>
    %344 = math.tanh %343 : vector<2x32xf32>
    %345 = vector.extract_strided_slice %329 {offsets = [0, 96], sizes = [2, 32], strides = [1, 1]} : vector<2x128xf32> to vector<2x32xf32>
    %346 = arith.negf %345 : vector<2x32xf32>
    %347 = math.exp %346 : vector<2x32xf32>
    %cst_64 = arith.constant 1.000000e+00 : f32
    %348 = vector.broadcast %cst_64 : f32 to vector<2x32xf32>
    %349 = arith.addf %348, %347 : vector<2x32xf32>
    %350 = arith.divf %348, %349 : vector<2x32xf32>
    %351 = arith.mulf %342, %330 : vector<2x32xf32>
    %352 = arith.mulf %336, %344 : vector<2x32xf32>
    %353 = arith.addf %351, %352 : vector<2x32xf32>
    %354 = math.tanh %353 : vector<2x32xf32>
    %355 = arith.mulf %350, %354 : vector<2x32xf32>
    %356 = tpu.concatenate %325, %355 in 1 : vector<2x32xf32>, vector<2x32xf32> -> vector<2x64xf32>
    %357 = tpu.concatenate %323, %353 in 1 : vector<2x32xf32>, vector<2x32xf32> -> vector<2x64xf32>
    %c0_65 = arith.constant 0 : index
    %c4_66 = arith.constant 4 : index
    %c0_67 = arith.constant 0 : index
    %358 = vector.load %arg5[%c0_65, %c4_66, %c0_67] : memref<2x8x32xf32, #tpu.memory_space<vmem>>, vector<2x1x32xf32>
    %359 = vector.shape_cast %358 : vector<2x1x32xf32> to vector<2x32xf32>
    %360 = vector.shape_cast %325 : vector<2x32xf32> to vector<2x1x32xf32>
    tpu.vector_store %arg5[%c0_65, %c4_66, %c0_67], %360 {strides = array<i32>} : memref<2x8x32xf32, #tpu.memory_space<vmem>>, vector<2x1x32xf32>,
    %c0_68 = arith.constant 0 : index
    %c3_69 = arith.constant 3 : index
    %c0_70 = arith.constant 0 : index
    %361 = vector.load %arg6[%c0_68, %c3_69, %c0_70] : memref<2x8x32xf32, #tpu.memory_space<vmem>>, vector<2x1x32xf32>
    %362 = vector.shape_cast %361 : vector<2x1x32xf32> to vector<2x32xf32>
    %363 = vector.shape_cast %355 : vector<2x32xf32> to vector<2x1x32xf32>
    tpu.vector_store %arg6[%c0_68, %c3_69, %c0_70], %363 {strides = array<i32>} : memref<2x8x32xf32, #tpu.memory_space<vmem>>, vector<2x1x32xf32>,
    %cst_71 = arith.constant dense<0.000000e+00> : vector<2x256xf32>
    %364 = tpu.matmul %356, %5, %cst_71 {dimension_numbers = #tpu.dot_dimension_numbers<[1], [0], [0], [1], [0, 0, 1, 1], [], []>} : vector<2x64xf32>, vector<64x256xf32>, vector<2x256xf32> -> vector<2x256xf32>
    %365 = vector.broadcast %6 : vector<1x256xf32> to vector<2x256xf32>
    %366 = arith.addf %364, %365 : vector<2x256xf32>
    %367 = vector.extract_strided_slice %7 {offsets = [0, 5, 0], sizes = [2, 1, 128], strides = [1, 1, 1]} : vector<2x8x128xf32> to vector<2x1x128xf32>
    %368 = vector.shape_cast %367 : vector<2x1x128xf32> to vector<2x128xf32>
    %369 = vector.extract_strided_slice %366 {offsets = [0, 0], sizes = [2, 128], strides = [1, 1]} : vector<2x256xf32> to vector<2x128xf32>
    %370 = arith.addf %368, %369 : vector<2x128xf32>
    %371 = vector.extract_strided_slice %357 {offsets = [0, 0], sizes = [2, 32], strides = [1, 1]} : vector<2x64xf32> to vector<2x32xf32>
    %372 = vector.extract_strided_slice %370 {offsets = [0, 0], sizes = [2, 32], strides = [1, 1]} : vector<2x128xf32> to vector<2x32xf32>
    %373 = arith.negf %372 : vector<2x32xf32>
    %374 = math.exp %373 : vector<2x32xf32>
    %cst_72 = arith.constant 1.000000e+00 : f32
    %375 = vector.broadcast %cst_72 : f32 to vector<2x32xf32>
    %376 = arith.addf %375, %374 : vector<2x32xf32>
    %377 = arith.divf %375, %376 : vector<2x32xf32>
    %378 = vector.extract_strided_slice %370 {offsets = [0, 32], sizes = [2, 32], strides = [1, 1]} : vector<2x128xf32> to vector<2x32xf32>
    %379 = arith.negf %378 : vector<2x32xf32>
    %380 = math.exp %379 : vector<2x32xf32>
    %cst_73 = arith.constant 1.000000e+00 : f32
    %381 = vector.broadcast %cst_73 : f32 to vector<2x32xf32>
    %382 = arith.addf %381, %380 : vector<2x32xf32>
    %383 = arith.divf %381, %382 : vector<2x32xf32>
    %384 = vector.extract_strided_slice %370 {offsets = [0, 64], sizes = [2, 32], strides = [1, 1]} : vector<2x128xf32> to vector<2x32xf32>
    %385 = math.tanh %384 : vector<2x32xf32>
    %386 = vector.extract_strided_slice %370 {offsets = [0, 96], sizes = [2, 32], strides = [1, 1]} : vector<2x128xf32> to vector<2x32xf32>
    %387 = arith.negf %386 : vector<2x32xf32>
    %388 = math.exp %387 : vector<2x32xf32>
    %cst_74 = arith.constant 1.000000e+00 : f32
    %389 = vector.broadcast %cst_74 : f32 to vector<2x32xf32>
    %390 = arith.addf %389, %388 : vector<2x32xf32>
    %391 = arith.divf %389, %390 : vector<2x32xf32>
    %392 = arith.mulf %383, %371 : vector<2x32xf32>
    %393 = arith.mulf %377, %385 : vector<2x32xf32>
    %394 = arith.addf %392, %393 : vector<2x32xf32>
    %395 = math.tanh %394 : vector<2x32xf32>
    %396 = arith.mulf %391, %395 : vector<2x32xf32>
    %397 = vector.extract_strided_slice %8 {offsets = [0, 2, 0], sizes = [2, 1, 128], strides = [1, 1, 1]} : vector<2x8x128xf32> to vector<2x1x128xf32>
    %398 = vector.shape_cast %397 : vector<2x1x128xf32> to vector<2x128xf32>
    %399 = vector.extract_strided_slice %366 {offsets = [0, 128], sizes = [2, 128], strides = [1, 1]} : vector<2x256xf32> to vector<2x128xf32>
    %400 = arith.addf %398, %399 : vector<2x128xf32>
    %401 = vector.extract_strided_slice %357 {offsets = [0, 32], sizes = [2, 32], strides = [1, 1]} : vector<2x64xf32> to vector<2x32xf32>
    %402 = vector.extract_strided_slice %400 {offsets = [0, 0], sizes = [2, 32], strides = [1, 1]} : vector<2x128xf32> to vector<2x32xf32>
    %403 = arith.negf %402 : vector<2x32xf32>
    %404 = math.exp %403 : vector<2x32xf32>
    %cst_75 = arith.constant 1.000000e+00 : f32
    %405 = vector.broadcast %cst_75 : f32 to vector<2x32xf32>
    %406 = arith.addf %405, %404 : vector<2x32xf32>
    %407 = arith.divf %405, %406 : vector<2x32xf32>
    %408 = vector.extract_strided_slice %400 {offsets = [0, 32], sizes = [2, 32], strides = [1, 1]} : vector<2x128xf32> to vector<2x32xf32>
    %409 = arith.negf %408 : vector<2x32xf32>
    %410 = math.exp %409 : vector<2x32xf32>
    %cst_76 = arith.constant 1.000000e+00 : f32
    %411 = vector.broadcast %cst_76 : f32 to vector<2x32xf32>
    %412 = arith.addf %411, %410 : vector<2x32xf32>
    %413 = arith.divf %411, %412 : vector<2x32xf32>
    %414 = vector.extract_strided_slice %400 {offsets = [0, 64], sizes = [2, 32], strides = [1, 1]} : vector<2x128xf32> to vector<2x32xf32>
    %415 = math.tanh %414 : vector<2x32xf32>
    %416 = vector.extract_strided_slice %400 {offsets = [0, 96], sizes = [2, 32], strides = [1, 1]} : vector<2x128xf32> to vector<2x32xf32>
    %417 = arith.negf %416 : vector<2x32xf32>
    %418 = math.exp %417 : vector<2x32xf32>
    %cst_77 = arith.constant 1.000000e+00 : f32
    %419 = vector.broadcast %cst_77 : f32 to vector<2x32xf32>
    %420 = arith.addf %419, %418 : vector<2x32xf32>
    %421 = arith.divf %419, %420 : vector<2x32xf32>
    %422 = arith.mulf %413, %401 : vector<2x32xf32>
    %423 = arith.mulf %407, %415 : vector<2x32xf32>
    %424 = arith.addf %422, %423 : vector<2x32xf32>
    %425 = math.tanh %424 : vector<2x32xf32>
    %426 = arith.mulf %421, %425 : vector<2x32xf32>
    %427 = tpu.concatenate %396, %426 in 1 : vector<2x32xf32>, vector<2x32xf32> -> vector<2x64xf32>
    %428 = tpu.concatenate %394, %424 in 1 : vector<2x32xf32>, vector<2x32xf32> -> vector<2x64xf32>
    %c0_78 = arith.constant 0 : index
    %c5_79 = arith.constant 5 : index
    %c0_80 = arith.constant 0 : index
    %429 = vector.load %arg5[%c0_78, %c5_79, %c0_80] : memref<2x8x32xf32, #tpu.memory_space<vmem>>, vector<2x1x32xf32>
    %430 = vector.shape_cast %429 : vector<2x1x32xf32> to vector<2x32xf32>
    %431 = vector.shape_cast %396 : vector<2x32xf32> to vector<2x1x32xf32>
    tpu.vector_store %arg5[%c0_78, %c5_79, %c0_80], %431 {strides = array<i32>} : memref<2x8x32xf32, #tpu.memory_space<vmem>>, vector<2x1x32xf32>,
    %c0_81 = arith.constant 0 : index
    %c2_82 = arith.constant 2 : index
    %c0_83 = arith.constant 0 : index
    %432 = vector.load %arg6[%c0_81, %c2_82, %c0_83] : memref<2x8x32xf32, #tpu.memory_space<vmem>>, vector<2x1x32xf32>
    %433 = vector.shape_cast %432 : vector<2x1x32xf32> to vector<2x32xf32>
    %434 = vector.shape_cast %426 : vector<2x32xf32> to vector<2x1x32xf32>
    tpu.vector_store %arg6[%c0_81, %c2_82, %c0_83], %434 {strides = array<i32>} : memref<2x8x32xf32, #tpu.memory_space<vmem>>, vector<2x1x32xf32>,
    %cst_84 = arith.constant dense<0.000000e+00> : vector<2x256xf32>
    %435 = tpu.matmul %427, %5, %cst_84 {dimension_numbers = #tpu.dot_dimension_numbers<[1], [0], [0], [1], [0, 0, 1, 1], [], []>} : vector<2x64xf32>, vector<64x256xf32>, vector<2x256xf32> -> vector<2x256xf32>
    %436 = vector.broadcast %6 : vector<1x256xf32> to vector<2x256xf32>
    %437 = arith.addf %435, %436 : vector<2x256xf32>
    %438 = vector.extract_strided_slice %7 {offsets = [0, 6, 0], sizes = [2, 1, 128], strides = [1, 1, 1]} : vector<2x8x128xf32> to vector<2x1x128xf32>
    %439 = vector.shape_cast %438 : vector<2x1x128xf32> to vector<2x128xf32>
    %440 = vector.extract_strided_slice %437 {offsets = [0, 0], sizes = [2, 128], strides = [1, 1]} : vector<2x256xf32> to vector<2x128xf32>
    %441 = arith.addf %439, %440 : vector<2x128xf32>
    %442 = vector.extract_strided_slice %428 {offsets = [0, 0], sizes = [2, 32], strides = [1, 1]} : vector<2x64xf32> to vector<2x32xf32>
    %443 = vector.extract_strided_slice %441 {offsets = [0, 0], sizes = [2, 32], strides = [1, 1]} : vector<2x128xf32> to vector<2x32xf32>
    %444 = arith.negf %443 : vector<2x32xf32>
    %445 = math.exp %444 : vector<2x32xf32>
    %cst_85 = arith.constant 1.000000e+00 : f32
    %446 = vector.broadcast %cst_85 : f32 to vector<2x32xf32>
    %447 = arith.addf %446, %445 : vector<2x32xf32>
    %448 = arith.divf %446, %447 : vector<2x32xf32>
    %449 = vector.extract_strided_slice %441 {offsets = [0, 32], sizes = [2, 32], strides = [1, 1]} : vector<2x128xf32> to vector<2x32xf32>
    %450 = arith.negf %449 : vector<2x32xf32>
    %451 = math.exp %450 : vector<2x32xf32>
    %cst_86 = arith.constant 1.000000e+00 : f32
    %452 = vector.broadcast %cst_86 : f32 to vector<2x32xf32>
    %453 = arith.addf %452, %451 : vector<2x32xf32>
    %454 = arith.divf %452, %453 : vector<2x32xf32>
    %455 = vector.extract_strided_slice %441 {offsets = [0, 64], sizes = [2, 32], strides = [1, 1]} : vector<2x128xf32> to vector<2x32xf32>
    %456 = math.tanh %455 : vector<2x32xf32>
    %457 = vector.extract_strided_slice %441 {offsets = [0, 96], sizes = [2, 32], strides = [1, 1]} : vector<2x128xf32> to vector<2x32xf32>
    %458 = arith.negf %457 : vector<2x32xf32>
    %459 = math.exp %458 : vector<2x32xf32>
    %cst_87 = arith.constant 1.000000e+00 : f32
    %460 = vector.broadcast %cst_87 : f32 to vector<2x32xf32>
    %461 = arith.addf %460, %459 : vector<2x32xf32>
    %462 = arith.divf %460, %461 : vector<2x32xf32>
    %463 = arith.mulf %454, %442 : vector<2x32xf32>
    %464 = arith.mulf %448, %456 : vector<2x32xf32>
    %465 = arith.addf %463, %464 : vector<2x32xf32>
    %466 = math.tanh %465 : vector<2x32xf32>
    %467 = arith.mulf %462, %466 : vector<2x32xf32>
    %468 = vector.extract_strided_slice %8 {offsets = [0, 1, 0], sizes = [2, 1, 128], strides = [1, 1, 1]} : vector<2x8x128xf32> to vector<2x1x128xf32>
    %469 = vector.shape_cast %468 : vector<2x1x128xf32> to vector<2x128xf32>
    %470 = vector.extract_strided_slice %437 {offsets = [0, 128], sizes = [2, 128], strides = [1, 1]} : vector<2x256xf32> to vector<2x128xf32>
    %471 = arith.addf %469, %470 : vector<2x128xf32>
    %472 = vector.extract_strided_slice %428 {offsets = [0, 32], sizes = [2, 32], strides = [1, 1]} : vector<2x64xf32> to vector<2x32xf32>
    %473 = vector.extract_strided_slice %471 {offsets = [0, 0], sizes = [2, 32], strides = [1, 1]} : vector<2x128xf32> to vector<2x32xf32>
    %474 = arith.negf %473 : vector<2x32xf32>
    %475 = math.exp %474 : vector<2x32xf32>
    %cst_88 = arith.constant 1.000000e+00 : f32
    %476 = vector.broadcast %cst_88 : f32 to vector<2x32xf32>
    %477 = arith.addf %476, %475 : vector<2x32xf32>
    %478 = arith.divf %476, %477 : vector<2x32xf32>
    %479 = vector.extract_strided_slice %471 {offsets = [0, 32], sizes = [2, 32], strides = [1, 1]} : vector<2x128xf32> to vector<2x32xf32>
    %480 = arith.negf %479 : vector<2x32xf32>
    %481 = math.exp %480 : vector<2x32xf32>
    %cst_89 = arith.constant 1.000000e+00 : f32
    %482 = vector.broadcast %cst_89 : f32 to vector<2x32xf32>
    %483 = arith.addf %482, %481 : vector<2x32xf32>
    %484 = arith.divf %482, %483 : vector<2x32xf32>
    %485 = vector.extract_strided_slice %471 {offsets = [0, 64], sizes = [2, 32], strides = [1, 1]} : vector<2x128xf32> to vector<2x32xf32>
    %486 = math.tanh %485 : vector<2x32xf32>
    %487 = vector.extract_strided_slice %471 {offsets = [0, 96], sizes = [2, 32], strides = [1, 1]} : vector<2x128xf32> to vector<2x32xf32>
    %488 = arith.negf %487 : vector<2x32xf32>
    %489 = math.exp %488 : vector<2x32xf32>
    %cst_90 = arith.constant 1.000000e+00 : f32
    %490 = vector.broadcast %cst_90 : f32 to vector<2x32xf32>
    %491 = arith.addf %490, %489 : vector<2x32xf32>
    %492 = arith.divf %490, %491 : vector<2x32xf32>
    %493 = arith.mulf %484, %472 : vector<2x32xf32>
    %494 = arith.mulf %478, %486 : vector<2x32xf32>
    %495 = arith.addf %493, %494 : vector<2x32xf32>
    %496 = math.tanh %495 : vector<2x32xf32>
    %497 = arith.mulf %492, %496 : vector<2x32xf32>
    %498 = tpu.concatenate %467, %497 in 1 : vector<2x32xf32>, vector<2x32xf32> -> vector<2x64xf32>
    %499 = tpu.concatenate %465, %495 in 1 : vector<2x32xf32>, vector<2x32xf32> -> vector<2x64xf32>
    %c0_91 = arith.constant 0 : index
    %c6_92 = arith.constant 6 : index
    %c0_93 = arith.constant 0 : index
    %500 = vector.load %arg5[%c0_91, %c6_92, %c0_93] : memref<2x8x32xf32, #tpu.memory_space<vmem>>, vector<2x1x32xf32>
    %501 = vector.shape_cast %500 : vector<2x1x32xf32> to vector<2x32xf32>
    %502 = vector.shape_cast %467 : vector<2x32xf32> to vector<2x1x32xf32>
    tpu.vector_store %arg5[%c0_91, %c6_92, %c0_93], %502 {strides = array<i32>} : memref<2x8x32xf32, #tpu.memory_space<vmem>>, vector<2x1x32xf32>,
    %c0_94 = arith.constant 0 : index
    %c1_95 = arith.constant 1 : index
    %c0_96 = arith.constant 0 : index
    %503 = vector.load %arg6[%c0_94, %c1_95, %c0_96] : memref<2x8x32xf32, #tpu.memory_space<vmem>>, vector<2x1x32xf32>
    %504 = vector.shape_cast %503 : vector<2x1x32xf32> to vector<2x32xf32>
    %505 = vector.shape_cast %497 : vector<2x32xf32> to vector<2x1x32xf32>
    tpu.vector_store %arg6[%c0_94, %c1_95, %c0_96], %505 {strides = array<i32>} : memref<2x8x32xf32, #tpu.memory_space<vmem>>, vector<2x1x32xf32>,
    %cst_97 = arith.constant dense<0.000000e+00> : vector<2x256xf32>
    %506 = tpu.matmul %498, %5, %cst_97 {dimension_numbers = #tpu.dot_dimension_numbers<[1], [0], [0], [1], [0, 0, 1, 1], [], []>} : vector<2x64xf32>, vector<64x256xf32>, vector<2x256xf32> -> vector<2x256xf32>
    %507 = vector.broadcast %6 : vector<1x256xf32> to vector<2x256xf32>
    %508 = arith.addf %506, %507 : vector<2x256xf32>
    %509 = vector.extract_strided_slice %7 {offsets = [0, 7, 0], sizes = [2, 1, 128], strides = [1, 1, 1]} : vector<2x8x128xf32> to vector<2x1x128xf32>
    %510 = vector.shape_cast %509 : vector<2x1x128xf32> to vector<2x128xf32>
    %511 = vector.extract_strided_slice %508 {offsets = [0, 0], sizes = [2, 128], strides = [1, 1]} : vector<2x256xf32> to vector<2x128xf32>
    %512 = arith.addf %510, %511 : vector<2x128xf32>
    %513 = vector.extract_strided_slice %499 {offsets = [0, 0], sizes = [2, 32], strides = [1, 1]} : vector<2x64xf32> to vector<2x32xf32>
    %514 = vector.extract_strided_slice %512 {offsets = [0, 0], sizes = [2, 32], strides = [1, 1]} : vector<2x128xf32> to vector<2x32xf32>
    %515 = arith.negf %514 : vector<2x32xf32>
    %516 = math.exp %515 : vector<2x32xf32>
    %cst_98 = arith.constant 1.000000e+00 : f32
    %517 = vector.broadcast %cst_98 : f32 to vector<2x32xf32>
    %518 = arith.addf %517, %516 : vector<2x32xf32>
    %519 = arith.divf %517, %518 : vector<2x32xf32>
    %520 = vector.extract_strided_slice %512 {offsets = [0, 32], sizes = [2, 32], strides = [1, 1]} : vector<2x128xf32> to vector<2x32xf32>
    %521 = arith.negf %520 : vector<2x32xf32>
    %522 = math.exp %521 : vector<2x32xf32>
    %cst_99 = arith.constant 1.000000e+00 : f32
    %523 = vector.broadcast %cst_99 : f32 to vector<2x32xf32>
    %524 = arith.addf %523, %522 : vector<2x32xf32>
    %525 = arith.divf %523, %524 : vector<2x32xf32>
    %526 = vector.extract_strided_slice %512 {offsets = [0, 64], sizes = [2, 32], strides = [1, 1]} : vector<2x128xf32> to vector<2x32xf32>
    %527 = math.tanh %526 : vector<2x32xf32>
    %528 = vector.extract_strided_slice %512 {offsets = [0, 96], sizes = [2, 32], strides = [1, 1]} : vector<2x128xf32> to vector<2x32xf32>
    %529 = arith.negf %528 : vector<2x32xf32>
    %530 = math.exp %529 : vector<2x32xf32>
    %cst_100 = arith.constant 1.000000e+00 : f32
    %531 = vector.broadcast %cst_100 : f32 to vector<2x32xf32>
    %532 = arith.addf %531, %530 : vector<2x32xf32>
    %533 = arith.divf %531, %532 : vector<2x32xf32>
    %534 = arith.mulf %525, %513 : vector<2x32xf32>
    %535 = arith.mulf %519, %527 : vector<2x32xf32>
    %536 = arith.addf %534, %535 : vector<2x32xf32>
    %537 = math.tanh %536 : vector<2x32xf32>
    %538 = arith.mulf %533, %537 : vector<2x32xf32>
    %539 = vector.extract_strided_slice %8 {offsets = [0, 0, 0], sizes = [2, 1, 128], strides = [1, 1, 1]} : vector<2x8x128xf32> to vector<2x1x128xf32>
    %540 = vector.shape_cast %539 : vector<2x1x128xf32> to vector<2x128xf32>
    %541 = vector.extract_strided_slice %508 {offsets = [0, 128], sizes = [2, 128], strides = [1, 1]} : vector<2x256xf32> to vector<2x128xf32>
    %542 = arith.addf %540, %541 : vector<2x128xf32>
    %543 = vector.extract_strided_slice %499 {offsets = [0, 32], sizes = [2, 32], strides = [1, 1]} : vector<2x64xf32> to vector<2x32xf32>
    %544 = vector.extract_strided_slice %542 {offsets = [0, 0], sizes = [2, 32], strides = [1, 1]} : vector<2x128xf32> to vector<2x32xf32>
    %545 = arith.negf %544 : vector<2x32xf32>
    %546 = math.exp %545 : vector<2x32xf32>
    %cst_101 = arith.constant 1.000000e+00 : f32
    %547 = vector.broadcast %cst_101 : f32 to vector<2x32xf32>
    %548 = arith.addf %547, %546 : vector<2x32xf32>
    %549 = arith.divf %547, %548 : vector<2x32xf32>
    %550 = vector.extract_strided_slice %542 {offsets = [0, 32], sizes = [2, 32], strides = [1, 1]} : vector<2x128xf32> to vector<2x32xf32>
    %551 = arith.negf %550 : vector<2x32xf32>
    %552 = math.exp %551 : vector<2x32xf32>
    %cst_102 = arith.constant 1.000000e+00 : f32
    %553 = vector.broadcast %cst_102 : f32 to vector<2x32xf32>
    %554 = arith.addf %553, %552 : vector<2x32xf32>
    %555 = arith.divf %553, %554 : vector<2x32xf32>
    %556 = vector.extract_strided_slice %542 {offsets = [0, 64], sizes = [2, 32], strides = [1, 1]} : vector<2x128xf32> to vector<2x32xf32>
    %557 = math.tanh %556 : vector<2x32xf32>
    %558 = vector.extract_strided_slice %542 {offsets = [0, 96], sizes = [2, 32], strides = [1, 1]} : vector<2x128xf32> to vector<2x32xf32>
    %559 = arith.negf %558 : vector<2x32xf32>
    %560 = math.exp %559 : vector<2x32xf32>
    %cst_103 = arith.constant 1.000000e+00 : f32
    %561 = vector.broadcast %cst_103 : f32 to vector<2x32xf32>
    %562 = arith.addf %561, %560 : vector<2x32xf32>
    %563 = arith.divf %561, %562 : vector<2x32xf32>
    %564 = arith.mulf %555, %543 : vector<2x32xf32>
    %565 = arith.mulf %549, %557 : vector<2x32xf32>
    %566 = arith.addf %564, %565 : vector<2x32xf32>
    %567 = math.tanh %566 : vector<2x32xf32>
    %568 = arith.mulf %563, %567 : vector<2x32xf32>
    %569 = tpu.concatenate %538, %568 in 1 : vector<2x32xf32>, vector<2x32xf32> -> vector<2x64xf32>
    %570 = tpu.concatenate %536, %566 in 1 : vector<2x32xf32>, vector<2x32xf32> -> vector<2x64xf32>
    %c0_104 = arith.constant 0 : index
    %c7_105 = arith.constant 7 : index
    %c0_106 = arith.constant 0 : index
    %571 = vector.load %arg5[%c0_104, %c7_105, %c0_106] : memref<2x8x32xf32, #tpu.memory_space<vmem>>, vector<2x1x32xf32>
    %572 = vector.shape_cast %571 : vector<2x1x32xf32> to vector<2x32xf32>
    %573 = vector.shape_cast %538 : vector<2x32xf32> to vector<2x1x32xf32>
    tpu.vector_store %arg5[%c0_104, %c7_105, %c0_106], %573 {strides = array<i32>} : memref<2x8x32xf32, #tpu.memory_space<vmem>>, vector<2x1x32xf32>,
    %c0_107 = arith.constant 0 : index
    %c0_108 = arith.constant 0 : index
    %c0_109 = arith.constant 0 : index
    %574 = vector.load %arg6[%c0_107, %c0_108, %c0_109] : memref<2x8x32xf32, #tpu.memory_space<vmem>>, vector<2x1x32xf32>
    %575 = vector.shape_cast %574 : vector<2x1x32xf32> to vector<2x32xf32>
    %576 = vector.shape_cast %568 : vector<2x32xf32> to vector<2x1x32xf32>
    tpu.vector_store %arg6[%c0_107, %c0_108, %c0_109], %576 {strides = array<i32>} : memref<2x8x32xf32, #tpu.memory_space<vmem>>, vector<2x1x32xf32>,
    %c0_110 = arith.constant 0 : index
    %c0_111 = arith.constant 0 : index
    %577 = vector.load %arg7[%c0_110, %c0_111] : memref<2x64xf32, #tpu.memory_space<vmem>>, vector<2x64xf32>
    tpu.vector_store %arg7[%c0_110, %c0_111], %569 {strides = array<i32>} : memref<2x64xf32, #tpu.memory_space<vmem>>, vector<2x64xf32>,
    %c0_112 = arith.constant 0 : index
    %c0_113 = arith.constant 0 : index
    %578 = vector.load %arg8[%c0_112, %c0_113] : memref<2x64xf32, #tpu.memory_space<vmem>>, vector<2x64xf32>
    tpu.vector_store %arg8[%c0_112, %c0_113], %570 {strides = array<i32>} : memref<2x64xf32, #tpu.memory_space<vmem>>, vector<2x64xf32>,
    return
  }
  func.func @transform_0(%arg0: i32) -> (i32, i32, i32) {
    %c0_i32 = arith.constant 0 : i32
    %c0_i32_0 = arith.constant 0 : i32
    %c0_i32_1 = arith.constant 0 : i32
    return %c0_i32, %arg0, %c0_i32_0 : i32, i32, i32
  }
  func.func @transform_1(%arg0: i32) -> (i32, i32, i32) {
    %c1_i32 = arith.constant 1 : i32
    %0 = arith.subi %c1_i32, %arg0 : i32
    %c0_i32 = arith.constant 0 : i32
    %c0_i32_0 = arith.constant 0 : i32
    %c0_i32_1 = arith.constant 0 : i32
    return %c0_i32, %0, %c0_i32_0 : i32, i32, i32
  }
  func.func @transform_2(%arg0: i32) -> (i32, i32) {
    %c0_i32 = arith.constant 0 : i32
    %c0_i32_0 = arith.constant 0 : i32
    %c0_i32_1 = arith.constant 0 : i32
    return %c0_i32, %c0_i32_0 : i32, i32
  }
  func.func @transform_3(%arg0: i32) -> (i32, i32) {
    %c0_i32 = arith.constant 0 : i32
    %c0_i32_0 = arith.constant 0 : i32
    %c0_i32_1 = arith.constant 0 : i32
    return %c0_i32, %c0_i32_0 : i32, i32
  }
  func.func @transform_4(%arg0: i32) -> (i32, i32, i32) {
    %c0_i32 = arith.constant 0 : i32
    %c0_i32_0 = arith.constant 0 : i32
    %c0_i32_1 = arith.constant 0 : i32
    return %c0_i32, %arg0, %c0_i32_0 : i32, i32, i32
  }
  func.func @transform_5(%arg0: i32) -> (i32, i32, i32) {
    %c1_i32 = arith.constant 1 : i32
    %0 = arith.subi %c1_i32, %arg0 : i32
    %c0_i32 = arith.constant 0 : i32
    %c0_i32_0 = arith.constant 0 : i32
    %c0_i32_1 = arith.constant 0 : i32
    return %c0_i32, %0, %c0_i32_0 : i32, i32, i32
  }
}

</mosaic_0001>

<llo_original>
// kernel: contextual_embedding.2
$region0: #{contextual_embedding.2}
  #allocation0 [shape = 'u32[]', space=smem, size = 0x4, offset = 0x4, fixed_abs, tag = 'smem constant byte address 0x4 - core index']
  #allocation1 [shape = 'u32[144,128]{1,0:T(1,128)}', space=vmem, size = 0x12000, scoped, tag = 'internal scratch']
  %s0 = inlined_call_operand.vmem [shape: f32[32,32], index: 0, kind: input, shape index: {}]
  %s1 = inlined_call_operand.vmem [shape: f32[2,32,32], index: 1, kind: input, shape index: {}]
  %s2 = inlined_call_operand.vmem [shape: f32[2,1,32], index: 2, kind: input, shape index: {}]
  %s3 = inlined_call_operand.vmem [shape: f32[2,32,32], index: 3, kind: input, shape index: {}]
  %s4 = inlined_call_operand.hbm [shape: f32[2,1,32], index: 4, kind: input, shape index: {}]
  %s5 = inlined_call_operand.vmem [shape: f32[32,256], index: 5, kind: input, shape index: {}]
  %s6 = inlined_call_operand.vmem [shape: f32[32,128], index: 6, kind: output, shape index: {0}]
  %s7 = inlined_call_operand.vmem [shape: f32[32,128], index: 7, kind: output, shape index: {1}]
  %8 = xla_tuple %s6, %s7
  %s9 = sld [smem:[#allocation0]]
  $region69: #{contextual_embedding.2} parent=0
    _
  %s11 = ssub.s32 1, %s9
  %s12 = scalar_select 0, %s11, %s9
  $region1: #{contextual_embedding.2} parent=0
    #allocation2 [shape = 'u8[1024]{0}', space=vmem, size = 0x400, scoped, tag = 'input window, operand 4, single buffered']
    #allocation3 [shape = 's32[2]{0}', space=sflag, size = 0x8, scoped, tag = 'scoped memory for contextual_embedding.2']
    %13 = vsyncpa [#allocation3], 0
    loop: start=0, step=1, limit=4
    $region2: #{contextual_embedding.2} parent=1 // loop_pre_header
      _
    $region3: #{contextual_embedding.2} parent=1 // loop_header
      %s15 = sphi 0, %s19
      %p16 = scmp.ge.s32.totalorder %s15, 4
      %s25 = sphi 0, %s27
      %s28 = sphi 0, %s25
      %s29 = sphi 0, %s28
      %s45 = sphi 0, %s29
      %s49 = sphi 0, %s49
      %s51 = sphi 0, %s49
      %s52 = sphi 0, %s51
      %s66 = sphi 0, %s52
      %s70 = sphi 0, %s70
      %s72 = sphi 0, %s70
      %s73 = sphi 0, %s72
      %s87 = sphi 0, %s73
      %s91 = sphi 0, %s91
      %s93 = sphi 0, %s91
      %s94 = sphi 0, %s93
      %s108 = sphi 0, %s94
      %s112 = sphi 0, %s112
      %s114 = sphi 0, %s112
      %s115 = sphi 0, %s114
      %s129 = sphi 0, %s115
      %s133 = sphi 0, %s133
      %s135 = sphi 0, %s133
      %s136 = sphi 0, %s135
      %s150 = sphi 0, %s136
      %s156 = sphi 0, %s158
      %s159 = sphi 0, %s156
      %s160 = sphi 0, %s159
      %s176 = sphi 0, %s160
      %s182 = sphi 0, %s184
      %s185 = sphi 0, %s182
      %s186 = sphi 0, %s185
      %s202 = sphi 0, %s186
    $region4: #{contextual_embedding.2} parent=1 // loop_header_branch
      %18 = sbr.rel (%p16) target = $region8
    $region5: #{contextual_embedding.2} parent=1 // loop_body
      %s20 = ssub.s32 %s15, 1
      %s21 = ssub.s32 %s15, 2
      %s22 = sadd.s32 %s15, 1
      %s23 = ssub.s32 %s15, %s22
      %p24 = scmp.eq.s32.totalorder %s23, 0
      %s26 = sadd.s32 %s25, 1
      %s27 = scalar_select %p24, %s25, %s26
      %p30 = pneg %p24
      %p31 = scmp.eq.s32.totalorder %s15, 1
      %p32 = por %p30, %p31
      %p33 = scmp.ne.s32.totalorder %s25, %s28
      %p34 = scmp.eq.s32.totalorder %s15, 0
      %p35 = por %p33, %p34
      %p36 = scmp.ne.s32.totalorder %s25, %s28
      %p37 = scmp.eq.s32.totalorder %s20, 1
      %p38 = por %p36, %p37
      %p39 = scmp.ne.s32.totalorder %s28, %s29
      %p40 = scmp.eq.s32.totalorder %s20, 0
      %p41 = por %p39, %p40
      %p42 = scmp.ne.s32.totalorder %s28, %s29
      %p43 = scmp.eq.s32.totalorder %s21, 1
      %p44 = por %p42, %p43
      %p46 = scmp.ne.s32.totalorder %s29, %s45
      %p47 = scmp.eq.s32.totalorder %s21, 0
      %p48 = por %p46, %p47
      %s50 = sadd.s32 %s49, 1
      %p53 = scmp.eq.s32.totalorder %s15, 1
      %p54 = scmp.ne.s32.totalorder %s49, %s51
      %p55 = scmp.eq.s32.totalorder %s15, 0
      %p56 = por %p54, %p55
      %p57 = scmp.ne.s32.totalorder %s49, %s51
      %p58 = scmp.eq.s32.totalorder %s20, 1
      %p59 = por %p57, %p58
      %p60 = scmp.ne.s32.totalorder %s51, %s52
      %p61 = scmp.eq.s32.totalorder %s20, 0
      %p62 = por %p60, %p61
      %p63 = scmp.ne.s32.totalorder %s51, %s52
      %p64 = scmp.eq.s32.totalorder %s21, 1
      %p65 = por %p63, %p64
      %p67 = scmp.ne.s32.totalorder %s52, %s66
      %p68 = scmp.eq.s32.totalorder %s21, 0
      %p69 = por %p67, %p68
      %s71 = sadd.s32 %s70, 1
      %p74 = scmp.eq.s32.totalorder %s15, 1
      %p75 = scmp.ne.s32.totalorder %s70, %s72
      %p76 = scmp.eq.s32.totalorder %s15, 0
      %p77 = por %p75, %p76
      %p78 = scmp.ne.s32.totalorder %s70, %s72
      %p79 = scmp.eq.s32.totalorder %s20, 1
      %p80 = por %p78, %p79
      %p81 = scmp.ne.s32.totalorder %s72, %s73
      %p82 = scmp.eq.s32.totalorder %s20, 0
      %p83 = por %p81, %p82
      %p84 = scmp.ne.s32.totalorder %s72, %s73
      %p85 = scmp.eq.s32.totalorder %s21, 1
      %p86 = por %p84, %p85
      %p88 = scmp.ne.s32.totalorder %s73, %s87
      %p89 = scmp.eq.s32.totalorder %s21, 0
      %p90 = por %p88, %p89
      %s92 = sadd.s32 %s91, 1
      %p95 = scmp.eq.s32.totalorder %s15, 1
      %p96 = scmp.ne.s32.totalorder %s91, %s93
      %p97 = scmp.eq.s32.totalorder %s15, 0
      %p98 = por %p96, %p97
      %p99 = scmp.ne.s32.totalorder %s91, %s93
      %p100 = scmp.eq.s32.totalorder %s20, 1
      %p101 = por %p99, %p100
      %p102 = scmp.ne.s32.totalorder %s93, %s94
      %p103 = scmp.eq.s32.totalorder %s20, 0
      %p104 = por %p102, %p103
      %p105 = scmp.ne.s32.totalorder %s93, %s94
      %p106 = scmp.eq.s32.totalorder %s21, 1
      %p107 = por %p105, %p106
      %p109 = scmp.ne.s32.totalorder %s94, %s108
      %p110 = scmp.eq.s32.totalorder %s21, 0
      %p111 = por %p109, %p110
      %s113 = sadd.s32 %s112, 1
      %p116 = scmp.eq.s32.totalorder %s15, 1
      %p117 = scmp.ne.s32.totalorder %s112, %s114
      %p118 = scmp.eq.s32.totalorder %s15, 0
      %p119 = por %p117, %p118
      %p120 = scmp.ne.s32.totalorder %s112, %s114
      %p121 = scmp.eq.s32.totalorder %s20, 1
      %p122 = por %p120, %p121
      %p123 = scmp.ne.s32.totalorder %s114, %s115
      %p124 = scmp.eq.s32.totalorder %s20, 0
      %p125 = por %p123, %p124
      %p126 = scmp.ne.s32.totalorder %s114, %s115
      %p127 = scmp.eq.s32.totalorder %s21, 1
      %p128 = por %p126, %p127
      %p130 = scmp.ne.s32.totalorder %s115, %s129
      %p131 = scmp.eq.s32.totalorder %s21, 0
      %p132 = por %p130, %p131
      %s134 = sadd.s32 %s133, 1
      %p137 = scmp.eq.s32.totalorder %s15, 1
      %p138 = scmp.ne.s32.totalorder %s133, %s135
      %p139 = scmp.eq.s32.totalorder %s15, 0
      %p140 = por %p138, %p139
      %p141 = scmp.ne.s32.totalorder %s133, %s135
      %p142 = scmp.eq.s32.totalorder %s20, 1
      %p143 = por %p141, %p142
      %p144 = scmp.ne.s32.totalorder %s135, %s136
      %p145 = scmp.eq.s32.totalorder %s20, 0
      %p146 = por %p144, %p145
      %p147 = scmp.ne.s32.totalorder %s135, %s136
      %p148 = scmp.eq.s32.totalorder %s21, 1
      %p149 = por %p147, %p148
      %p151 = scmp.ne.s32.totalorder %s136, %s150
      %p152 = scmp.eq.s32.totalorder %s21, 0
      %p153 = por %p151, %p152
      %s154 = ssub.s32 %s15, %s22
      %p155 = scmp.eq.s32.totalorder %s154, 0
      %s157 = sadd.s32 %s156, 1
      %s158 = scalar_select %p155, %s156, %s157
      %p161 = pneg %p155
      %p162 = scmp.eq.s32.totalorder %s15, 1
      %p163 = por %p161, %p162
      %p164 = scmp.ne.s32.totalorder %s156, %s159
      %p165 = scmp.eq.s32.totalorder %s15, 0
      %p166 = por %p164, %p165
      %p167 = scmp.ne.s32.totalorder %s156, %s159
      %p168 = scmp.eq.s32.totalorder %s20, 1
      %p169 = por %p167, %p168
      %p170 = scmp.ne.s32.totalorder %s159, %s160
      %p171 = scmp.eq.s32.totalorder %s20, 0
      %p172 = por %p170, %p171
      %p173 = scmp.ne.s32.totalorder %s159, %s160
      %p174 = scmp.eq.s32.totalorder %s21, 1
      %p175 = por %p173, %p174
      %p177 = scmp.ne.s32.totalorder %s160, %s176
      %p178 = scmp.eq.s32.totalorder %s21, 0
      %p179 = por %p177, %p178
      %s180 = ssub.s32 %s15, %s22
      %p181 = scmp.eq.s32.totalorder %s180, 0
      %s183 = sadd.s32 %s182, 1
      %s184 = scalar_select %p181, %s182, %s183
      %p187 = pneg %p181
      %p188 = scmp.eq.s32.totalorder %s15, 1
      %p189 = por %p187, %p188
      %p190 = scmp.ne.s32.totalorder %s182, %s185
      %p191 = scmp.eq.s32.totalorder %s15, 0
      %p192 = por %p190, %p191
      %p193 = scmp.ne.s32.totalorder %s182, %s185
      %p194 = scmp.eq.s32.totalorder %s20, 1
      %p195 = por %p193, %p194
      %p196 = scmp.ne.s32.totalorder %s185, %s186
      %p197 = scmp.eq.s32.totalorder %s20, 0
      %p198 = por %p196, %p197
      %p199 = scmp.ne.s32.totalorder %s185, %s186
      %p200 = scmp.eq.s32.totalorder %s21, 1
      %p201 = por %p199, %p200
      %p203 = scmp.ne.s32.totalorder %s186, %s202
      %p204 = scmp.eq.s32.totalorder %s21, 0
      %p205 = por %p203, %p204
      %p206 = scmp.le.s32.totalorder 1, %s15
      %p207 = scmp.lt.s32.totalorder %s15, 3
      %p208 = pnand %p206, %p207
      %p209 = pneg %p208
      // Predicated region
      $region9: #{contextual_embedding.2} parent=5 // pred_check
        _
      $region10: #{contextual_embedding.2} parent=5 // pred_check_branch
        %211 = sbr.rel (%p208) target = $region12
      $region11: #{contextual_embedding.2} parent=5 // pred_region
        %s212 = ssub.s32 %s15, 1
        // Predicated region
        $region13: #{contextual_embedding.2} parent=11 // pred_check
          %p213 = pneg %p62
        $region14: #{contextual_embedding.2} parent=11 // pred_check_branch
          %215 = sbr.rel (%p213) target = $region16
        $region15: #{contextual_embedding.2} parent=11 // pred_region
          _
        $region16: #{contextual_embedding.2} parent=11 // pred_fallthru
          _
        // Predicated region
        $region17: #{contextual_embedding.2} parent=11 // pred_check
          %p216 = pneg %p83
        $region18: #{contextual_embedding.2} parent=11 // pred_check_branch
          %218 = sbr.rel (%p216) target = $region20
        $region19: #{contextual_embedding.2} parent=11 // pred_region
          _
        $region20: #{contextual_embedding.2} parent=11 // pred_fallthru
          _
        // Predicated region
        $region21: #{contextual_embedding.2} parent=11 // pred_check
          %p219 = pneg %p104
        $region22: #{contextual_embedding.2} parent=11 // pred_check_branch
          %221 = sbr.rel (%p219) target = $region24
        $region23: #{contextual_embedding.2} parent=11 // pred_region
          _
        $region24: #{contextual_embedding.2} parent=11 // pred_fallthru
          _
        // Predicated region
        $region25: #{contextual_embedding.2} parent=11 // pred_check
          %p222 = pneg %p125
        $region26: #{contextual_embedding.2} parent=11 // pred_check_branch
          %224 = sbr.rel (%p222) target = $region28
        $region27: #{contextual_embedding.2} parent=11 // pred_region
          %s226 = ssub.s32 32, 32
          %227 = vsyncadd [#allocation3], %s226
          %s228 = sshll.u32 [#allocation2], 4
          %s229 = int_to_ptr.vmem [resolvable:$true] %s228
          %234 = dma.hbm_to_vmem [thread:$0]  %s4, 32, %s229, [#allocation3], 16, 16, 1
        $region28: #{contextual_embedding.2} parent=11 // pred_fallthru
          _
        // Predicated region
        $region29: #{contextual_embedding.2} parent=11 // pred_check
          %p235 = pneg %p146
        $region30: #{contextual_embedding.2} parent=11 // pred_check_branch
          %237 = sbr.rel (%p235) target = $region32
        $region31: #{contextual_embedding.2} parent=11 // pred_region
          _
        $region32: #{contextual_embedding.2} parent=11 // pred_fallthru
          _
      $region12: #{contextual_embedding.2} parent=5 // pred_fallthru
        _
      %p238 = scmp.lt.s32.totalorder %s15, 2
      // Predicated region
      $region33: #{contextual_embedding.2} parent=5 // pred_check
        %p239 = pneg %p238
      $region34: #{contextual_embedding.2} parent=5 // pred_check_branch
        %241 = sbr.rel (%p239) target = $region36
      $region35: #{contextual_embedding.2} parent=5 // pred_region
        // Predicated region
        $region37: #{contextual_embedding.2} parent=35 // pred_check
          %p242 = pneg %p35
        $region38: #{contextual_embedding.2} parent=35 // pred_check_branch
          %244 = sbr.rel (%p242) target = $region40
        $region39: #{contextual_embedding.2} parent=35 // pred_region
          %s245 = smul.u32 2, %s15
          %p246 = scmp.lt.s32.totalorder %s245, 3
          %s247 = scalar_select %p246, %s245, 3
          %s248 = smul.addr %s247, 8
          %s249 = scalar_lea.vmem %s0, %s248
          %s250 = smul.u32 2, %s15
        $region40: #{contextual_embedding.2} parent=35 // pred_fallthru
          _
      $region36: #{contextual_embedding.2} parent=5 // pred_fallthru
        _
      %p251 = scmp.le.s32.totalorder 1, %s15
      %p252 = scmp.lt.s32.totalorder %s15, 3
      %p253 = pnand %p251, %p252
      %p254 = pneg %p253
      // Predicated region
      $region41: #{contextual_embedding.2} parent=5 // pred_check
        _
      $region42: #{contextual_embedding.2} parent=5 // pred_check_branch
        %256 = sbr.rel (%p253) target = $region44
      $region43: #{contextual_embedding.2} parent=5 // pred_region
        %s257 = ssub.s32 %s15, 1
        // Predicated region
        $region45: #{contextual_embedding.2} parent=43 // pred_check
          %p258 = pneg %p125
        $region46: #{contextual_embedding.2} parent=43 // pred_check_branch
          %260 = sbr.rel (%p258) target = $region48
        $region47: #{contextual_embedding.2} parent=43 // pred_region
          %261 = dma.done [#allocation3], 32
        $region48: #{contextual_embedding.2} parent=43 // pred_fallthru
          _
        %s262 = smul.u32 2, %s20
        %p263 = scmp.lt.s32.totalorder %s262, 3
        %s264 = scalar_select %p263, %s262, 3
        %s265 = smul.addr %s264, 8
        %s266 = scalar_lea.vmem %s0, %s265
        %p267 = pneg %p41
        %p268 = pneg %p38
        %p269 = pneg %p62
        %p270 = pneg %p59
        %p271 = pneg %p83
        %p272 = pneg %p80
        %p273 = pneg %p104
        %p274 = pneg %p101
        %p275 = pneg %p125
        %p276 = pneg %p122
        %p277 = pneg %p146
        %p278 = pneg %p143
        %p279 = pneg %p172
        %p280 = pneg %p169
        %s281 = smul.u32 2, %s20
        %p282 = scmp.lt.s32.totalorder %s281, 3
        %s283 = scalar_select %p282, %s281, 3
        %s284 = smul.addr %s283, 8
        %s285 = scalar_lea.vmem %s6, %s284
        %p286 = pneg %p198
        %p287 = pneg %p195
        %s288 = smul.u32 2, %s20
        %p289 = scmp.lt.s32.totalorder %s288, 3
        %s290 = scalar_select %p289, %s288, 3
        %s291 = smul.addr %s290, 8
        %s292 = scalar_lea.vmem %s7, %s291
        %s293 = smul.u32 2, %s20
        %p294 = scmp.lt.s32.totalorder %s293, 3
        %s295 = scalar_select %p294, %s293, 3
        %s296 = smul.addr %s295, 8
        %s297 = scalar_lea.vmem %s0, %s296
        %s298 = smul.u32 2, %s20
        %s299 = smul.u32 2, %s20
        %p300 = scmp.lt.s32.totalorder %s299, 3
        %s301 = scalar_select %p300, %s299, 3
        %s302 = smul.addr %s301, 8
        %s303 = scalar_lea.vmem %s6, %s302
        %s304 = smul.u32 2, %s20
        %s305 = smul.u32 2, %s20
        %p306 = scmp.lt.s32.totalorder %s305, 3
        %s307 = scalar_select %p306, %s305, 3
        %s308 = smul.addr %s307, 8
        %s309 = scalar_lea.vmem %s7, %s308
        %s310 = smul.u32 2, %s20
        %v311 = vld [vmem:[%s297] sm:$0xff]
        %v312 = vld [vmem:[%s297 + $0x8] sm:$0xff]
        %v313 = vld [vmem:[%s1] sm:$0xff]
        %v314 = vld [vmem:[%s1 + $0x8] sm:$0xff]
        %v315 = vld [vmem:[%s1 + $0x10] sm:$0xff]
        %v316 = vld [vmem:[%s1 + $0x18] sm:$0xff]
        %v317 = vld [vmem:[%s2] sm:$0x1]
        %v319 = vlaneseq
        %v320 = vshrl.u32 %v319, 7
        %v321 = vsub.s32 0, %v320
        %v322 = vrot.slane %v317, %v321
        %vm324 = vcmask 261120
        %v326 = vsel %vm324, %v311, 0
        %v329 = vsel %vm324, %v312, 0
        %331 = vmatprep.subr.mxu0 0.0
        %332 = vmatpush1.msra.mxu0 %v313
        %333 = vmatprep.subr.mxu0 0.0
        %334 = vmatpush1.msra.mxu0 %v314
        %335 = vmatprep.subr.mxu0 0.0
        %336 = vmatpush1.msra.mxu0 %v315
        %337 = vmatprep.subr.mxu0 0.0
        %338 = vmatpush1.msra.mxu0 %v316
        %339 = vmatprep.subr.mxu0 0.0
        %340 = vmatpush1.msra.mxu0 0.0
        %341 = vmatprep.subr.mxu0 0.0
        %342 = vmatpush1.msra.mxu0 0.0
        %343 = vmatprep.subr.mxu0 0.0
        %344 = vmatpush1.msra.mxu0 0.0
        %345 = vmatprep.subr.mxu0 0.0
        %346 = vmatpush1.msra.mxu0 0.0
        %347 = vmatprep.subr.mxu0 0.0
        %348 = vmatpush1.msra.mxu0 0.0
        %349 = vmatprep.subr.mxu0 0.0
        %350 = vmatpush1.msra.mxu0 0.0
        %351 = vmatprep.subr.mxu0 0.0
        %352 = vmatpush1.msra.mxu0 0.0
        %353 = vmatprep.subr.mxu0 0.0
        %354 = vmatpush1.msra.mxu0 0.0
        %355 = vmatprep.subr.mxu0 0.0
        %356 = vmatpush1.msra.mxu0 0.0
        %357 = vmatprep.subr.mxu0 0.0
        %358 = vmatpush1.msra.mxu0 0.0
        %359 = vmatprep.subr.mxu0 0.0
        %360 = vmatpush1.msra.mxu0 0.0
        %361 = vmatprep.subr.mxu0 0.0
        %362 = vmatpush1.msra.mxu0 0.0
        %363 = vmatprep.subr.mxu0 0.0
        %364 = vmatpush1.msra.mxu0 0.0
        %365 = vmatprep.subr.mxu0 0.0
        %366 = vmatpush1.msra.mxu0 0.0
        %367 = vmatprep.subr.mxu0 0.0
        %368 = vmatpush1.msra.mxu0 0.0
        %369 = vmatprep.subr.mxu0 0.0
        %370 = vmatpush1.msra.mxu0 0.0
        %371 = vmatprep.subr.mxu0 0.0
        %372 = vmatpush1.msra.mxu0 0.0
        %373 = vmatprep.subr.mxu0 0.0
        %374 = vmatpush1.msra.mxu0 0.0
        %375 = vmatprep.subr.mxu0 0.0
        %376 = vmatpush1.msra.mxu0 0.0
        %377 = vmatprep.subr.mxu0 0.0
        %378 = vmatpush1.msra.mxu0 0.0
        %379 = vmatprep.subr.mxu0 0.0
        %380 = vmatpush1.msra.mxu0 0.0
        %381 = vmatprep.subr.mxu0 0.0
        %382 = vmatpush1.msra.mxu0 0.0
        %383 = vmatprep.subr.mxu0 0.0
        %384 = vmatpush1.msra.mxu0 0.0
        %385 = vmatprep.subr.mxu0 0.0
        %386 = vmatpush1.msra.mxu0 0.0
        %387 = vmatprep.subr.mxu0 0.0
        %388 = vmatpush1.msra.mxu0 0.0
        %389 = vmatprep.subr.mxu0 0.0
        %390 = vmatpush1.msra.mxu0 0.0
        %391 = vmatprep.subr.mxu0 0.0
        %392 = vmatpush1.msra.mxu0 0.0
        %393 = vmatprep.subr.mxu0 0.0
        %394 = vmatpush1.msra.mxu0 0.0
        %395 = vmatprep.mubr.f32.mxu0 0.0
        %396 = vmatmul.mubr.f32.gmra.mrb[0].mxu0 %v326
        %v397 = vpop.f32.mrb[0].mxu0
        %v398 = vadd.f32 %v322, %v397
        %v399 = vpop.f32.mrb[0].mxu0
        %400 = vmatprep.mubr.f32.mxu0 0.0
        %401 = vmatmul.mubr.f32.gmra.mrb[0].mxu0 %v329
        %v402 = vpop.f32.mrb[0].mxu0
        %v403 = vadd.f32 %v322, %v402
        %v404 = vpop.f32.mrb[0].mxu0
        %405 = vdwg.mxu0
        %v406 = vmax.f32 %v398, 0.0
        %v407 = vmax.f32 %v403, 0.0
        %v408 = vld [vmem:[%s3] sm:$0xff]
        %v409 = vld [vmem:[%s3 + $0x8] sm:$0xff]
        %v410 = vld [vmem:[%s3 + $0x10] sm:$0xff]
        %v411 = vld [vmem:[%s3 + $0x18] sm:$0xff]
        %v412 = vld [vmem:[#allocation2] sm:$0x1]
        %v414 = vlaneseq
        %v415 = vshrl.u32 %v414, 7
        %v416 = vsub.s32 0, %v415
        %v417 = vrot.slane %v412, %v416
        %419 = vmatprep.subr.mxu0 0.0
        %420 = vmatpush1.msra.mxu0 %v408
        %421 = vmatprep.subr.mxu0 0.0
        %422 = vmatpush1.msra.mxu0 %v409
        %423 = vmatprep.subr.mxu0 0.0
        %424 = vmatpush1.msra.mxu0 %v410
        %425 = vmatprep.subr.mxu0 0.0
        %426 = vmatpush1.msra.mxu0 %v411
        %427 = vmatprep.subr.mxu0 0.0
        %428 = vmatpush1.msra.mxu0 0.0
        %429 = vmatprep.subr.mxu0 0.0
        %430 = vmatpush1.msra.mxu0 0.0
        %431 = vmatprep.subr.mxu0 0.0
        %432 = vmatpush1.msra.mxu0 0.0
        %433 = vmatprep.subr.mxu0 0.0
        %434 = vmatpush1.msra.mxu0 0.0
        %435 = vmatprep.subr.mxu0 0.0
        %436 = vmatpush1.msra.mxu0 0.0
        %437 = vmatprep.subr.mxu0 0.0
        %438 = vmatpush1.msra.mxu0 0.0
        %439 = vmatprep.subr.mxu0 0.0
        %440 = vmatpush1.msra.mxu0 0.0
        %441 = vmatprep.subr.mxu0 0.0
        %442 = vmatpush1.msra.mxu0 0.0
        %443 = vmatprep.subr.mxu0 0.0
        %444 = vmatpush1.msra.mxu0 0.0
        %445 = vmatprep.subr.mxu0 0.0
        %446 = vmatpush1.msra.mxu0 0.0
        %447 = vmatprep.subr.mxu0 0.0
        %448 = vmatpush1.msra.mxu0 0.0
        %449 = vmatprep.subr.mxu0 0.0
        %450 = vmatpush1.msra.mxu0 0.0
        %451 = vmatprep.subr.mxu0 0.0
        %452 = vmatpush1.msra.mxu0 0.0
        %453 = vmatprep.subr.mxu0 0.0
        %454 = vmatpush1.msra.mxu0 0.0
        %455 = vmatprep.subr.mxu0 0.0
        %456 = vmatpush1.msra.mxu0 0.0
        %457 = vmatprep.subr.mxu0 0.0
        %458 = vmatpush1.msra.mxu0 0.0
        %459 = vmatprep.subr.mxu0 0.0
        %460 = vmatpush1.msra.mxu0 0.0
        %461 = vmatprep.subr.mxu0 0.0
        %462 = vmatpush1.msra.mxu0 0.0
        %463 = vmatprep.subr.mxu0 0.0
        %464 = vmatpush1.msra.mxu0 0.0
        %465 = vmatprep.subr.mxu0 0.0
        %466 = vmatpush1.msra.mxu0 0.0
        %467 = vmatprep.subr.mxu0 0.0
        %468 = vmatpush1.msra.mxu0 0.0
        %469 = vmatprep.subr.mxu0 0.0
        %470 = vmatpush1.msra.mxu0 0.0
        %471 = vmatprep.subr.mxu0 0.0
        %472 = vmatpush1.msra.mxu0 0.0
        %473 = vmatprep.subr.mxu0 0.0
        %474 = vmatpush1.msra.mxu0 0.0
        %475 = vmatprep.subr.mxu0 0.0
        %476 = vmatpush1.msra.mxu0 0.0
        %477 = vmatprep.subr.mxu0 0.0
        %478 = vmatpush1.msra.mxu0 0.0
        %479 = vmatprep.subr.mxu0 0.0
        %480 = vmatpush1.msra.mxu0 0.0
        %481 = vmatprep.subr.mxu0 0.0
        %482 = vmatpush1.msra.mxu0 0.0
        %483 = vmatprep.mubr.f32.mxu0 0.0
        %484 = vmatmul.mubr.f32.gmra.mrb[0].mxu0 %v326
        %v485 = vpop.f32.mrb[0].mxu0
        %v486 = vadd.f32 %v417, %v485
        %v487 = vpop.f32.mrb[0].mxu0
        %488 = vmatprep.mubr.f32.mxu0 0.0
        %489 = vmatmul.mubr.f32.gmra.mrb[0].mxu0 %v329
        %v490 = vpop.f32.mrb[0].mxu0
        %v491 = vadd.f32 %v417, %v490
        %v492 = vpop.f32.mrb[0].mxu0
        %493 = vdwg.mxu0
        %v494 = vxor.u32 %v486, 2147483648
        %v495 = vxor.u32 %v491, 2147483648
        %v496 = vmul.f32 %v494, 1.442695
        %v497 = vpow.pop %v496
        %v498 = vmul.f32 %v495, 1.442695
        %v499 = vpow.pop %v498
        %v500 = vadd.f32 %v497, 1.0
        %v501 = vadd.f32 %v499, 1.0
        %v502 = vrcp.pop %v500
        %v503 = vmul.f32 1.0, %v502
        %v504 = vrcp.pop %v501
        %v505 = vmul.f32 1.0, %v504
        %v506 = vmul.f32 %v503, %v406
        %v507 = vmul.f32 %v505, %v407
        %v508 = vsub.f32 1.0, %v503
        %v509 = vsub.f32 1.0, %v505
        %v510 = vmul.f32 %v508, %v311
        %v511 = vmul.f32 %v509, %v312
        %v512 = vadd.f32 %v506, %v510
        %v513 = vadd.f32 %v507, %v511
        %s514 = scalar_lea.vmem %s1, 32
        %v515 = vld [vmem:[%s514] sm:$0xff]
        %v516 = vld [vmem:[%s514 + $0x8] sm:$0xff]
        %v517 = vld [vmem:[%s514 + $0x10] sm:$0xff]
        %v518 = vld [vmem:[%s514 + $0x18] sm:$0xff]
        %s519 = scalar_lea.vmem %s2, 1
        %v520 = vld [vmem:[%s519] sm:$0x1]
        %v522 = vlaneseq
        %v523 = vshrl.u32 %v522, 7
        %v524 = vsub.s32 0, %v523
        %v525 = vrot.slane %v520, %v524
        %v528 = vsel %vm324, %v512, 0
        %v531 = vsel %vm324, %v513, 0
        %533 = vmatprep.subr.mxu0 0.0
        %534 = vmatpush1.msra.mxu0 %v515
        %535 = vmatprep.subr.mxu0 0.0
        %536 = vmatpush1.msra.mxu0 %v516
        %537 = vmatprep.subr.mxu0 0.0
        %538 = vmatpush1.msra.mxu0 %v517
        %539 = vmatprep.subr.mxu0 0.0
        %540 = vmatpush1.msra.mxu0 %v518
        %541 = vmatprep.subr.mxu0 0.0
        %542 = vmatpush1.msra.mxu0 0.0
        %543 = vmatprep.subr.mxu0 0.0
        %544 = vmatpush1.msra.mxu0 0.0
        %545 = vmatprep.subr.mxu0 0.0
        %546 = vmatpush1.msra.mxu0 0.0
        %547 = vmatprep.subr.mxu0 0.0
        %548 = vmatpush1.msra.mxu0 0.0
        %549 = vmatprep.subr.mxu0 0.0
        %550 = vmatpush1.msra.mxu0 0.0
        %551 = vmatprep.subr.mxu0 0.0
        %552 = vmatpush1.msra.mxu0 0.0
        %553 = vmatprep.subr.mxu0 0.0
        %554 = vmatpush1.msra.mxu0 0.0
        %555 = vmatprep.subr.mxu0 0.0
        %556 = vmatpush1.msra.mxu0 0.0
        %557 = vmatprep.subr.mxu0 0.0
        %558 = vmatpush1.msra.mxu0 0.0
        %559 = vmatprep.subr.mxu0 0.0
        %560 = vmatpush1.msra.mxu0 0.0
        %561 = vmatprep.subr.mxu0 0.0
        %562 = vmatpush1.msra.mxu0 0.0
        %563 = vmatprep.subr.mxu0 0.0
        %564 = vmatpush1.msra.mxu0 0.0
        %565 = vmatprep.subr.mxu0 0.0
        %566 = vmatpush1.msra.mxu0 0.0
        %567 = vmatprep.subr.mxu0 0.0
        %568 = vmatpush1.msra.mxu0 0.0
        %569 = vmatprep.subr.mxu0 0.0
        %570 = vmatpush1.msra.mxu0 0.0
        %571 = vmatprep.subr.mxu0 0.0
        %572 = vmatpush1.msra.mxu0 0.0
        %573 = vmatprep.subr.mxu0 0.0
        %574 = vmatpush1.msra.mxu0 0.0
        %575 = vmatprep.subr.mxu0 0.0
        %576 = vmatpush1.msra.mxu0 0.0
        %577 = vmatprep.subr.mxu0 0.0
        %578 = vmatpush1.msra.mxu0 0.0
        %579 = vmatprep.subr.mxu0 0.0
        %580 = vmatpush1.msra.mxu0 0.0
        %581 = vmatprep.subr.mxu0 0.0
        %582 = vmatpush1.msra.mxu0 0.0
        %583 = vmatprep.subr.mxu0 0.0
        %584 = vmatpush1.msra.mxu0 0.0
        %585 = vmatprep.subr.mxu0 0.0
        %586 = vmatpush1.msra.mxu0 0.0
        %587 = vmatprep.subr.mxu0 0.0
        %588 = vmatpush1.msra.mxu0 0.0
        %589 = vmatprep.subr.mxu0 0.0
        %590 = vmatpush1.msra.mxu0 0.0
        %591 = vmatprep.subr.mxu0 0.0
        %592 = vmatpush1.msra.mxu0 0.0
        %593 = vmatprep.subr.mxu0 0.0
        %594 = vmatpush1.msra.mxu0 0.0
        %595 = vmatprep.subr.mxu0 0.0
        %596 = vmatpush1.msra.mxu0 0.0
        %597 = vmatprep.mubr.f32.mxu0 0.0
        %598 = vmatmul.mubr.f32.gmra.mrb[0].mxu0 %v528
        %v599 = vpop.f32.mrb[0].mxu0
        %v600 = vadd.f32 %v525, %v599
        %v601 = vpop.f32.mrb[0].mxu0
        %602 = vmatprep.mubr.f32.mxu0 0.0
        %603 = vmatmul.mubr.f32.gmra.mrb[0].mxu0 %v531
        %v604 = vpop.f32.mrb[0].mxu0
        %v605 = vadd.f32 %v525, %v604
        %v606 = vpop.f32.mrb[0].mxu0
        %607 = vdwg.mxu0
        %v608 = vmax.f32 %v600, 0.0
        %v609 = vmax.f32 %v605, 0.0
        %s610 = scalar_lea.vmem %s3, 32
        %v611 = vld [vmem:[%s610] sm:$0xff]
        %v612 = vld [vmem:[%s610 + $0x8] sm:$0xff]
        %v613 = vld [vmem:[%s610 + $0x10] sm:$0xff]
        %v614 = vld [vmem:[%s610 + $0x18] sm:$0xff]
        %s615 = scalar_lea.vmem [#allocation2], 1
        %v616 = vld [vmem:[%s615] sm:$0x1]
        %v618 = vlaneseq
        %v619 = vshrl.u32 %v618, 7
        %v620 = vsub.s32 0, %v619
        %v621 = vrot.slane %v616, %v620
        %623 = vmatprep.subr.mxu0 0.0
        %624 = vmatpush1.msra.mxu0 %v611
        %625 = vmatprep.subr.mxu0 0.0
        %626 = vmatpush1.msra.mxu0 %v612
        %627 = vmatprep.subr.mxu0 0.0
        %628 = vmatpush1.msra.mxu0 %v613
        %629 = vmatprep.subr.mxu0 0.0
        %630 = vmatpush1.msra.mxu0 %v614
        %631 = vmatprep.subr.mxu0 0.0
        %632 = vmatpush1.msra.mxu0 0.0
        %633 = vmatprep.subr.mxu0 0.0
        %634 = vmatpush1.msra.mxu0 0.0
        %635 = vmatprep.subr.mxu0 0.0
        %636 = vmatpush1.msra.mxu0 0.0
        %637 = vmatprep.subr.mxu0 0.0
        %638 = vmatpush1.msra.mxu0 0.0
        %639 = vmatprep.subr.mxu0 0.0
        %640 = vmatpush1.msra.mxu0 0.0
        %641 = vmatprep.subr.mxu0 0.0
        %642 = vmatpush1.msra.mxu0 0.0
        %643 = vmatprep.subr.mxu0 0.0
        %644 = vmatpush1.msra.mxu0 0.0
        %645 = vmatprep.subr.mxu0 0.0
        %646 = vmatpush1.msra.mxu0 0.0
        %647 = vmatprep.subr.mxu0 0.0
        %648 = vmatpush1.msra.mxu0 0.0
        %649 = vmatprep.subr.mxu0 0.0
        %650 = vmatpush1.msra.mxu0 0.0
        %651 = vmatprep.subr.mxu0 0.0
        %652 = vmatpush1.msra.mxu0 0.0
        %653 = vmatprep.subr.mxu0 0.0
        %654 = vmatpush1.msra.mxu0 0.0
        %655 = vmatprep.subr.mxu0 0.0
        %656 = vmatpush1.msra.mxu0 0.0
        %657 = vmatprep.subr.mxu0 0.0
        %658 = vmatpush1.msra.mxu0 0.0
        %659 = vmatprep.subr.mxu0 0.0
        %660 = vmatpush1.msra.mxu0 0.0
        %661 = vmatprep.subr.mxu0 0.0
        %662 = vmatpush1.msra.mxu0 0.0
        %663 = vmatprep.subr.mxu0 0.0
        %664 = vmatpush1.msra.mxu0 0.0
        %665 = vmatprep.subr.mxu0 0.0
        %666 = vmatpush1.msra.mxu0 0.0
        %667 = vmatprep.subr.mxu0 0.0
        %668 = vmatpush1.msra.mxu0 0.0
        %669 = vmatprep.subr.mxu0 0.0
        %670 = vmatpush1.msra.mxu0 0.0
        %671 = vmatprep.subr.mxu0 0.0
        %672 = vmatpush1.msra.mxu0 0.0
        %673 = vmatprep.subr.mxu0 0.0
        %674 = vmatpush1.msra.mxu0 0.0
        %675 = vmatprep.subr.mxu0 0.0
        %676 = vmatpush1.msra.mxu0 0.0
        %677 = vmatprep.subr.mxu0 0.0
        %678 = vmatpush1.msra.mxu0 0.0
        %679 = vmatprep.subr.mxu0 0.0
        %680 = vmatpush1.msra.mxu0 0.0
        %681 = vmatprep.subr.mxu0 0.0
        %682 = vmatpush1.msra.mxu0 0.0
        %683 = vmatprep.subr.mxu0 0.0
        %684 = vmatpush1.msra.mxu0 0.0
        %685 = vmatprep.subr.mxu0 0.0
        %686 = vmatpush1.msra.mxu0 0.0
        %687 = vmatprep.mubr.f32.mxu0 0.0
        %688 = vmatmul.mubr.f32.gmra.mrb[0].mxu0 %v528
        %v689 = vpop.f32.mrb[0].mxu0
        %v690 = vadd.f32 %v621, %v689
        %v691 = vpop.f32.mrb[0].mxu0
        %692 = vmatprep.mubr.f32.mxu0 0.0
        %693 = vmatmul.mubr.f32.gmra.mrb[0].mxu0 %v531
        %v694 = vpop.f32.mrb[0].mxu0
        %v695 = vadd.f32 %v621, %v694
        %v696 = vpop.f32.mrb[0].mxu0
        %697 = vdwg.mxu0
        %v698 = vxor.u32 %v690, 2147483648
        %v699 = vxor.u32 %v695, 2147483648
        %v700 = vmul.f32 %v698, 1.442695
        %v701 = vpow.pop %v700
        %v702 = vmul.f32 %v699, 1.442695
        %v703 = vpow.pop %v702
        %v704 = vadd.f32 %v701, 1.0
        %v705 = vadd.f32 %v703, 1.0
        %v706 = vrcp.pop %v704
        %v707 = vmul.f32 1.0, %v706
        %v708 = vrcp.pop %v705
        %v709 = vmul.f32 1.0, %v708
        %v710 = vmul.f32 %v707, %v608
        %v711 = vmul.f32 %v709, %v609
        %v712 = vsub.f32 1.0, %v707
        %v713 = vsub.f32 1.0, %v709
        %v714 = vmul.f32 %v712, %v512
        %v715 = vmul.f32 %v713, %v513
        %v716 = vadd.f32 %v710, %v714
        %v717 = vadd.f32 %v711, %v715
        %v718 = vld [vmem:[%s5] sm:$0xff]
        %v719 = vld [vmem:[%s5 + $0x8] sm:$0xff]
        %v720 = vld [vmem:[%s5 + $0x10] sm:$0xff]
        %v721 = vld [vmem:[%s5 + $0x18] sm:$0xff]
        %v722 = vld [vmem:[%s5 + $0x20] sm:$0xff]
        %v723 = vld [vmem:[%s5 + $0x28] sm:$0xff]
        %v724 = vld [vmem:[%s5 + $0x30] sm:$0xff]
        %v725 = vld [vmem:[%s5 + $0x38] sm:$0xff]
        %v727 = vsel %vm324, %v716, 0
        %v730 = vsel %vm324, %v717, 0
        %732 = vmatprep.subr.mxu0 %v719
        %733 = vmatpush1.msra.mxu0 %v718
        %734 = vmatprep.subr.mxu0 %v721
        %735 = vmatpush1.msra.mxu0 %v720
        %736 = vmatprep.subr.mxu0 %v723
        %737 = vmatpush1.msra.mxu0 %v722
        %738 = vmatprep.subr.mxu0 %v725
        %739 = vmatpush1.msra.mxu0 %v724
        %740 = vmatprep.subr.mxu0 0.0
        %741 = vmatpush1.msra.mxu0 0.0
        %742 = vmatprep.subr.mxu0 0.0
        %743 = vmatpush1.msra.mxu0 0.0
        %744 = vmatprep.subr.mxu0 0.0
        %745 = vmatpush1.msra.mxu0 0.0
        %746 = vmatprep.subr.mxu0 0.0
        %747 = vmatpush1.msra.mxu0 0.0
        %748 = vmatprep.subr.mxu0 0.0
        %749 = vmatpush1.msra.mxu0 0.0
        %750 = vmatprep.subr.mxu0 0.0
        %751 = vmatpush1.msra.mxu0 0.0
        %752 = vmatprep.subr.mxu0 0.0
        %753 = vmatpush1.msra.mxu0 0.0
        %754 = vmatprep.subr.mxu0 0.0
        %755 = vmatpush1.msra.mxu0 0.0
        %756 = vmatprep.subr.mxu0 0.0
        %757 = vmatpush1.msra.mxu0 0.0
        %758 = vmatprep.subr.mxu0 0.0
        %759 = vmatpush1.msra.mxu0 0.0
        %760 = vmatprep.subr.mxu0 0.0
        %761 = vmatpush1.msra.mxu0 0.0
        %762 = vmatprep.subr.mxu0 0.0
        %763 = vmatpush1.msra.mxu0 0.0
        %764 = vmatprep.subr.mxu0 0.0
        %765 = vmatpush1.msra.mxu0 0.0
        %766 = vmatprep.subr.mxu0 0.0
        %767 = vmatpush1.msra.mxu0 0.0
        %768 = vmatprep.subr.mxu0 0.0
        %769 = vmatpush1.msra.mxu0 0.0
        %770 = vmatprep.subr.mxu0 0.0
        %771 = vmatpush1.msra.mxu0 0.0
        %772 = vmatprep.subr.mxu0 0.0
        %773 = vmatpush1.msra.mxu0 0.0
        %774 = vmatprep.subr.mxu0 0.0
        %775 = vmatpush1.msra.mxu0 0.0
        %776 = vmatprep.subr.mxu0 0.0
        %777 = vmatpush1.msra.mxu0 0.0
        %778 = vmatprep.subr.mxu0 0.0
        %779 = vmatpush1.msra.mxu0 0.0
        %780 = vmatprep.subr.mxu0 0.0
        %781 = vmatpush1.msra.mxu0 0.0
        %782 = vmatprep.subr.mxu0 0.0
        %783 = vmatpush1.msra.mxu0 0.0
        %784 = vmatprep.subr.mxu0 0.0
        %785 = vmatpush1.msra.mxu0 0.0
        %786 = vmatprep.subr.mxu0 0.0
        %787 = vmatpush1.msra.mxu0 0.0
        %788 = vmatprep.subr.mxu0 0.0
        %789 = vmatpush1.msra.mxu0 0.0
        %790 = vmatprep.subr.mxu0 0.0
        %791 = vmatpush1.msra.mxu0 0.0
        %792 = vmatprep.subr.mxu0 0.0
        %793 = vmatpush1.msra.mxu0 0.0
        %794 = vmatprep.subr.mxu0 0.0
        %795 = vmatpush1.msra.mxu0 0.0
        %796 = vmatprep.mubr.f32.mxu0 0.0
        %797 = vmatmul.mubr.f32.gmra.mrb[0].mxu0 %v727
        %v798 = vpop.f32.mrb[0].mxu0
        %v799 = vadd.f32 0.0, %v798
        %v800 = vpop.f32.mrb[0].mxu0
        %v801 = vadd.f32 0.0, %v800
        %802 = vmatprep.mubr.f32.mxu0 0.0
        %803 = vmatmul.mubr.f32.gmra.mrb[0].mxu0 %v730
        %v804 = vpop.f32.mrb[0].mxu0
        %v805 = vadd.f32 0.0, %v804
        %v806 = vpop.f32.mrb[0].mxu0
        %v807 = vadd.f32 0.0, %v806
        %808 = vdwg.mxu0
        %809 = vst [vmem:[%s303] sm:$0xff] %v799
        %810 = vst [vmem:[%s303 + $0x8] sm:$0xff] %v805
        %811 = vst [vmem:[%s309] sm:$0xff] %v801
        %812 = vst [vmem:[%s309 + $0x8] sm:$0xff] %v807
        %s813 = smul.u32 2, %s20
        %p814 = scmp.lt.s32.totalorder %s813, 3
        %s815 = scalar_select %p814, %s813, 3
        %s816 = smul.addr %s815, 8
        %s817 = scalar_lea.vmem %s6, %s816
        %s818 = smul.u32 2, %s20
        %p819 = scmp.lt.s32.totalorder %s818, 3
        %s820 = scalar_select %p819, %s818, 3
        %s821 = smul.addr %s820, 8
        %s822 = scalar_lea.vmem %s7, %s821
        // Predicated region
        $region49: #{contextual_embedding.2} parent=43 // pred_check
          %p823 = pneg %p169
        $region50: #{contextual_embedding.2} parent=43 // pred_check_branch
          %825 = sbr.rel (%p823) target = $region52
        $region51: #{contextual_embedding.2} parent=43 // pred_region
          %s826 = smul.u32 2, %s20
        $region52: #{contextual_embedding.2} parent=43 // pred_fallthru
          _
        // Predicated region
        $region53: #{contextual_embedding.2} parent=43 // pred_check
          %p827 = pneg %p195
        $region54: #{contextual_embedding.2} parent=43 // pred_check_branch
          %829 = sbr.rel (%p827) target = $region56
        $region55: #{contextual_embedding.2} parent=43 // pred_region
          %s830 = smul.u32 2, %s20
        $region56: #{contextual_embedding.2} parent=43 // pred_fallthru
          _
      $region44: #{contextual_embedding.2} parent=5 // pred_fallthru
        _
      %p831 = scmp.le.s32.totalorder 2, %s15
      // Predicated region
      $region57: #{contextual_embedding.2} parent=5 // pred_check
        %p832 = pneg %p831
      $region58: #{contextual_embedding.2} parent=5 // pred_check_branch
        %834 = sbr.rel (%p832) target = $region60
      $region59: #{contextual_embedding.2} parent=5 // pred_region
        %s835 = ssub.s32 %s15, 2
        // Predicated region
        $region61: #{contextual_embedding.2} parent=59 // pred_check
          %p836 = pneg %p175
        $region62: #{contextual_embedding.2} parent=59 // pred_check_branch
          %838 = sbr.rel (%p836) target = $region64
        $region63: #{contextual_embedding.2} parent=59 // pred_region
          %s839 = smul.u32 2, %s21
          %p840 = scmp.lt.s32.totalorder %s839, 3
          %s841 = scalar_select %p840, %s839, 3
          %s842 = smul.addr %s841, 8
          %s843 = scalar_lea.vmem %s6, %s842
        $region64: #{contextual_embedding.2} parent=59 // pred_fallthru
          _
        // Predicated region
        $region65: #{contextual_embedding.2} parent=59 // pred_check
          %p844 = pneg %p201
        $region66: #{contextual_embedding.2} parent=59 // pred_check_branch
          %846 = sbr.rel (%p844) target = $region68
        $region67: #{contextual_embedding.2} parent=59 // pred_region
          %s847 = smul.u32 2, %s21
          %p848 = scmp.lt.s32.totalorder %s847, 3
          %s849 = scalar_select %p848, %s847, 3
          %s850 = smul.addr %s849, 8
          %s851 = scalar_lea.vmem %s7, %s850
        $region68: #{contextual_embedding.2} parent=59 // pred_fallthru
          _
      $region60: #{contextual_embedding.2} parent=5 // pred_fallthru
        _
    $region6: #{contextual_embedding.2} parent=1 // loop_footer
      %s19 = sadd.s32 1, %s15
    $region7: #{contextual_embedding.2} parent=1 // loop_footer_branch
      %14 = sbr.rel target = $region3
    $region8: #{contextual_embedding.2} parent=1 // loop_exit
      _
    %852 = vsyncpa [#allocation3], 1
    %s853 = scalar_lea.sflag [#allocation3], 1
    %854 = vsyncpa %s853, 1

// kernel: contextual_embedding.3
$region0: #{contextual_embedding.3}
  #allocation0 [shape = 'u32[]', space=smem, size = 0x4, offset = 0x4, fixed_abs, tag = 'smem constant byte address 0x4 - core index']
  #allocation1 [shape = 'u32[144,128]{1,0:T(1,128)}', space=vmem, size = 0x12000, scoped, tag = 'internal scratch']
  #allocation2 [shape = 'f32[2,64]{1,0:T(2,128)}', space=vmem, size = 0x400, scoped, tag = 'scratch operand']
  #allocation3 [shape = 'f32[2,64]{1,0:T(2,128)}', space=vmem, size = 0x400, scoped, tag = 'scratch operand']
  %s0 = inlined_call_operand.vmem [shape: f32[2,16,128], index: 0, kind: input, shape index: {}]
  %s1 = inlined_call_operand.vmem [shape: f32[2,16,128], index: 1, kind: input, shape index: {}]
  %s2 = inlined_call_operand.vmem [shape: f32[64,256], index: 2, kind: input, shape index: {}]
  %s3 = inlined_call_operand.vmem [shape: f32[1,256], index: 3, kind: input, shape index: {}]
  %s4 = inlined_call_operand.vmem [shape: f32[2,16,32], index: 4, kind: output, shape index: {0}]
  %s5 = inlined_call_operand.vmem [shape: f32[2,16,32], index: 5, kind: output, shape index: {1}]
  %6 = xla_tuple %s4, %s5
  %s7 = sld [smem:[#allocation0]]
  $region205: #{contextual_embedding.3} parent=0
    _
  %s9 = ssub.s32 1, %s7
  %s10 = scalar_select 0, %s9, %s7
  $region1: #{contextual_embedding.3} parent=0
    #allocation4 [shape = 'u8[16384]{0}', space=vmem, size = 0x4000, scoped, tag = 'input window, operand 0']
    #allocation5 [shape = 'u8[16384]{0}', space=vmem, size = 0x4000, scoped, tag = 'input window, operand 1']
    #allocation6 [shape = 'u8[16384]{0}', space=vmem, size = 0x4000, scoped, tag = 'output window, operand 0']
    #allocation7 [shape = 'u8[16384]{0}', space=vmem, size = 0x4000, scoped, tag = 'output window, operand 1']
    loop: start=0, step=1, limit=4
    $region2: #{contextual_embedding.3} parent=1 // loop_pre_header
      _
    $region3: #{contextual_embedding.3} parent=1 // loop_header
      %s12 = sphi 0, %s16
      %p13 = scmp.ge.s32.totalorder %s12, 4
      %s22 = sphi 0, %s24
      %s25 = sphi 0, %s22
      %s26 = sphi 0, %s25
      %s42 = sphi 0, %s26
      %s50 = sphi 0, %s52
      %s53 = sphi 0, %s50
      %s54 = sphi 0, %s53
      %s70 = sphi 0, %s54
      %s74 = sphi 0, %s74
      %s76 = sphi 0, %s74
      %s77 = sphi 0, %s76
      %s91 = sphi 0, %s77
      %s95 = sphi 0, %s95
      %s97 = sphi 0, %s95
      %s98 = sphi 0, %s97
      %s112 = sphi 0, %s98
      %s118 = sphi 0, %s120
      %s121 = sphi 0, %s118
      %s122 = sphi 0, %s121
      %s138 = sphi 0, %s122
      %s146 = sphi 0, %s148
      %s149 = sphi 0, %s146
      %s150 = sphi 0, %s149
      %s166 = sphi 0, %s150
    $region4: #{contextual_embedding.3} parent=1 // loop_header_branch
      %15 = sbr.rel (%p13) target = $region8
    $region5: #{contextual_embedding.3} parent=1 // loop_body
      %s17 = ssub.s32 %s12, 1
      %s18 = ssub.s32 %s12, 2
      %s19 = sadd.s32 %s12, 1
      %s20 = ssub.s32 %s12, %s19
      %p21 = scmp.eq.s32.totalorder %s20, 0
      %s23 = sadd.s32 %s22, 1
      %s24 = scalar_select %p21, %s22, %s23
      %p27 = pneg %p21
      %p28 = scmp.eq.s32.totalorder %s12, 1
      %p29 = por %p27, %p28
      %p30 = scmp.ne.s32.totalorder %s22, %s25
      %p31 = scmp.eq.s32.totalorder %s12, 0
      %p32 = por %p30, %p31
      %p33 = scmp.ne.s32.totalorder %s22, %s25
      %p34 = scmp.eq.s32.totalorder %s17, 1
      %p35 = por %p33, %p34
      %p36 = scmp.ne.s32.totalorder %s25, %s26
      %p37 = scmp.eq.s32.totalorder %s17, 0
      %p38 = por %p36, %p37
      %p39 = scmp.ne.s32.totalorder %s25, %s26
      %p40 = scmp.eq.s32.totalorder %s18, 1
      %p41 = por %p39, %p40
      %p43 = scmp.ne.s32.totalorder %s26, %s42
      %p44 = scmp.eq.s32.totalorder %s18, 0
      %p45 = por %p43, %p44
      %s46 = ssub.s32 1, %s12
      %s47 = ssub.s32 1, %s19
      %s48 = ssub.s32 %s46, %s47
      %p49 = scmp.eq.s32.totalorder %s48, 0
      %s51 = sadd.s32 %s50, 1
      %s52 = scalar_select %p49, %s50, %s51
      %p55 = pneg %p49
      %p56 = scmp.eq.s32.totalorder %s12, 1
      %p57 = por %p55, %p56
      %p58 = scmp.ne.s32.totalorder %s50, %s53
      %p59 = scmp.eq.s32.totalorder %s12, 0
      %p60 = por %p58, %p59
      %p61 = scmp.ne.s32.totalorder %s50, %s53
      %p62 = scmp.eq.s32.totalorder %s17, 1
      %p63 = por %p61, %p62
      %p64 = scmp.ne.s32.totalorder %s53, %s54
      %p65 = scmp.eq.s32.totalorder %s17, 0
      %p66 = por %p64, %p65
      %p67 = scmp.ne.s32.totalorder %s53, %s54
      %p68 = scmp.eq.s32.totalorder %s18, 1
      %p69 = por %p67, %p68
      %p71 = scmp.ne.s32.totalorder %s54, %s70
      %p72 = scmp.eq.s32.totalorder %s18, 0
      %p73 = por %p71, %p72
      %s75 = sadd.s32 %s74, 1
      %p78 = scmp.eq.s32.totalorder %s12, 1
      %p79 = scmp.ne.s32.totalorder %s74, %s76
      %p80 = scmp.eq.s32.totalorder %s12, 0
      %p81 = por %p79, %p80
      %p82 = scmp.ne.s32.totalorder %s74, %s76
      %p83 = scmp.eq.s32.totalorder %s17, 1
      %p84 = por %p82, %p83
      %p85 = scmp.ne.s32.totalorder %s76, %s77
      %p86 = scmp.eq.s32.totalorder %s17, 0
      %p87 = por %p85, %p86
      %p88 = scmp.ne.s32.totalorder %s76, %s77
      %p89 = scmp.eq.s32.totalorder %s18, 1
      %p90 = por %p88, %p89
      %p92 = scmp.ne.s32.totalorder %s77, %s91
      %p93 = scmp.eq.s32.totalorder %s18, 0
      %p94 = por %p92, %p93
      %s96 = sadd.s32 %s95, 1
      %p99 = scmp.eq.s32.totalorder %s12, 1
      %p100 = scmp.ne.s32.totalorder %s95, %s97
      %p101 = scmp.eq.s32.totalorder %s12, 0
      %p102 = por %p100, %p101
      %p103 = scmp.ne.s32.totalorder %s95, %s97
      %p104 = scmp.eq.s32.totalorder %s17, 1
      %p105 = por %p103, %p104
      %p106 = scmp.ne.s32.totalorder %s97, %s98
      %p107 = scmp.eq.s32.totalorder %s17, 0
      %p108 = por %p106, %p107
      %p109 = scmp.ne.s32.totalorder %s97, %s98
      %p110 = scmp.eq.s32.totalorder %s18, 1
      %p111 = por %p109, %p110
      %p113 = scmp.ne.s32.totalorder %s98, %s112
      %p114 = scmp.eq.s32.totalorder %s18, 0
      %p115 = por %p113, %p114
      %s116 = ssub.s32 %s12, %s19
      %p117 = scmp.eq.s32.totalorder %s116, 0
      %s119 = sadd.s32 %s118, 1
      %s120 = scalar_select %p117, %s118, %s119
      %p123 = pneg %p117
      %p124 = scmp.eq.s32.totalorder %s12, 1
      %p125 = por %p123, %p124
      %p126 = scmp.ne.s32.totalorder %s118, %s121
      %p127 = scmp.eq.s32.totalorder %s12, 0
      %p128 = por %p126, %p127
      %p129 = scmp.ne.s32.totalorder %s118, %s121
      %p130 = scmp.eq.s32.totalorder %s17, 1
      %p131 = por %p129, %p130
      %p132 = scmp.ne.s32.totalorder %s121, %s122
      %p133 = scmp.eq.s32.totalorder %s17, 0
      %p134 = por %p132, %p133
      %p135 = scmp.ne.s32.totalorder %s121, %s122
      %p136 = scmp.eq.s32.totalorder %s18, 1
      %p137 = por %p135, %p136
      %p139 = scmp.ne.s32.totalorder %s122, %s138
      %p140 = scmp.eq.s32.totalorder %s18, 0
      %p141 = por %p139, %p140
      %s142 = ssub.s32 1, %s12
      %s143 = ssub.s32 1, %s19
      %s144 = ssub.s32 %s142, %s143
      %p145 = scmp.eq.s32.totalorder %s144, 0
      %s147 = sadd.s32 %s146, 1
      %s148 = scalar_select %p145, %s146, %s147
      %p151 = pneg %p145
      %p152 = scmp.eq.s32.totalorder %s12, 1
      %p153 = por %p151, %p152
      %p154 = scmp.ne.s32.totalorder %s146, %s149
      %p155 = scmp.eq.s32.totalorder %s12, 0
      %p156 = por %p154, %p155
      %p157 = scmp.ne.s32.totalorder %s146, %s149
      %p158 = scmp.eq.s32.totalorder %s17, 1
      %p159 = por %p157, %p158
      %p160 = scmp.ne.s32.totalorder %s149, %s150
      %p161 = scmp.eq.s32.totalorder %s17, 0
      %p162 = por %p160, %p161
      %p163 = scmp.ne.s32.totalorder %s149, %s150
      %p164 = scmp.eq.s32.totalorder %s18, 1
      %p165 = por %p163, %p164
      %p167 = scmp.ne.s32.totalorder %s150, %s166
      %p168 = scmp.eq.s32.totalorder %s18, 0
      %p169 = por %p167, %p168
      %p170 = scmp.le.s32.totalorder 1, %s12
      %p171 = scmp.lt.s32.totalorder %s12, 3
      %p172 = pnand %p170, %p171
      %p173 = pneg %p172
      // Predicated region
      $region9: #{contextual_embedding.3} parent=5 // pred_check
        _
      $region10: #{contextual_embedding.3} parent=5 // pred_check_branch
        %175 = sbr.rel (%p172) target = $region12
      $region11: #{contextual_embedding.3} parent=5 // pred_region
        %s176 = ssub.s32 %s12, 1
        // Predicated region
        $region13: #{contextual_embedding.3} parent=11 // pred_check
          %p177 = pneg %p87
        $region14: #{contextual_embedding.3} parent=11 // pred_check_branch
          %179 = sbr.rel (%p177) target = $region16
        $region15: #{contextual_embedding.3} parent=11 // pred_region
          _
        $region16: #{contextual_embedding.3} parent=11 // pred_fallthru
          _
        // Predicated region
        $region17: #{contextual_embedding.3} parent=11 // pred_check
          %p180 = pneg %p108
        $region18: #{contextual_embedding.3} parent=11 // pred_check_branch
          %182 = sbr.rel (%p180) target = $region20
        $region19: #{contextual_embedding.3} parent=11 // pred_region
          _
        $region20: #{contextual_embedding.3} parent=11 // pred_fallthru
          _
      $region12: #{contextual_embedding.3} parent=5 // pred_fallthru
        _
      %p183 = scmp.lt.s32.totalorder %s12, 2
      // Predicated region
      $region21: #{contextual_embedding.3} parent=5 // pred_check
        %p184 = pneg %p183
      $region22: #{contextual_embedding.3} parent=5 // pred_check_branch
        %186 = sbr.rel (%p184) target = $region24
      $region23: #{contextual_embedding.3} parent=5 // pred_region
        // Predicated region
        $region25: #{contextual_embedding.3} parent=23 // pred_check
          %p187 = pneg %p32
        $region26: #{contextual_embedding.3} parent=23 // pred_check_branch
          %189 = sbr.rel (%p187) target = $region28
        $region27: #{contextual_embedding.3} parent=23 // pred_region
          %s190 = sand.u32 %s22, 1
          %s191 = sand.u32 %s22, 1
          %s192 = smul.addr %s191, 16
          %s193 = scalar_lea.vmem [#allocation4], %s192
          %s194 = smul.addr %s12, 8
          %s195 = scalar_lea.vmem %s0, %s194
          // Predicated region
          $region29: #{contextual_embedding.3} parent=27 // pred_check
            _
          $region30: #{contextual_embedding.3} parent=27 // pred_check_branch
            %197 = sbr.rel (0) target = $region32
          $region31: #{contextual_embedding.3} parent=27 // pred_region
            // Predicated region
            $region33: #{contextual_embedding.3} parent=31 // pred_check
              _
            $region34: #{contextual_embedding.3} parent=31 // pred_check_branch
              %199 = sbr.rel (0) target = $region36
            $region35: #{contextual_embedding.3} parent=31 // pred_region
              // Predicated region
              $region48: #{contextual_embedding.3} parent=35 // pred_check
                _
              $region49: #{contextual_embedding.3} parent=35 // pred_check_branch
                %216 = sbr.rel (0) target = $region51
              $region50: #{contextual_embedding.3} parent=35 // pred_region
                loop: start=0, step=1, limit=1
                $region52: #{contextual_embedding.3} parent=50 // loop_pre_header
                  _
                $region53: #{contextual_embedding.3} parent=50 // loop_header
                  %s218 = sphi 0, %s222
                  %p219 = scmp.ge.s32.totalorder %s218, 1
                  %s223 = sphi %s195, %s195
                  %s224 = sphi %s193, %s193
                $region54: #{contextual_embedding.3} parent=50 // loop_header_branch
                  %221 = sbr.rel (%p219) target = $region58
                $region55: #{contextual_embedding.3} parent=50 // loop_body
                  %v225 = vld [vmem:[%s223] sm:$0xff]
                  %226 = vst [vmem:[%s224] sm:$0xff] %v225
                  %v227 = vld [vmem:[%s223 + $0x10] sm:$0xff]
                  %228 = vst [vmem:[%s224 + $0x8] sm:$0xff] %v227
                $region56: #{contextual_embedding.3} parent=50 // loop_footer
                  %s222 = sadd.s32 1, %s218
                $region57: #{contextual_embedding.3} parent=50 // loop_footer_branch
                  %217 = sbr.rel target = $region53
                $region58: #{contextual_embedding.3} parent=50 // loop_exit
                  _
              $region51: #{contextual_embedding.3} parent=35 // pred_fallthru
                _
              // Predicated region
              $region59: #{contextual_embedding.3} parent=35 // pred_check
                _
              $region60: #{contextual_embedding.3} parent=35 // pred_check_branch
                %230 = sbr.rel target = $region62
              $region61: #{contextual_embedding.3} parent=35 // pred_region
                _
              $region62: #{contextual_embedding.3} parent=35 // pred_fallthru
                _
            $region36: #{contextual_embedding.3} parent=31 // pred_fallthru
              _
            // Predicated region
            $region37: #{contextual_embedding.3} parent=31 // pred_check
              _
            $region38: #{contextual_embedding.3} parent=31 // pred_check_branch
              %201 = sbr.rel target = $region40
            $region39: #{contextual_embedding.3} parent=31 // pred_region
              loop: start=0, step=1, limit=1
              $region41: #{contextual_embedding.3} parent=39 // loop_pre_header
                _
              $region42: #{contextual_embedding.3} parent=39 // loop_header
                %s204 = sphi 0, %s208
                %p205 = scmp.ge.s32.totalorder %s204, 1
                %s209 = sphi %s195, %s195
                %s210 = sphi %s193, %s193
              $region43: #{contextual_embedding.3} parent=39 // loop_header_branch
                %207 = sbr.rel (%p205) target = $region47
              $region44: #{contextual_embedding.3} parent=39 // loop_body
                %v211 = vld [vmem:[%s209] sm:$0xff]
                %212 = vst [vmem:[%s210] sm:$0xff] %v211
                %v213 = vld [vmem:[%s209 + $0x10] sm:$0xff]
                %214 = vst [vmem:[%s210 + $0x8] sm:$0xff] %v213
              $region45: #{contextual_embedding.3} parent=39 // loop_footer
                %s208 = sadd.s32 1, %s204
              $region46: #{contextual_embedding.3} parent=39 // loop_footer_branch
                %203 = sbr.rel target = $region42
              $region47: #{contextual_embedding.3} parent=39 // loop_exit
                _
            $region40: #{contextual_embedding.3} parent=31 // pred_fallthru
              _
          $region32: #{contextual_embedding.3} parent=27 // pred_fallthru
            _
          %231 = vnop
        $region28: #{contextual_embedding.3} parent=23 // pred_fallthru
          _
        // Predicated region
        $region63: #{contextual_embedding.3} parent=23 // pred_check
          %p232 = pneg %p60
        $region64: #{contextual_embedding.3} parent=23 // pred_check_branch
          %234 = sbr.rel (%p232) target = $region66
        $region65: #{contextual_embedding.3} parent=23 // pred_region
          %s235 = sand.u32 %s50, 1
          %s236 = sand.u32 %s50, 1
          %s237 = smul.addr %s236, 16
          %s238 = scalar_lea.vmem [#allocation5], %s237
          %s239 = ssub.s32 1, %s12
          %s240 = smul.addr %s239, 8
          %s241 = scalar_lea.vmem %s1, %s240
          // Predicated region
          $region67: #{contextual_embedding.3} parent=65 // pred_check
            _
          $region68: #{contextual_embedding.3} parent=65 // pred_check_branch
            %243 = sbr.rel (0) target = $region70
          $region69: #{contextual_embedding.3} parent=65 // pred_region
            // Predicated region
            $region71: #{contextual_embedding.3} parent=69 // pred_check
              _
            $region72: #{contextual_embedding.3} parent=69 // pred_check_branch
              %245 = sbr.rel (0) target = $region74
            $region73: #{contextual_embedding.3} parent=69 // pred_region
              // Predicated region
              $region86: #{contextual_embedding.3} parent=73 // pred_check
                _
              $region87: #{contextual_embedding.3} parent=73 // pred_check_branch
                %262 = sbr.rel (0) target = $region89
              $region88: #{contextual_embedding.3} parent=73 // pred_region
                loop: start=0, step=1, limit=1
                $region90: #{contextual_embedding.3} parent=88 // loop_pre_header
                  _
                $region91: #{contextual_embedding.3} parent=88 // loop_header
                  %s264 = sphi 0, %s268
                  %p265 = scmp.ge.s32.totalorder %s264, 1
                  %s269 = sphi %s241, %s241
                  %s270 = sphi %s238, %s238
                $region92: #{contextual_embedding.3} parent=88 // loop_header_branch
                  %267 = sbr.rel (%p265) target = $region96
                $region93: #{contextual_embedding.3} parent=88 // loop_body
                  %v271 = vld [vmem:[%s269] sm:$0xff]
                  %272 = vst [vmem:[%s270] sm:$0xff] %v271
                  %v273 = vld [vmem:[%s269 + $0x10] sm:$0xff]
                  %274 = vst [vmem:[%s270 + $0x8] sm:$0xff] %v273
                $region94: #{contextual_embedding.3} parent=88 // loop_footer
                  %s268 = sadd.s32 1, %s264
                $region95: #{contextual_embedding.3} parent=88 // loop_footer_branch
                  %263 = sbr.rel target = $region91
                $region96: #{contextual_embedding.3} parent=88 // loop_exit
                  _
              $region89: #{contextual_embedding.3} parent=73 // pred_fallthru
                _
              // Predicated region
              $region97: #{contextual_embedding.3} parent=73 // pred_check
                _
              $region98: #{contextual_embedding.3} parent=73 // pred_check_branch
                %276 = sbr.rel target = $region100
              $region99: #{contextual_embedding.3} parent=73 // pred_region
                _
              $region100: #{contextual_embedding.3} parent=73 // pred_fallthru
                _
            $region74: #{contextual_embedding.3} parent=69 // pred_fallthru
              _
            // Predicated region
            $region75: #{contextual_embedding.3} parent=69 // pred_check
              _
            $region76: #{contextual_embedding.3} parent=69 // pred_check_branch
              %247 = sbr.rel target = $region78
            $region77: #{contextual_embedding.3} parent=69 // pred_region
              loop: start=0, step=1, limit=1
              $region79: #{contextual_embedding.3} parent=77 // loop_pre_header
                _
              $region80: #{contextual_embedding.3} parent=77 // loop_header
                %s250 = sphi 0, %s254
                %p251 = scmp.ge.s32.totalorder %s250, 1
                %s255 = sphi %s241, %s241
                %s256 = sphi %s238, %s238
              $region81: #{contextual_embedding.3} parent=77 // loop_header_branch
                %253 = sbr.rel (%p251) target = $region85
              $region82: #{contextual_embedding.3} parent=77 // loop_body
                %v257 = vld [vmem:[%s255] sm:$0xff]
                %258 = vst [vmem:[%s256] sm:$0xff] %v257
                %v259 = vld [vmem:[%s255 + $0x10] sm:$0xff]
                %260 = vst [vmem:[%s256 + $0x8] sm:$0xff] %v259
              $region83: #{contextual_embedding.3} parent=77 // loop_footer
                %s254 = sadd.s32 1, %s250
              $region84: #{contextual_embedding.3} parent=77 // loop_footer_branch
                %249 = sbr.rel target = $region80
              $region85: #{contextual_embedding.3} parent=77 // loop_exit
                _
            $region78: #{contextual_embedding.3} parent=69 // pred_fallthru
              _
          $region70: #{contextual_embedding.3} parent=65 // pred_fallthru
            _
          %277 = vnop
        $region66: #{contextual_embedding.3} parent=23 // pred_fallthru
          _
      $region24: #{contextual_embedding.3} parent=5 // pred_fallthru
        _
      %p278 = scmp.le.s32.totalorder 1, %s12
      %p279 = scmp.lt.s32.totalorder %s12, 3
      %p280 = pnand %p278, %p279
      %p281 = pneg %p280
      // Predicated region
      $region101: #{contextual_embedding.3} parent=5 // pred_check
        _
      $region102: #{contextual_embedding.3} parent=5 // pred_check_branch
        %283 = sbr.rel (%p280) target = $region104
      $region103: #{contextual_embedding.3} parent=5 // pred_region
        %s284 = ssub.s32 %s12, 1
        %s285 = sand.u32 %s25, 1
        %s286 = sand.u32 %s25, 1
        %s287 = smul.addr %s286, 16
        %s288 = scalar_lea.vmem [#allocation4], %s287
        // Predicated region
        $region105: #{contextual_embedding.3} parent=103 // pred_check
          %p289 = pneg %p38
        $region106: #{contextual_embedding.3} parent=103 // pred_check_branch
          %291 = sbr.rel (%p289) target = $region108
        $region107: #{contextual_embedding.3} parent=103 // pred_region
          _
        $region108: #{contextual_embedding.3} parent=103 // pred_fallthru
          _
        %s292 = sand.u32 %s53, 1
        %s293 = sand.u32 %s53, 1
        %s294 = smul.addr %s293, 16
        %s295 = scalar_lea.vmem [#allocation5], %s294
        // Predicated region
        $region109: #{contextual_embedding.3} parent=103 // pred_check
          %p296 = pneg %p66
        $region110: #{contextual_embedding.3} parent=103 // pred_check_branch
          %298 = sbr.rel (%p296) target = $region112
        $region111: #{contextual_embedding.3} parent=103 // pred_region
          _
        $region112: #{contextual_embedding.3} parent=103 // pred_fallthru
          _
        %s299 = sand.u32 %s25, 1
        %s300 = sand.u32 %s25, 1
        %s301 = smul.addr %s300, 16
        %s302 = scalar_lea.vmem [#allocation4], %s301
        %p303 = pneg %p38
        %p304 = pneg %p35
        %s305 = sand.u32 %s53, 1
        %s306 = sand.u32 %s53, 1
        %s307 = smul.addr %s306, 16
        %s308 = scalar_lea.vmem [#allocation5], %s307
        %p309 = pneg %p66
        %p310 = pneg %p63
        %p311 = pneg %p87
        %p312 = pneg %p84
        %p313 = pneg %p108
        %p314 = pneg %p105
        %p315 = pneg %p134
        %p316 = pneg %p131
        %s317 = sand.u32 %s121, 1
        %s318 = sand.u32 %s121, 1
        %s319 = smul.addr %s318, 16
        %s320 = scalar_lea.vmem [#allocation6], %s319
        %p321 = pneg %p162
        %p322 = pneg %p159
        %s323 = sand.u32 %s149, 1
        %s324 = sand.u32 %s149, 1
        %s325 = smul.addr %s324, 16
        %s326 = scalar_lea.vmem [#allocation7], %s325
        %s327 = ssub.s32 1, %s17
        %s328 = ssub.s32 1, %s17
        %p329 = scmp.eq.s32.totalorder %s17, 0
        // Predicated region
        $region113: #{contextual_embedding.3} parent=103 // pred_check
          %p330 = pneg %p329
        $region114: #{contextual_embedding.3} parent=103 // pred_check_branch
          %332 = sbr.rel (%p330) target = $region116
        $region115: #{contextual_embedding.3} parent=103 // pred_region
          %vm333 = vcmask 517120
          %334 = vst.msk [vmem:[#allocation2] sm:$0x3] %vm333, 0.0
          %335 = vst.msk [vmem:[#allocation3] sm:$0x3] %vm333, 0.0
        $region116: #{contextual_embedding.3} parent=103 // pred_fallthru
          _
        %v336 = vld [vmem:[#allocation2] sm:$0x3]
        %v337 = vld [vmem:[#allocation3] sm:$0x3]
        %v338 = vld [vmem:[%s2] sm:$0xff]
        %v339 = vld [vmem:[%s2 + $0x8] sm:$0xff]
        %v340 = vld [vmem:[%s2 + $0x10] sm:$0xff]
        %v341 = vld [vmem:[%s2 + $0x18] sm:$0xff]
        %v342 = vld [vmem:[%s2 + $0x20] sm:$0xff]
        %v343 = vld [vmem:[%s2 + $0x28] sm:$0xff]
        %v344 = vld [vmem:[%s2 + $0x30] sm:$0xff]
        %v345 = vld [vmem:[%s2 + $0x38] sm:$0xff]
        %v346 = vld [vmem:[%s2 + $0x40] sm:$0xff]
        %v347 = vld [vmem:[%s2 + $0x48] sm:$0xff]
        %v348 = vld [vmem:[%s2 + $0x50] sm:$0xff]
        %v349 = vld [vmem:[%s2 + $0x58] sm:$0xff]
        %v350 = vld [vmem:[%s2 + $0x60] sm:$0xff]
        %v351 = vld [vmem:[%s2 + $0x68] sm:$0xff]
        %v352 = vld [vmem:[%s2 + $0x70] sm:$0xff]
        %v353 = vld [vmem:[%s2 + $0x78] sm:$0xff]
        %v354 = vld [vmem:[%s3] sm:$0x3]
        %v355 = vld [vmem:[%s288] sm:$0xff]
        %v356 = vld [vmem:[%s288 + $0x8] sm:$0xff]
        %v357 = vld [vmem:[%s295] sm:$0xff]
        %v358 = vld [vmem:[%s295 + $0x8] sm:$0xff]
        %v360 = vlaneseq
        %v361 = vshrl.u32 %v360, 7
        %v362 = vsub.s32 0, %v361
        %v363 = vrot.slane %v354, %v362
        %v364 = vlaneseq
        %v365 = vshrl.u32 %v364, 7
        %v366 = vsub.s32 1, %v365
        %v367 = vrot.slane %v354, %v366
        %vm370 = vcmask 523264
        %v372 = vsel %vm370, %v336, 0
        %374 = vmatprep.subr.mxu0 %v339
        %375 = vmatpush1.msra.mxu0 %v338
        %376 = vmatprep.subr.mxu0 %v341
        %377 = vmatpush1.msra.mxu0 %v340
        %378 = vmatprep.subr.mxu0 %v343
        %379 = vmatpush1.msra.mxu0 %v342
        %380 = vmatprep.subr.mxu0 %v345
        %381 = vmatpush1.msra.mxu0 %v344
        %382 = vmatprep.subr.mxu0 %v347
        %383 = vmatpush1.msra.mxu0 %v346
        %384 = vmatprep.subr.mxu0 %v349
        %385 = vmatpush1.msra.mxu0 %v348
        %386 = vmatprep.subr.mxu0 %v351
        %387 = vmatpush1.msra.mxu0 %v350
        %388 = vmatprep.subr.mxu0 %v353
        %389 = vmatpush1.msra.mxu0 %v352
        %390 = vmatprep.subr.mxu0 0.0
        %391 = vmatpush1.msra.mxu0 0.0
        %392 = vmatprep.subr.mxu0 0.0
        %393 = vmatpush1.msra.mxu0 0.0
        %394 = vmatprep.subr.mxu0 0.0
        %395 = vmatpush1.msra.mxu0 0.0
        %396 = vmatprep.subr.mxu0 0.0
        %397 = vmatpush1.msra.mxu0 0.0
        %398 = vmatprep.subr.mxu0 0.0
        %399 = vmatpush1.msra.mxu0 0.0
        %400 = vmatprep.subr.mxu0 0.0
        %401 = vmatpush1.msra.mxu0 0.0
        %402 = vmatprep.subr.mxu0 0.0
        %403 = vmatpush1.msra.mxu0 0.0
        %404 = vmatprep.subr.mxu0 0.0
        %405 = vmatpush1.msra.mxu0 0.0
        %406 = vmatprep.subr.mxu0 0.0
        %407 = vmatpush1.msra.mxu0 0.0
        %408 = vmatprep.subr.mxu0 0.0
        %409 = vmatpush1.msra.mxu0 0.0
        %410 = vmatprep.subr.mxu0 0.0
        %411 = vmatpush1.msra.mxu0 0.0
        %412 = vmatprep.subr.mxu0 0.0
        %413 = vmatpush1.msra.mxu0 0.0
        %414 = vmatprep.subr.mxu0 0.0
        %415 = vmatpush1.msra.mxu0 0.0
        %416 = vmatprep.subr.mxu0 0.0
        %417 = vmatpush1.msra.mxu0 0.0
        %418 = vmatprep.subr.mxu0 0.0
        %419 = vmatpush1.msra.mxu0 0.0
        %420 = vmatprep.subr.mxu0 0.0
        %421 = vmatpush1.msra.mxu0 0.0
        %422 = vmatprep.subr.mxu0 0.0
        %423 = vmatpush1.msra.mxu0 0.0
        %424 = vmatprep.subr.mxu0 0.0
        %425 = vmatpush1.msra.mxu0 0.0
        %426 = vmatprep.subr.mxu0 0.0
        %427 = vmatpush1.msra.mxu0 0.0
        %428 = vmatprep.subr.mxu0 0.0
        %429 = vmatpush1.msra.mxu0 0.0
        %430 = vmatprep.subr.mxu0 0.0
        %431 = vmatpush1.msra.mxu0 0.0
        %432 = vmatprep.subr.mxu0 0.0
        %433 = vmatpush1.msra.mxu0 0.0
        %434 = vmatprep.subr.mxu0 0.0
        %435 = vmatpush1.msra.mxu0 0.0
        %436 = vmatprep.subr.mxu0 0.0
        %437 = vmatpush1.msra.mxu0 0.0
        %438 = vmatprep.mubr.f32.mxu0 0.0
        %439 = vmatmul.mubr.f32.gmra.mrb[0].mxu0 %v372
        %v440 = vpop.f32.mrb[0].mxu0
        %v441 = vadd.f32 %v363, %v440
        %v442 = vpop.f32.mrb[0].mxu0
        %v443 = vadd.f32 %v367, %v442
        %444 = vdwg.mxu0
        %v446 = vrot.slane %v441, 1
        %v449 = vadd.f32 %v355, %v441
        %v450 = vadd.f32 %v356, %v446
        %v451 = vxor.u32 %v449, 2147483648
        %v452 = vxor.u32 %v450, 2147483648
        %v453 = vmul.f32 %v451, 1.442695
        %v454 = vpow.pop %v453
        %v455 = vmul.f32 %v452, 1.442695
        %v456 = vpow.pop %v455
        %v457 = vadd.f32 %v454, 1.0
        %v458 = vadd.f32 %v456, 1.0
        %v459 = vrcp.pop %v457
        %v460 = vmul.f32 1.0, %v459
        %v461 = vrcp.pop %v458
        %v462 = vmul.f32 1.0, %v461
        %v463 = vtanh.pop %v449
        %v464 = vtanh.pop %v450
        %v466 = vrot.slane %v337, 1
        %467 = vrot.lane.b32.xlu0 %v337, 32
        %v468 = vpop.permute.xlu0 %467
        %469 = vrot.lane.b32.xlu0 %v466, 32
        %v470 = vpop.permute.xlu0 %469
        %v473 = vmul.f32 %v460, %v468
        %v474 = vmul.f32 %v462, %v470
        %477 = vrot.lane.b32.xlu0 %v463, 64
        %v478 = vpop.permute.xlu0 %477
        %479 = vrot.lane.b32.xlu0 %v464, 64
        %v480 = vpop.permute.xlu0 %479
        %v483 = vmul.f32 %v460, %v478
        %v484 = vmul.f32 %v462, %v480
        %487 = vrot.lane.b32.xlu0 %v483, 32
        %v488 = vpop.permute.xlu0 %487
        %489 = vrot.lane.b32.xlu0 %v484, 32
        %v490 = vpop.permute.xlu0 %489
        %v493 = vadd.f32 %v473, %v488
        %v494 = vadd.f32 %v474, %v490
        %v495 = vtanh.pop %v493
        %v496 = vtanh.pop %v494
        %499 = vrot.lane.b32.xlu0 %v495, 64
        %v500 = vpop.permute.xlu0 %499
        %501 = vrot.lane.b32.xlu0 %v496, 64
        %v502 = vpop.permute.xlu0 %501
        %v505 = vmul.f32 %v460, %v500
        %v506 = vmul.f32 %v462, %v502
        %v508 = vrot.slane %v443, 1
        %v509 = vrot.slane %v443, 2
        %v512 = vadd.f32 %v357, %v508
        %v513 = vadd.f32 %v358, %v509
        %v514 = vxor.u32 %v512, 2147483648
        %v515 = vxor.u32 %v513, 2147483648
        %v516 = vmul.f32 %v514, 1.442695
        %v517 = vpow.pop %v516
        %v518 = vmul.f32 %v515, 1.442695
        %v519 = vpow.pop %v518
        %v520 = vadd.f32 %v517, 1.0
        %v521 = vadd.f32 %v519, 1.0
        %v522 = vrcp.pop %v520
        %v523 = vmul.f32 1.0, %v522
        %v524 = vrcp.pop %v521
        %v525 = vmul.f32 1.0, %v524
        %v526 = vtanh.pop %v512
        %v527 = vtanh.pop %v513
        %v528 = vrot.slane %v337, 2
        %v531 = vmul.f32 %v523, %v466
        %v532 = vmul.f32 %v525, %v528
        %535 = vrot.lane.b32.xlu0 %v526, 64
        %v536 = vpop.permute.xlu0 %535
        %537 = vrot.lane.b32.xlu0 %v527, 64
        %v538 = vpop.permute.xlu0 %537
        %v541 = vmul.f32 %v523, %v536
        %v542 = vmul.f32 %v525, %v538
        %545 = vrot.lane.b32.xlu0 %v541, 32
        %v546 = vpop.permute.xlu0 %545
        %547 = vrot.lane.b32.xlu0 %v542, 32
        %v548 = vpop.permute.xlu0 %547
        %v551 = vadd.f32 %v531, %v546
        %v552 = vadd.f32 %v532, %v548
        %v553 = vtanh.pop %v551
        %v554 = vtanh.pop %v552
        %557 = vrot.lane.b32.xlu0 %v553, 64
        %v558 = vpop.permute.xlu0 %557
        %559 = vrot.lane.b32.xlu0 %v554, 64
        %v560 = vpop.permute.xlu0 %559
        %v563 = vmul.f32 %v523, %v558
        %v564 = vmul.f32 %v525, %v560
        %v567 = vrot.slane %v506, 7
        %vm568 = vcmask 1041409
        %v569 = vsel %vm568, %v567, %v505
        %570 = vrot.lane.b32.xlu0 %v569, 32
        %v571 = vpop.permute.xlu0 %570
        %v575 = vrot.slane %v563, 7
        %v576 = vrot.slane %v564, 6
        %v577 = vsel %vm568, %v576, %v575
        %578 = vrot.lane.b32.xlu0 %v577, 64
        %v579 = vpop.permute.xlu0 %578
        %vm581 = vcmask 261120
        %v582 = vsel %vm581, %v571, %v579
        %v585 = vrot.slane %v494, 7
        %v586 = vsel %vm568, %v585, %v493
        %587 = vrot.lane.b32.xlu0 %v586, 96
        %v588 = vpop.permute.xlu0 %587
        %v592 = vrot.slane %v551, 7
        %v593 = vrot.slane %v552, 6
        %v594 = vsel %vm568, %v593, %v592
        %v596 = vsel %vm581, %v588, %v594
        %597 = vrot.lane.b32.xlu0 %v505, 32
        %v598 = vpop.permute.xlu0 %597
        %599 = vrot.lane.b32.xlu0 %v506, 32
        %v600 = vpop.permute.xlu0 %599
        %vm603 = vcmask 253952
        %604 = vst.msk [vmem:[%s320] sm:$0x1] %vm603, %v598
        %605 = vst.msk [vmem:[%s320 + $0x8] sm:$0x1] %vm603, %v600
        %606 = vrot.lane.b32.xlu0 %v563, 32
        %v607 = vpop.permute.xlu0 %606
        %608 = vrot.lane.b32.xlu0 %v564, 32
        %v609 = vpop.permute.xlu0 %608
        %vm612 = vcmask 261127
        %613 = vst.msk [vmem:[%s326] sm:$0x80] %vm612, %v607
        %614 = vst.msk [vmem:[%s326 + $0x8] sm:$0x80] %vm612, %v609
        %v616 = vsel %vm370, %v582, 0
        %618 = vmatprep.subr.mxu0 %v339
        %619 = vmatpush1.msra.mxu0 %v338
        %620 = vmatprep.subr.mxu0 %v341
        %621 = vmatpush1.msra.mxu0 %v340
        %622 = vmatprep.subr.mxu0 %v343
        %623 = vmatpush1.msra.mxu0 %v342
        %624 = vmatprep.subr.mxu0 %v345
        %625 = vmatpush1.msra.mxu0 %v344
        %626 = vmatprep.subr.mxu0 %v347
        %627 = vmatpush1.msra.mxu0 %v346
        %628 = vmatprep.subr.mxu0 %v349
        %629 = vmatpush1.msra.mxu0 %v348
        %630 = vmatprep.subr.mxu0 %v351
        %631 = vmatpush1.msra.mxu0 %v350
        %632 = vmatprep.subr.mxu0 %v353
        %633 = vmatpush1.msra.mxu0 %v352
        %634 = vmatprep.subr.mxu0 0.0
        %635 = vmatpush1.msra.mxu0 0.0
        %636 = vmatprep.subr.mxu0 0.0
        %637 = vmatpush1.msra.mxu0 0.0
        %638 = vmatprep.subr.mxu0 0.0
        %639 = vmatpush1.msra.mxu0 0.0
        %640 = vmatprep.subr.mxu0 0.0
        %641 = vmatpush1.msra.mxu0 0.0
        %642 = vmatprep.subr.mxu0 0.0
        %643 = vmatpush1.msra.mxu0 0.0
        %644 = vmatprep.subr.mxu0 0.0
        %645 = vmatpush1.msra.mxu0 0.0
        %646 = vmatprep.subr.mxu0 0.0
        %647 = vmatpush1.msra.mxu0 0.0
        %648 = vmatprep.subr.mxu0 0.0
        %649 = vmatpush1.msra.mxu0 0.0
        %650 = vmatprep.subr.mxu0 0.0
        %651 = vmatpush1.msra.mxu0 0.0
        %652 = vmatprep.subr.mxu0 0.0
        %653 = vmatpush1.msra.mxu0 0.0
        %654 = vmatprep.subr.mxu0 0.0
        %655 = vmatpush1.msra.mxu0 0.0
        %656 = vmatprep.subr.mxu0 0.0
        %657 = vmatpush1.msra.mxu0 0.0
        %658 = vmatprep.subr.mxu0 0.0
        %659 = vmatpush1.msra.mxu0 0.0
        %660 = vmatprep.subr.mxu0 0.0
        %661 = vmatpush1.msra.mxu0 0.0
        %662 = vmatprep.subr.mxu0 0.0
        %663 = vmatpush1.msra.mxu0 0.0
        %664 = vmatprep.subr.mxu0 0.0
        %665 = vmatpush1.msra.mxu0 0.0
        %666 = vmatprep.subr.mxu0 0.0
        %667 = vmatpush1.msra.mxu0 0.0
        %668 = vmatprep.subr.mxu0 0.0
        %669 = vmatpush1.msra.mxu0 0.0
        %670 = vmatprep.subr.mxu0 0.0
        %671 = vmatpush1.msra.mxu0 0.0
        %672 = vmatprep.subr.mxu0 0.0
        %673 = vmatpush1.msra.mxu0 0.0
        %674 = vmatprep.subr.mxu0 0.0
        %675 = vmatpush1.msra.mxu0 0.0
        %676 = vmatprep.subr.mxu0 0.0
        %677 = vmatpush1.msra.mxu0 0.0
        %678 = vmatprep.subr.mxu0 0.0
        %679 = vmatpush1.msra.mxu0 0.0
        %680 = vmatprep.subr.mxu0 0.0
        %681 = vmatpush1.msra.mxu0 0.0
        %682 = vmatprep.mubr.f32.mxu0 0.0
        %683 = vmatmul.mubr.f32.gmra.mrb[0].mxu0 %v616
        %v684 = vpop.f32.mrb[0].mxu0
        %v685 = vadd.f32 %v363, %v684
        %v686 = vpop.f32.mrb[0].mxu0
        %v687 = vadd.f32 %v367, %v686
        %688 = vdwg.mxu0
        %v690 = vrot.slane %v685, 7
        %v693 = vadd.f32 %v355, %v690
        %v694 = vadd.f32 %v356, %v685
        %v695 = vxor.u32 %v693, 2147483648
        %v696 = vxor.u32 %v694, 2147483648
        %v697 = vmul.f32 %v695, 1.442695
        %v698 = vpow.pop %v697
        %v699 = vmul.f32 %v696, 1.442695
        %v700 = vpow.pop %v699
        %v701 = vadd.f32 %v698, 1.0
        %v702 = vadd.f32 %v700, 1.0
        %v703 = vrcp.pop %v701
        %v704 = vmul.f32 1.0, %v703
        %v705 = vrcp.pop %v702
        %v706 = vmul.f32 1.0, %v705
        %v707 = vtanh.pop %v693
        %v708 = vtanh.pop %v694
        %v710 = vrot.slane %v596, 7
        %711 = vrot.lane.b32.xlu0 %v710, 32
        %v712 = vpop.permute.xlu0 %711
        %713 = vrot.lane.b32.xlu0 %v596, 32
        %v714 = vpop.permute.xlu0 %713
        %v717 = vmul.f32 %v704, %v712
        %v718 = vmul.f32 %v706, %v714
        %721 = vrot.lane.b32.xlu0 %v707, 64
        %v722 = vpop.permute.xlu0 %721
        %723 = vrot.lane.b32.xlu0 %v708, 64
        %v724 = vpop.permute.xlu0 %723
        %v727 = vmul.f32 %v704, %v722
        %v728 = vmul.f32 %v706, %v724
        %731 = vrot.lane.b32.xlu0 %v727, 32
        %v732 = vpop.permute.xlu0 %731
        %733 = vrot.lane.b32.xlu0 %v728, 32
        %v734 = vpop.permute.xlu0 %733
        %v737 = vadd.f32 %v717, %v732
        %v738 = vadd.f32 %v718, %v734
        %v739 = vtanh.pop %v737
        %v740 = vtanh.pop %v738
        %743 = vrot.lane.b32.xlu0 %v739, 64
        %v744 = vpop.permute.xlu0 %743
        %745 = vrot.lane.b32.xlu0 %v740, 64
        %v746 = vpop.permute.xlu0 %745
        %v749 = vmul.f32 %v704, %v744
        %v750 = vmul.f32 %v706, %v746
        %v752 = vrot.slane %v687, 2
        %v753 = vrot.slane %v687, 3
        %v756 = vadd.f32 %v357, %v752
        %v757 = vadd.f32 %v358, %v753
        %v758 = vxor.u32 %v756, 2147483648
        %v759 = vxor.u32 %v757, 2147483648
        %v760 = vmul.f32 %v758, 1.442695
        %v761 = vpow.pop %v760
        %v762 = vmul.f32 %v759, 1.442695
        %v763 = vpow.pop %v762
        %v764 = vadd.f32 %v761, 1.0
        %v765 = vadd.f32 %v763, 1.0
        %v766 = vrcp.pop %v764
        %v767 = vmul.f32 1.0, %v766
        %v768 = vrcp.pop %v765
        %v769 = vmul.f32 1.0, %v768
        %v770 = vtanh.pop %v756
        %v771 = vtanh.pop %v757
        %v772 = vrot.slane %v596, 2
        %v773 = vrot.slane %v596, 3
        %v776 = vmul.f32 %v767, %v772
        %v777 = vmul.f32 %v769, %v773
        %780 = vrot.lane.b32.xlu0 %v770, 64
        %v781 = vpop.permute.xlu0 %780
        %782 = vrot.lane.b32.xlu0 %v771, 64
        %v783 = vpop.permute.xlu0 %782
        %v786 = vmul.f32 %v767, %v781
        %v787 = vmul.f32 %v769, %v783
        %790 = vrot.lane.b32.xlu0 %v786, 32
        %v791 = vpop.permute.xlu0 %790
        %792 = vrot.lane.b32.xlu0 %v787, 32
        %v793 = vpop.permute.xlu0 %792
        %v796 = vadd.f32 %v776, %v791
        %v797 = vadd.f32 %v777, %v793
        %v798 = vtanh.pop %v796
        %v799 = vtanh.pop %v797
        %802 = vrot.lane.b32.xlu0 %v798, 64
        %v803 = vpop.permute.xlu0 %802
        %804 = vrot.lane.b32.xlu0 %v799, 64
        %v805 = vpop.permute.xlu0 %804
        %v808 = vmul.f32 %v767, %v803
        %v809 = vmul.f32 %v769, %v805
        %v812 = vrot.slane %v750, 7
        %vm813 = vcmask 1042434
        %v814 = vsel %vm813, %v812, %v749
        %815 = vrot.lane.b32.xlu0 %v814, 32
        %v816 = vpop.permute.xlu0 %815
        %v820 = vrot.slane %v808, 5
        %v821 = vrot.slane %v809, 4
        %v822 = vsel %vm813, %v821, %v820
        %823 = vrot.lane.b32.xlu0 %v822, 64
        %v824 = vpop.permute.xlu0 %823
        %v826 = vsel %vm581, %v816, %v824
        %v829 = vrot.slane %v738, 7
        %v830 = vsel %vm813, %v829, %v737
        %831 = vrot.lane.b32.xlu0 %v830, 96
        %v832 = vpop.permute.xlu0 %831
        %v836 = vrot.slane %v796, 5
        %v837 = vrot.slane %v797, 4
        %v838 = vsel %vm813, %v837, %v836
        %v840 = vsel %vm581, %v832, %v838
        %841 = vrot.lane.b32.xlu0 %v749, 32
        %v842 = vpop.permute.xlu0 %841
        %843 = vrot.lane.b32.xlu0 %v750, 32
        %v844 = vpop.permute.xlu0 %843
        %vm847 = vcmask 254977
        %848 = vst.msk [vmem:[%s320] sm:$0x2] %vm847, %v842
        %849 = vst.msk [vmem:[%s320 + $0x8] sm:$0x2] %vm847, %v844
        %850 = vrot.lane.b32.xlu0 %v808, 32
        %v851 = vpop.permute.xlu0 %850
        %852 = vrot.lane.b32.xlu0 %v809, 32
        %v853 = vpop.permute.xlu0 %852
        %vm856 = vcmask 260102
        %857 = vst.msk [vmem:[%s326] sm:$0x40] %vm856, %v851
        %858 = vst.msk [vmem:[%s326 + $0x8] sm:$0x40] %vm856, %v853
        %v860 = vrot.slane %v826, 1
        %v861 = vsel %vm370, %v860, 0
        %863 = vmatprep.subr.mxu0 %v339
        %864 = vmatpush1.msra.mxu0 %v338
        %865 = vmatprep.subr.mxu0 %v341
        %866 = vmatpush1.msra.mxu0 %v340
        %867 = vmatprep.subr.mxu0 %v343
        %868 = vmatpush1.msra.mxu0 %v342
        %869 = vmatprep.subr.mxu0 %v345
        %870 = vmatpush1.msra.mxu0 %v344
        %871 = vmatprep.subr.mxu0 %v347
        %872 = vmatpush1.msra.mxu0 %v346
        %873 = vmatprep.subr.mxu0 %v349
        %874 = vmatpush1.msra.mxu0 %v348
        %875 = vmatprep.subr.mxu0 %v351
        %876 = vmatpush1.msra.mxu0 %v350
        %877 = vmatprep.subr.mxu0 %v353
        %878 = vmatpush1.msra.mxu0 %v352
        %879 = vmatprep.subr.mxu0 0.0
        %880 = vmatpush1.msra.mxu0 0.0
        %881 = vmatprep.subr.mxu0 0.0
        %882 = vmatpush1.msra.mxu0 0.0
        %883 = vmatprep.subr.mxu0 0.0
        %884 = vmatpush1.msra.mxu0 0.0
        %885 = vmatprep.subr.mxu0 0.0
        %886 = vmatpush1.msra.mxu0 0.0
        %887 = vmatprep.subr.mxu0 0.0
        %888 = vmatpush1.msra.mxu0 0.0
        %889 = vmatprep.subr.mxu0 0.0
        %890 = vmatpush1.msra.mxu0 0.0
        %891 = vmatprep.subr.mxu0 0.0
        %892 = vmatpush1.msra.mxu0 0.0
        %893 = vmatprep.subr.mxu0 0.0
        %894 = vmatpush1.msra.mxu0 0.0
        %895 = vmatprep.subr.mxu0 0.0
        %896 = vmatpush1.msra.mxu0 0.0
        %897 = vmatprep.subr.mxu0 0.0
        %898 = vmatpush1.msra.mxu0 0.0
        %899 = vmatprep.subr.mxu0 0.0
        %900 = vmatpush1.msra.mxu0 0.0
        %901 = vmatprep.subr.mxu0 0.0
        %902 = vmatpush1.msra.mxu0 0.0
        %903 = vmatprep.subr.mxu0 0.0
        %904 = vmatpush1.msra.mxu0 0.0
        %905 = vmatprep.subr.mxu0 0.0
        %906 = vmatpush1.msra.mxu0 0.0
        %907 = vmatprep.subr.mxu0 0.0
        %908 = vmatpush1.msra.mxu0 0.0
        %909 = vmatprep.subr.mxu0 0.0
        %910 = vmatpush1.msra.mxu0 0.0
        %911 = vmatprep.subr.mxu0 0.0
        %912 = vmatpush1.msra.mxu0 0.0
        %913 = vmatprep.subr.mxu0 0.0
        %914 = vmatpush1.msra.mxu0 0.0
        %915 = vmatprep.subr.mxu0 0.0
        %916 = vmatpush1.msra.mxu0 0.0
        %917 = vmatprep.subr.mxu0 0.0
        %918 = vmatpush1.msra.mxu0 0.0
        %919 = vmatprep.subr.mxu0 0.0
        %920 = vmatpush1.msra.mxu0 0.0
        %921 = vmatprep.subr.mxu0 0.0
        %922 = vmatpush1.msra.mxu0 0.0
        %923 = vmatprep.subr.mxu0 0.0
        %924 = vmatpush1.msra.mxu0 0.0
        %925 = vmatprep.subr.mxu0 0.0
        %926 = vmatpush1.msra.mxu0 0.0
        %927 = vmatprep.mubr.f32.mxu0 0.0
        %928 = vmatmul.mubr.f32.gmra.mrb[0].mxu0 %v861
        %v929 = vpop.f32.mrb[0].mxu0
        %v930 = vadd.f32 %v363, %v929
        %v931 = vpop.f32.mrb[0].mxu0
        %v932 = vadd.f32 %v367, %v931
        %933 = vdwg.mxu0
        %v935 = vrot.slane %v930, 6
        %v936 = vrot.slane %v930, 7
        %v939 = vadd.f32 %v355, %v935
        %v940 = vadd.f32 %v356, %v936
        %v941 = vxor.u32 %v939, 2147483648
        %v942 = vxor.u32 %v940, 2147483648
        %v943 = vmul.f32 %v941, 1.442695
        %v944 = vpow.pop %v943
        %v945 = vmul.f32 %v942, 1.442695
        %v946 = vpow.pop %v945
        %v947 = vadd.f32 %v944, 1.0
        %v948 = vadd.f32 %v946, 1.0
        %v949 = vrcp.pop %v947
        %v950 = vmul.f32 1.0, %v949
        %v951 = vrcp.pop %v948
        %v952 = vmul.f32 1.0, %v951
        %v953 = vtanh.pop %v939
        %v954 = vtanh.pop %v940
        %v956 = vrot.slane %v840, 7
        %957 = vrot.lane.b32.xlu0 %v956, 32
        %v958 = vpop.permute.xlu0 %957
        %959 = vrot.lane.b32.xlu0 %v840, 32
        %v960 = vpop.permute.xlu0 %959
        %v963 = vmul.f32 %v950, %v958
        %v964 = vmul.f32 %v952, %v960
        %967 = vrot.lane.b32.xlu0 %v953, 64
        %v968 = vpop.permute.xlu0 %967
        %969 = vrot.lane.b32.xlu0 %v954, 64
        %v970 = vpop.permute.xlu0 %969
        %v973 = vmul.f32 %v950, %v968
        %v974 = vmul.f32 %v952, %v970
        %977 = vrot.lane.b32.xlu0 %v973, 32
        %v978 = vpop.permute.xlu0 %977
        %979 = vrot.lane.b32.xlu0 %v974, 32
        %v980 = vpop.permute.xlu0 %979
        %v983 = vadd.f32 %v963, %v978
        %v984 = vadd.f32 %v964, %v980
        %v985 = vtanh.pop %v983
        %v986 = vtanh.pop %v984
        %989 = vrot.lane.b32.xlu0 %v985, 64
        %v990 = vpop.permute.xlu0 %989
        %991 = vrot.lane.b32.xlu0 %v986, 64
        %v992 = vpop.permute.xlu0 %991
        %v995 = vmul.f32 %v950, %v990
        %v996 = vmul.f32 %v952, %v992
        %v998 = vrot.slane %v932, 3
        %v999 = vrot.slane %v932, 4
        %v1002 = vadd.f32 %v357, %v998
        %v1003 = vadd.f32 %v358, %v999
        %v1004 = vxor.u32 %v1002, 2147483648
        %v1005 = vxor.u32 %v1003, 2147483648
        %v1006 = vmul.f32 %v1004, 1.442695
        %v1007 = vpow.pop %v1006
        %v1008 = vmul.f32 %v1005, 1.442695
        %v1009 = vpow.pop %v1008
        %v1010 = vadd.f32 %v1007, 1.0
        %v1011 = vadd.f32 %v1009, 1.0
        %v1012 = vrcp.pop %v1010
        %v1013 = vmul.f32 1.0, %v1012
        %v1014 = vrcp.pop %v1011
        %v1015 = vmul.f32 1.0, %v1014
        %v1016 = vtanh.pop %v1002
        %v1017 = vtanh.pop %v1003
        %v1018 = vrot.slane %v840, 4
        %v1019 = vrot.slane %v840, 5
        %v1022 = vmul.f32 %v1013, %v1018
        %v1023 = vmul.f32 %v1015, %v1019
        %1026 = vrot.lane.b32.xlu0 %v1016, 64
        %v1027 = vpop.permute.xlu0 %1026
        %1028 = vrot.lane.b32.xlu0 %v1017, 64
        %v1029 = vpop.permute.xlu0 %1028
        %v1032 = vmul.f32 %v1013, %v1027
        %v1033 = vmul.f32 %v1015, %v1029
        %1036 = vrot.lane.b32.xlu0 %v1032, 32
        %v1037 = vpop.permute.xlu0 %1036
        %1038 = vrot.lane.b32.xlu0 %v1033, 32
        %v1039 = vpop.permute.xlu0 %1038
        %v1042 = vadd.f32 %v1022, %v1037
        %v1043 = vadd.f32 %v1023, %v1039
        %v1044 = vtanh.pop %v1042
        %v1045 = vtanh.pop %v1043
        %1048 = vrot.lane.b32.xlu0 %v1044, 64
        %v1049 = vpop.permute.xlu0 %1048
        %1050 = vrot.lane.b32.xlu0 %v1045, 64
        %v1051 = vpop.permute.xlu0 %1050
        %v1054 = vmul.f32 %v1013, %v1049
        %v1055 = vmul.f32 %v1015, %v1051
        %v1058 = vrot.slane %v996, 7
        %vm1059 = vcmask 1043459
        %v1060 = vsel %vm1059, %v1058, %v995
        %1061 = vrot.lane.b32.xlu0 %v1060, 32
        %v1062 = vpop.permute.xlu0 %1061
        %v1066 = vrot.slane %v1054, 3
        %v1067 = vrot.slane %v1055, 2
        %v1068 = vsel %vm1059, %v1067, %v1066
        %1069 = vrot.lane.b32.xlu0 %v1068, 64
        %v1070 = vpop.permute.xlu0 %1069
        %v1072 = vsel %vm581, %v1062, %v1070
        %v1075 = vrot.slane %v984, 7
        %v1076 = vsel %vm1059, %v1075, %v983
        %1077 = vrot.lane.b32.xlu0 %v1076, 96
        %v1078 = vpop.permute.xlu0 %1077
        %v1082 = vrot.slane %v1042, 3
        %v1083 = vrot.slane %v1043, 2
        %v1084 = vsel %vm1059, %v1083, %v1082
        %v1086 = vsel %vm581, %v1078, %v1084
        %1087 = vrot.lane.b32.xlu0 %v995, 32
        %v1088 = vpop.permute.xlu0 %1087
        %1089 = vrot.lane.b32.xlu0 %v996, 32
        %v1090 = vpop.permute.xlu0 %1089
        %vm1093 = vcmask 256002
        %1094 = vst.msk [vmem:[%s320] sm:$0x4] %vm1093, %v1088
        %1095 = vst.msk [vmem:[%s320 + $0x8] sm:$0x4] %vm1093, %v1090
        %1096 = vrot.lane.b32.xlu0 %v1054, 32
        %v1097 = vpop.permute.xlu0 %1096
        %1098 = vrot.lane.b32.xlu0 %v1055, 32
        %v1099 = vpop.permute.xlu0 %1098
        %vm1102 = vcmask 259077
        %1103 = vst.msk [vmem:[%s326] sm:$0x20] %vm1102, %v1097
        %1104 = vst.msk [vmem:[%s326 + $0x8] sm:$0x20] %vm1102, %v1099
        %v1106 = vrot.slane %v1072, 2
        %v1107 = vsel %vm370, %v1106, 0
        %1109 = vmatprep.subr.mxu0 %v339
        %1110 = vmatpush1.msra.mxu0 %v338
        %1111 = vmatprep.subr.mxu0 %v341
        %1112 = vmatpush1.msra.mxu0 %v340
        %1113 = vmatprep.subr.mxu0 %v343
        %1114 = vmatpush1.msra.mxu0 %v342
        %1115 = vmatprep.subr.mxu0 %v345
        %1116 = vmatpush1.msra.mxu0 %v344
        %1117 = vmatprep.subr.mxu0 %v347
        %1118 = vmatpush1.msra.mxu0 %v346
        %1119 = vmatprep.subr.mxu0 %v349
        %1120 = vmatpush1.msra.mxu0 %v348
        %1121 = vmatprep.subr.mxu0 %v351
        %1122 = vmatpush1.msra.mxu0 %v350
        %1123 = vmatprep.subr.mxu0 %v353
        %1124 = vmatpush1.msra.mxu0 %v352
        %1125 = vmatprep.subr.mxu0 0.0
        %1126 = vmatpush1.msra.mxu0 0.0
        %1127 = vmatprep.subr.mxu0 0.0
        %1128 = vmatpush1.msra.mxu0 0.0
        %1129 = vmatprep.subr.mxu0 0.0
        %1130 = vmatpush1.msra.mxu0 0.0
        %1131 = vmatprep.subr.mxu0 0.0
        %1132 = vmatpush1.msra.mxu0 0.0
        %1133 = vmatprep.subr.mxu0 0.0
        %1134 = vmatpush1.msra.mxu0 0.0
        %1135 = vmatprep.subr.mxu0 0.0
        %1136 = vmatpush1.msra.mxu0 0.0
        %1137 = vmatprep.subr.mxu0 0.0
        %1138 = vmatpush1.msra.mxu0 0.0
        %1139 = vmatprep.subr.mxu0 0.0
        %1140 = vmatpush1.msra.mxu0 0.0
        %1141 = vmatprep.subr.mxu0 0.0
        %1142 = vmatpush1.msra.mxu0 0.0
        %1143 = vmatprep.subr.mxu0 0.0
        %1144 = vmatpush1.msra.mxu0 0.0
        %1145 = vmatprep.subr.mxu0 0.0
        %1146 = vmatpush1.msra.mxu0 0.0
        %1147 = vmatprep.subr.mxu0 0.0
        %1148 = vmatpush1.msra.mxu0 0.0
        %1149 = vmatprep.subr.mxu0 0.0
        %1150 = vmatpush1.msra.mxu0 0.0
        %1151 = vmatprep.subr.mxu0 0.0
        %1152 = vmatpush1.msra.mxu0 0.0
        %1153 = vmatprep.subr.mxu0 0.0
        %1154 = vmatpush1.msra.mxu0 0.0
        %1155 = vmatprep.subr.mxu0 0.0
        %1156 = vmatpush1.msra.mxu0 0.0
        %1157 = vmatprep.subr.mxu0 0.0
        %1158 = vmatpush1.msra.mxu0 0.0
        %1159 = vmatprep.subr.mxu0 0.0
        %1160 = vmatpush1.msra.mxu0 0.0
        %1161 = vmatprep.subr.mxu0 0.0
        %1162 = vmatpush1.msra.mxu0 0.0
        %1163 = vmatprep.subr.mxu0 0.0
        %1164 = vmatpush1.msra.mxu0 0.0
        %1165 = vmatprep.subr.mxu0 0.0
        %1166 = vmatpush1.msra.mxu0 0.0
        %1167 = vmatprep.subr.mxu0 0.0
        %1168 = vmatpush1.msra.mxu0 0.0
        %1169 = vmatprep.subr.mxu0 0.0
        %1170 = vmatpush1.msra.mxu0 0.0
        %1171 = vmatprep.subr.mxu0 0.0
        %1172 = vmatpush1.msra.mxu0 0.0
        %1173 = vmatprep.mubr.f32.mxu0 0.0
        %1174 = vmatmul.mubr.f32.gmra.mrb[0].mxu0 %v1107
        %v1175 = vpop.f32.mrb[0].mxu0
        %v1176 = vadd.f32 %v363, %v1175
        %v1177 = vpop.f32.mrb[0].mxu0
        %v1178 = vadd.f32 %v367, %v1177
        %1179 = vdwg.mxu0
        %v1181 = vrot.slane %v1176, 5
        %v1182 = vrot.slane %v1176, 6
        %v1185 = vadd.f32 %v355, %v1181
        %v1186 = vadd.f32 %v356, %v1182
        %v1187 = vxor.u32 %v1185, 2147483648
        %v1188 = vxor.u32 %v1186, 2147483648
        %v1189 = vmul.f32 %v1187, 1.442695
        %v1190 = vpow.pop %v1189
        %v1191 = vmul.f32 %v1188, 1.442695
        %v1192 = vpow.pop %v1191
        %v1193 = vadd.f32 %v1190, 1.0
        %v1194 = vadd.f32 %v1192, 1.0
        %v1195 = vrcp.pop %v1193
        %v1196 = vmul.f32 1.0, %v1195
        %v1197 = vrcp.pop %v1194
        %v1198 = vmul.f32 1.0, %v1197
        %v1199 = vtanh.pop %v1185
        %v1200 = vtanh.pop %v1186
        %v1202 = vrot.slane %v1086, 7
        %1203 = vrot.lane.b32.xlu0 %v1202, 32
        %v1204 = vpop.permute.xlu0 %1203
        %1205 = vrot.lane.b32.xlu0 %v1086, 32
        %v1206 = vpop.permute.xlu0 %1205
        %v1209 = vmul.f32 %v1196, %v1204
        %v1210 = vmul.f32 %v1198, %v1206
        %1213 = vrot.lane.b32.xlu0 %v1199, 64
        %v1214 = vpop.permute.xlu0 %1213
        %1215 = vrot.lane.b32.xlu0 %v1200, 64
        %v1216 = vpop.permute.xlu0 %1215
        %v1219 = vmul.f32 %v1196, %v1214
        %v1220 = vmul.f32 %v1198, %v1216
        %1223 = vrot.lane.b32.xlu0 %v1219, 32
        %v1224 = vpop.permute.xlu0 %1223
        %1225 = vrot.lane.b32.xlu0 %v1220, 32
        %v1226 = vpop.permute.xlu0 %1225
        %v1229 = vadd.f32 %v1209, %v1224
        %v1230 = vadd.f32 %v1210, %v1226
        %v1231 = vtanh.pop %v1229
        %v1232 = vtanh.pop %v1230
        %1235 = vrot.lane.b32.xlu0 %v1231, 64
        %v1236 = vpop.permute.xlu0 %1235
        %1237 = vrot.lane.b32.xlu0 %v1232, 64
        %v1238 = vpop.permute.xlu0 %1237
        %v1241 = vmul.f32 %v1196, %v1236
        %v1242 = vmul.f32 %v1198, %v1238
        %v1244 = vrot.slane %v1178, 4
        %v1245 = vrot.slane %v1178, 5
        %v1248 = vadd.f32 %v357, %v1244
        %v1249 = vadd.f32 %v358, %v1245
        %v1250 = vxor.u32 %v1248, 2147483648
        %v1251 = vxor.u32 %v1249, 2147483648
        %v1252 = vmul.f32 %v1250, 1.442695
        %v1253 = vpow.pop %v1252
        %v1254 = vmul.f32 %v1251, 1.442695
        %v1255 = vpow.pop %v1254
        %v1256 = vadd.f32 %v1253, 1.0
        %v1257 = vadd.f32 %v1255, 1.0
        %v1258 = vrcp.pop %v1256
        %v1259 = vmul.f32 1.0, %v1258
        %v1260 = vrcp.pop %v1257
        %v1261 = vmul.f32 1.0, %v1260
        %v1262 = vtanh.pop %v1248
        %v1263 = vtanh.pop %v1249
        %v1264 = vrot.slane %v1086, 6
        %v1267 = vmul.f32 %v1259, %v1264
        %v1268 = vmul.f32 %v1261, %v1202
        %1271 = vrot.lane.b32.xlu0 %v1262, 64
        %v1272 = vpop.permute.xlu0 %1271
        %1273 = vrot.lane.b32.xlu0 %v1263, 64
        %v1274 = vpop.permute.xlu0 %1273
        %v1277 = vmul.f32 %v1259, %v1272
        %v1278 = vmul.f32 %v1261, %v1274
        %1281 = vrot.lane.b32.xlu0 %v1277, 32
        %v1282 = vpop.permute.xlu0 %1281
        %1283 = vrot.lane.b32.xlu0 %v1278, 32
        %v1284 = vpop.permute.xlu0 %1283
        %v1287 = vadd.f32 %v1267, %v1282
        %v1288 = vadd.f32 %v1268, %v1284
        %v1289 = vtanh.pop %v1287
        %v1290 = vtanh.pop %v1288
        %1293 = vrot.lane.b32.xlu0 %v1289, 64
        %v1294 = vpop.permute.xlu0 %1293
        %1295 = vrot.lane.b32.xlu0 %v1290, 64
        %v1296 = vpop.permute.xlu0 %1295
        %v1299 = vmul.f32 %v1259, %v1294
        %v1300 = vmul.f32 %v1261, %v1296
        %v1303 = vrot.slane %v1242, 7
        %vm1304 = vcmask 1044484
        %v1305 = vsel %vm1304, %v1303, %v1241
        %1306 = vrot.lane.b32.xlu0 %v1305, 32
        %v1307 = vpop.permute.xlu0 %1306
        %v1311 = vrot.slane %v1299, 1
        %v1312 = vsel %vm1304, %v1300, %v1311
        %1313 = vrot.lane.b32.xlu0 %v1312, 64
        %v1314 = vpop.permute.xlu0 %1313
        %v1316 = vsel %vm581, %v1307, %v1314
        %v1319 = vrot.slane %v1230, 7
        %v1320 = vsel %vm1304, %v1319, %v1229
        %1321 = vrot.lane.b32.xlu0 %v1320, 96
        %v1322 = vpop.permute.xlu0 %1321
        %v1326 = vrot.slane %v1287, 1
        %v1327 = vsel %vm1304, %v1288, %v1326
        %v1329 = vsel %vm581, %v1322, %v1327
        %1330 = vrot.lane.b32.xlu0 %v1241, 32
        %v1331 = vpop.permute.xlu0 %1330
        %1332 = vrot.lane.b32.xlu0 %v1242, 32
        %v1333 = vpop.permute.xlu0 %1332
        %vm1336 = vcmask 257027
        %1337 = vst.msk [vmem:[%s320] sm:$0x8] %vm1336, %v1331
        %1338 = vst.msk [vmem:[%s320 + $0x8] sm:$0x8] %vm1336, %v1333
        %1339 = vrot.lane.b32.xlu0 %v1299, 32
        %v1340 = vpop.permute.xlu0 %1339
        %1341 = vrot.lane.b32.xlu0 %v1300, 32
        %v1342 = vpop.permute.xlu0 %1341
        %vm1345 = vcmask 258052
        %1346 = vst.msk [vmem:[%s326] sm:$0x10] %vm1345, %v1340
        %1347 = vst.msk [vmem:[%s326 + $0x8] sm:$0x10] %vm1345, %v1342
        %v1349 = vrot.slane %v1316, 3
        %v1350 = vsel %vm370, %v1349, 0
        %1352 = vmatprep.subr.mxu0 %v339
        %1353 = vmatpush1.msra.mxu0 %v338
        %1354 = vmatprep.subr.mxu0 %v341
        %1355 = vmatpush1.msra.mxu0 %v340
        %1356 = vmatprep.subr.mxu0 %v343
        %1357 = vmatpush1.msra.mxu0 %v342
        %1358 = vmatprep.subr.mxu0 %v345
        %1359 = vmatpush1.msra.mxu0 %v344
        %1360 = vmatprep.subr.mxu0 %v347
        %1361 = vmatpush1.msra.mxu0 %v346
        %1362 = vmatprep.subr.mxu0 %v349
        %1363 = vmatpush1.msra.mxu0 %v348
        %1364 = vmatprep.subr.mxu0 %v351
        %1365 = vmatpush1.msra.mxu0 %v350
        %1366 = vmatprep.subr.mxu0 %v353
        %1367 = vmatpush1.msra.mxu0 %v352
        %1368 = vmatprep.subr.mxu0 0.0
        %1369 = vmatpush1.msra.mxu0 0.0
        %1370 = vmatprep.subr.mxu0 0.0
        %1371 = vmatpush1.msra.mxu0 0.0
        %1372 = vmatprep.subr.mxu0 0.0
        %1373 = vmatpush1.msra.mxu0 0.0
        %1374 = vmatprep.subr.mxu0 0.0
        %1375 = vmatpush1.msra.mxu0 0.0
        %1376 = vmatprep.subr.mxu0 0.0
        %1377 = vmatpush1.msra.mxu0 0.0
        %1378 = vmatprep.subr.mxu0 0.0
        %1379 = vmatpush1.msra.mxu0 0.0
        %1380 = vmatprep.subr.mxu0 0.0
        %1381 = vmatpush1.msra.mxu0 0.0
        %1382 = vmatprep.subr.mxu0 0.0
        %1383 = vmatpush1.msra.mxu0 0.0
        %1384 = vmatprep.subr.mxu0 0.0
        %1385 = vmatpush1.msra.mxu0 0.0
        %1386 = vmatprep.subr.mxu0 0.0
        %1387 = vmatpush1.msra.mxu0 0.0
        %1388 = vmatprep.subr.mxu0 0.0
        %1389 = vmatpush1.msra.mxu0 0.0
        %1390 = vmatprep.subr.mxu0 0.0
        %1391 = vmatpush1.msra.mxu0 0.0
        %1392 = vmatprep.subr.mxu0 0.0
        %1393 = vmatpush1.msra.mxu0 0.0
        %1394 = vmatprep.subr.mxu0 0.0
        %1395 = vmatpush1.msra.mxu0 0.0
        %1396 = vmatprep.subr.mxu0 0.0
        %1397 = vmatpush1.msra.mxu0 0.0
        %1398 = vmatprep.subr.mxu0 0.0
        %1399 = vmatpush1.msra.mxu0 0.0
        %1400 = vmatprep.subr.mxu0 0.0
        %1401 = vmatpush1.msra.mxu0 0.0
        %1402 = vmatprep.subr.mxu0 0.0
        %1403 = vmatpush1.msra.mxu0 0.0
        %1404 = vmatprep.subr.mxu0 0.0
        %1405 = vmatpush1.msra.mxu0 0.0
        %1406 = vmatprep.subr.mxu0 0.0
        %1407 = vmatpush1.msra.mxu0 0.0
        %1408 = vmatprep.subr.mxu0 0.0
        %1409 = vmatpush1.msra.mxu0 0.0
        %1410 = vmatprep.subr.mxu0 0.0
        %1411 = vmatpush1.msra.mxu0 0.0
        %1412 = vmatprep.subr.mxu0 0.0
        %1413 = vmatpush1.msra.mxu0 0.0
        %1414 = vmatprep.subr.mxu0 0.0
        %1415 = vmatpush1.msra.mxu0 0.0
        %1416 = vmatprep.mubr.f32.mxu0 0.0
        %1417 = vmatmul.mubr.f32.gmra.mrb[0].mxu0 %v1350
        %v1418 = vpop.f32.mrb[0].mxu0
        %v1419 = vadd.f32 %v363, %v1418
        %v1420 = vpop.f32.mrb[0].mxu0
        %v1421 = vadd.f32 %v367, %v1420
        %1422 = vdwg.mxu0
        %v1424 = vrot.slane %v1419, 4
        %v1425 = vrot.slane %v1419, 5
        %v1428 = vadd.f32 %v355, %v1424
        %v1429 = vadd.f32 %v356, %v1425
        %v1430 = vxor.u32 %v1428, 2147483648
        %v1431 = vxor.u32 %v1429, 2147483648
        %v1432 = vmul.f32 %v1430, 1.442695
        %v1433 = vpow.pop %v1432
        %v1434 = vmul.f32 %v1431, 1.442695
        %v1435 = vpow.pop %v1434
        %v1436 = vadd.f32 %v1433, 1.0
        %v1437 = vadd.f32 %v1435, 1.0
        %v1438 = vrcp.pop %v1436
        %v1439 = vmul.f32 1.0, %v1438
        %v1440 = vrcp.pop %v1437
        %v1441 = vmul.f32 1.0, %v1440
        %v1442 = vtanh.pop %v1428
        %v1443 = vtanh.pop %v1429
        %v1445 = vrot.slane %v1329, 7
        %1446 = vrot.lane.b32.xlu0 %v1445, 32
        %v1447 = vpop.permute.xlu0 %1446
        %1448 = vrot.lane.b32.xlu0 %v1329, 32
        %v1449 = vpop.permute.xlu0 %1448
        %v1452 = vmul.f32 %v1439, %v1447
        %v1453 = vmul.f32 %v1441, %v1449
        %1456 = vrot.lane.b32.xlu0 %v1442, 64
        %v1457 = vpop.permute.xlu0 %1456
        %1458 = vrot.lane.b32.xlu0 %v1443, 64
        %v1459 = vpop.permute.xlu0 %1458
        %v1462 = vmul.f32 %v1439, %v1457
        %v1463 = vmul.f32 %v1441, %v1459
        %1466 = vrot.lane.b32.xlu0 %v1462, 32
        %v1467 = vpop.permute.xlu0 %1466
        %1468 = vrot.lane.b32.xlu0 %v1463, 32
        %v1469 = vpop.permute.xlu0 %1468
        %v1472 = vadd.f32 %v1452, %v1467
        %v1473 = vadd.f32 %v1453, %v1469
        %v1474 = vtanh.pop %v1472
        %v1475 = vtanh.pop %v1473
        %1478 = vrot.lane.b32.xlu0 %v1474, 64
        %v1479 = vpop.permute.xlu0 %1478
        %1480 = vrot.lane.b32.xlu0 %v1475, 64
        %v1481 = vpop.permute.xlu0 %1480
        %v1484 = vmul.f32 %v1439, %v1479
        %v1485 = vmul.f32 %v1441, %v1481
        %v1487 = vrot.slane %v1421, 5
        %v1488 = vrot.slane %v1421, 6
        %v1491 = vadd.f32 %v357, %v1487
        %v1492 = vadd.f32 %v358, %v1488
        %v1493 = vxor.u32 %v1491, 2147483648
        %v1494 = vxor.u32 %v1492, 2147483648
        %v1495 = vmul.f32 %v1493, 1.442695
        %v1496 = vpow.pop %v1495
        %v1497 = vmul.f32 %v1494, 1.442695
        %v1498 = vpow.pop %v1497
        %v1499 = vadd.f32 %v1496, 1.0
        %v1500 = vadd.f32 %v1498, 1.0
        %v1501 = vrcp.pop %v1499
        %v1502 = vmul.f32 1.0, %v1501
        %v1503 = vrcp.pop %v1500
        %v1504 = vmul.f32 1.0, %v1503
        %v1505 = vtanh.pop %v1491
        %v1506 = vtanh.pop %v1492
        %v1507 = vrot.slane %v1329, 1
        %v1510 = vmul.f32 %v1502, %v1329
        %v1511 = vmul.f32 %v1504, %v1507
        %1514 = vrot.lane.b32.xlu0 %v1505, 64
        %v1515 = vpop.permute.xlu0 %1514
        %1516 = vrot.lane.b32.xlu0 %v1506, 64
        %v1517 = vpop.permute.xlu0 %1516
        %v1520 = vmul.f32 %v1502, %v1515
        %v1521 = vmul.f32 %v1504, %v1517
        %1524 = vrot.lane.b32.xlu0 %v1520, 32
        %v1525 = vpop.permute.xlu0 %1524
        %1526 = vrot.lane.b32.xlu0 %v1521, 32
        %v1527 = vpop.permute.xlu0 %1526
        %v1530 = vadd.f32 %v1510, %v1525
        %v1531 = vadd.f32 %v1511, %v1527
        %v1532 = vtanh.pop %v1530
        %v1533 = vtanh.pop %v1531
        %1536 = vrot.lane.b32.xlu0 %v1532, 64
        %v1537 = vpop.permute.xlu0 %1536
        %1538 = vrot.lane.b32.xlu0 %v1533, 64
        %v1539 = vpop.permute.xlu0 %1538
        %v1542 = vmul.f32 %v1502, %v1537
        %v1543 = vmul.f32 %v1504, %v1539
        %v1546 = vrot.slane %v1485, 7
        %vm1547 = vcmask 1045509
        %v1548 = vsel %vm1547, %v1546, %v1484
        %1549 = vrot.lane.b32.xlu0 %v1548, 32
        %v1550 = vpop.permute.xlu0 %1549
        %v1554 = vrot.slane %v1542, 7
        %v1555 = vrot.slane %v1543, 6
        %v1556 = vsel %vm1547, %v1555, %v1554
        %1557 = vrot.lane.b32.xlu0 %v1556, 64
        %v1558 = vpop.permute.xlu0 %1557
        %v1560 = vsel %vm581, %v1550, %v1558
        %v1563 = vrot.slane %v1473, 7
        %v1564 = vsel %vm1547, %v1563, %v1472
        %1565 = vrot.lane.b32.xlu0 %v1564, 96
        %v1566 = vpop.permute.xlu0 %1565
        %v1570 = vrot.slane %v1530, 7
        %v1571 = vrot.slane %v1531, 6
        %v1572 = vsel %vm1547, %v1571, %v1570
        %v1574 = vsel %vm581, %v1566, %v1572
        %1575 = vrot.lane.b32.xlu0 %v1484, 32
        %v1576 = vpop.permute.xlu0 %1575
        %1577 = vrot.lane.b32.xlu0 %v1485, 32
        %v1578 = vpop.permute.xlu0 %1577
        %1581 = vst.msk [vmem:[%s320] sm:$0x10] %vm1345, %v1576
        %1582 = vst.msk [vmem:[%s320 + $0x8] sm:$0x10] %vm1345, %v1578
        %1583 = vrot.lane.b32.xlu0 %v1542, 32
        %v1584 = vpop.permute.xlu0 %1583
        %1585 = vrot.lane.b32.xlu0 %v1543, 32
        %v1586 = vpop.permute.xlu0 %1585
        %1589 = vst.msk [vmem:[%s326] sm:$0x8] %vm1336, %v1584
        %1590 = vst.msk [vmem:[%s326 + $0x8] sm:$0x8] %vm1336, %v1586
        %v1592 = vrot.slane %v1560, 4
        %v1593 = vsel %vm370, %v1592, 0
        %1595 = vmatprep.subr.mxu0 %v339
        %1596 = vmatpush1.msra.mxu0 %v338
        %1597 = vmatprep.subr.mxu0 %v341
        %1598 = vmatpush1.msra.mxu0 %v340
        %1599 = vmatprep.subr.mxu0 %v343
        %1600 = vmatpush1.msra.mxu0 %v342
        %1601 = vmatprep.subr.mxu0 %v345
        %1602 = vmatpush1.msra.mxu0 %v344
        %1603 = vmatprep.subr.mxu0 %v347
        %1604 = vmatpush1.msra.mxu0 %v346
        %1605 = vmatprep.subr.mxu0 %v349
        %1606 = vmatpush1.msra.mxu0 %v348
        %1607 = vmatprep.subr.mxu0 %v351
        %1608 = vmatpush1.msra.mxu0 %v350
        %1609 = vmatprep.subr.mxu0 %v353
        %1610 = vmatpush1.msra.mxu0 %v352
        %1611 = vmatprep.subr.mxu0 0.0
        %1612 = vmatpush1.msra.mxu0 0.0
        %1613 = vmatprep.subr.mxu0 0.0
        %1614 = vmatpush1.msra.mxu0 0.0
        %1615 = vmatprep.subr.mxu0 0.0
        %1616 = vmatpush1.msra.mxu0 0.0
        %1617 = vmatprep.subr.mxu0 0.0
        %1618 = vmatpush1.msra.mxu0 0.0
        %1619 = vmatprep.subr.mxu0 0.0
        %1620 = vmatpush1.msra.mxu0 0.0
        %1621 = vmatprep.subr.mxu0 0.0
        %1622 = vmatpush1.msra.mxu0 0.0
        %1623 = vmatprep.subr.mxu0 0.0
        %1624 = vmatpush1.msra.mxu0 0.0
        %1625 = vmatprep.subr.mxu0 0.0
        %1626 = vmatpush1.msra.mxu0 0.0
        %1627 = vmatprep.subr.mxu0 0.0
        %1628 = vmatpush1.msra.mxu0 0.0
        %1629 = vmatprep.subr.mxu0 0.0
        %1630 = vmatpush1.msra.mxu0 0.0
        %1631 = vmatprep.subr.mxu0 0.0
        %1632 = vmatpush1.msra.mxu0 0.0
        %1633 = vmatprep.subr.mxu0 0.0
        %1634 = vmatpush1.msra.mxu0 0.0
        %1635 = vmatprep.subr.mxu0 0.0
        %1636 = vmatpush1.msra.mxu0 0.0
        %1637 = vmatprep.subr.mxu0 0.0
        %1638 = vmatpush1.msra.mxu0 0.0
        %1639 = vmatprep.subr.mxu0 0.0
        %1640 = vmatpush1.msra.mxu0 0.0
        %1641 = vmatprep.subr.mxu0 0.0
        %1642 = vmatpush1.msra.mxu0 0.0
        %1643 = vmatprep.subr.mxu0 0.0
        %1644 = vmatpush1.msra.mxu0 0.0
        %1645 = vmatprep.subr.mxu0 0.0
        %1646 = vmatpush1.msra.mxu0 0.0
        %1647 = vmatprep.subr.mxu0 0.0
        %1648 = vmatpush1.msra.mxu0 0.0
        %1649 = vmatprep.subr.mxu0 0.0
        %1650 = vmatpush1.msra.mxu0 0.0
        %1651 = vmatprep.subr.mxu0 0.0
        %1652 = vmatpush1.msra.mxu0 0.0
        %1653 = vmatprep.subr.mxu0 0.0
        %1654 = vmatpush1.msra.mxu0 0.0
        %1655 = vmatprep.subr.mxu0 0.0
        %1656 = vmatpush1.msra.mxu0 0.0
        %1657 = vmatprep.subr.mxu0 0.0
        %1658 = vmatpush1.msra.mxu0 0.0
        %1659 = vmatprep.mubr.f32.mxu0 0.0
        %1660 = vmatmul.mubr.f32.gmra.mrb[0].mxu0 %v1593
        %v1661 = vpop.f32.mrb[0].mxu0
        %v1662 = vadd.f32 %v363, %v1661
        %v1663 = vpop.f32.mrb[0].mxu0
        %v1664 = vadd.f32 %v367, %v1663
        %1665 = vdwg.mxu0
        %v1667 = vrot.slane %v1662, 3
        %v1668 = vrot.slane %v1662, 4
        %v1671 = vadd.f32 %v355, %v1667
        %v1672 = vadd.f32 %v356, %v1668
        %v1673 = vxor.u32 %v1671, 2147483648
        %v1674 = vxor.u32 %v1672, 2147483648
        %v1675 = vmul.f32 %v1673, 1.442695
        %v1676 = vpow.pop %v1675
        %v1677 = vmul.f32 %v1674, 1.442695
        %v1678 = vpow.pop %v1677
        %v1679 = vadd.f32 %v1676, 1.0
        %v1680 = vadd.f32 %v1678, 1.0
        %v1681 = vrcp.pop %v1679
        %v1682 = vmul.f32 1.0, %v1681
        %v1683 = vrcp.pop %v1680
        %v1684 = vmul.f32 1.0, %v1683
        %v1685 = vtanh.pop %v1671
        %v1686 = vtanh.pop %v1672
        %v1688 = vrot.slane %v1574, 7
        %1689 = vrot.lane.b32.xlu0 %v1688, 32
        %v1690 = vpop.permute.xlu0 %1689
        %1691 = vrot.lane.b32.xlu0 %v1574, 32
        %v1692 = vpop.permute.xlu0 %1691
        %v1695 = vmul.f32 %v1682, %v1690
        %v1696 = vmul.f32 %v1684, %v1692
        %1699 = vrot.lane.b32.xlu0 %v1685, 64
        %v1700 = vpop.permute.xlu0 %1699
        %1701 = vrot.lane.b32.xlu0 %v1686, 64
        %v1702 = vpop.permute.xlu0 %1701
        %v1705 = vmul.f32 %v1682, %v1700
        %v1706 = vmul.f32 %v1684, %v1702
        %1709 = vrot.lane.b32.xlu0 %v1705, 32
        %v1710 = vpop.permute.xlu0 %1709
        %1711 = vrot.lane.b32.xlu0 %v1706, 32
        %v1712 = vpop.permute.xlu0 %1711
        %v1715 = vadd.f32 %v1695, %v1710
        %v1716 = vadd.f32 %v1696, %v1712
        %v1717 = vtanh.pop %v1715
        %v1718 = vtanh.pop %v1716
        %1721 = vrot.lane.b32.xlu0 %v1717, 64
        %v1722 = vpop.permute.xlu0 %1721
        %1723 = vrot.lane.b32.xlu0 %v1718, 64
        %v1724 = vpop.permute.xlu0 %1723
        %v1727 = vmul.f32 %v1682, %v1722
        %v1728 = vmul.f32 %v1684, %v1724
        %v1730 = vrot.slane %v1664, 6
        %v1731 = vrot.slane %v1664, 7
        %v1734 = vadd.f32 %v357, %v1730
        %v1735 = vadd.f32 %v358, %v1731
        %v1736 = vxor.u32 %v1734, 2147483648
        %v1737 = vxor.u32 %v1735, 2147483648
        %v1738 = vmul.f32 %v1736, 1.442695
        %v1739 = vpow.pop %v1738
        %v1740 = vmul.f32 %v1737, 1.442695
        %v1741 = vpow.pop %v1740
        %v1742 = vadd.f32 %v1739, 1.0
        %v1743 = vadd.f32 %v1741, 1.0
        %v1744 = vrcp.pop %v1742
        %v1745 = vmul.f32 1.0, %v1744
        %v1746 = vrcp.pop %v1743
        %v1747 = vmul.f32 1.0, %v1746
        %v1748 = vtanh.pop %v1734
        %v1749 = vtanh.pop %v1735
        %v1750 = vrot.slane %v1574, 2
        %v1751 = vrot.slane %v1574, 3
        %v1754 = vmul.f32 %v1745, %v1750
        %v1755 = vmul.f32 %v1747, %v1751
        %1758 = vrot.lane.b32.xlu0 %v1748, 64
        %v1759 = vpop.permute.xlu0 %1758
        %1760 = vrot.lane.b32.xlu0 %v1749, 64
        %v1761 = vpop.permute.xlu0 %1760
        %v1764 = vmul.f32 %v1745, %v1759
        %v1765 = vmul.f32 %v1747, %v1761
        %1768 = vrot.lane.b32.xlu0 %v1764, 32
        %v1769 = vpop.permute.xlu0 %1768
        %1770 = vrot.lane.b32.xlu0 %v1765, 32
        %v1771 = vpop.permute.xlu0 %1770
        %v1774 = vadd.f32 %v1754, %v1769
        %v1775 = vadd.f32 %v1755, %v1771
        %v1776 = vtanh.pop %v1774
        %v1777 = vtanh.pop %v1775
        %1780 = vrot.lane.b32.xlu0 %v1776, 64
        %v1781 = vpop.permute.xlu0 %1780
        %1782 = vrot.lane.b32.xlu0 %v1777, 64
        %v1783 = vpop.permute.xlu0 %1782
        %v1786 = vmul.f32 %v1745, %v1781
        %v1787 = vmul.f32 %v1747, %v1783
        %v1790 = vrot.slane %v1728, 7
        %vm1791 = vcmask 1046534
        %v1792 = vsel %vm1791, %v1790, %v1727
        %1793 = vrot.lane.b32.xlu0 %v1792, 32
        %v1794 = vpop.permute.xlu0 %1793
        %v1798 = vrot.slane %v1786, 5
        %v1799 = vrot.slane %v1787, 4
        %v1800 = vsel %vm1791, %v1799, %v1798
        %1801 = vrot.lane.b32.xlu0 %v1800, 64
        %v1802 = vpop.permute.xlu0 %1801
        %v1804 = vsel %vm581, %v1794, %v1802
        %v1807 = vrot.slane %v1716, 7
        %v1808 = vsel %vm1791, %v1807, %v1715
        %1809 = vrot.lane.b32.xlu0 %v1808, 96
        %v1810 = vpop.permute.xlu0 %1809
        %v1814 = vrot.slane %v1774, 5
        %v1815 = vrot.slane %v1775, 4
        %v1816 = vsel %vm1791, %v1815, %v1814
        %v1818 = vsel %vm581, %v1810, %v1816
        %1819 = vrot.lane.b32.xlu0 %v1727, 32
        %v1820 = vpop.permute.xlu0 %1819
        %1821 = vrot.lane.b32.xlu0 %v1728, 32
        %v1822 = vpop.permute.xlu0 %1821
        %1825 = vst.msk [vmem:[%s320] sm:$0x20] %vm1102, %v1820
        %1826 = vst.msk [vmem:[%s320 + $0x8] sm:$0x20] %vm1102, %v1822
        %1827 = vrot.lane.b32.xlu0 %v1786, 32
        %v1828 = vpop.permute.xlu0 %1827
        %1829 = vrot.lane.b32.xlu0 %v1787, 32
        %v1830 = vpop.permute.xlu0 %1829
        %1833 = vst.msk [vmem:[%s326] sm:$0x4] %vm1093, %v1828
        %1834 = vst.msk [vmem:[%s326 + $0x8] sm:$0x4] %vm1093, %v1830
        %v1836 = vrot.slane %v1804, 5
        %v1837 = vsel %vm370, %v1836, 0
        %1839 = vmatprep.subr.mxu0 %v339
        %1840 = vmatpush1.msra.mxu0 %v338
        %1841 = vmatprep.subr.mxu0 %v341
        %1842 = vmatpush1.msra.mxu0 %v340
        %1843 = vmatprep.subr.mxu0 %v343
        %1844 = vmatpush1.msra.mxu0 %v342
        %1845 = vmatprep.subr.mxu0 %v345
        %1846 = vmatpush1.msra.mxu0 %v344
        %1847 = vmatprep.subr.mxu0 %v347
        %1848 = vmatpush1.msra.mxu0 %v346
        %1849 = vmatprep.subr.mxu0 %v349
        %1850 = vmatpush1.msra.mxu0 %v348
        %1851 = vmatprep.subr.mxu0 %v351
        %1852 = vmatpush1.msra.mxu0 %v350
        %1853 = vmatprep.subr.mxu0 %v353
        %1854 = vmatpush1.msra.mxu0 %v352
        %1855 = vmatprep.subr.mxu0 0.0
        %1856 = vmatpush1.msra.mxu0 0.0
        %1857 = vmatprep.subr.mxu0 0.0
        %1858 = vmatpush1.msra.mxu0 0.0
        %1859 = vmatprep.subr.mxu0 0.0
        %1860 = vmatpush1.msra.mxu0 0.0
        %1861 = vmatprep.subr.mxu0 0.0
        %1862 = vmatpush1.msra.mxu0 0.0
        %1863 = vmatprep.subr.mxu0 0.0
        %1864 = vmatpush1.msra.mxu0 0.0
        %1865 = vmatprep.subr.mxu0 0.0
        %1866 = vmatpush1.msra.mxu0 0.0
        %1867 = vmatprep.subr.mxu0 0.0
        %1868 = vmatpush1.msra.mxu0 0.0
        %1869 = vmatprep.subr.mxu0 0.0
        %1870 = vmatpush1.msra.mxu0 0.0
        %1871 = vmatprep.subr.mxu0 0.0
        %1872 = vmatpush1.msra.mxu0 0.0
        %1873 = vmatprep.subr.mxu0 0.0
        %1874 = vmatpush1.msra.mxu0 0.0
        %1875 = vmatprep.subr.mxu0 0.0
        %1876 = vmatpush1.msra.mxu0 0.0
        %1877 = vmatprep.subr.mxu0 0.0
        %1878 = vmatpush1.msra.mxu0 0.0
        %1879 = vmatprep.subr.mxu0 0.0
        %1880 = vmatpush1.msra.mxu0 0.0
        %1881 = vmatprep.subr.mxu0 0.0
        %1882 = vmatpush1.msra.mxu0 0.0
        %1883 = vmatprep.subr.mxu0 0.0
        %1884 = vmatpush1.msra.mxu0 0.0
        %1885 = vmatprep.subr.mxu0 0.0
        %1886 = vmatpush1.msra.mxu0 0.0
        %1887 = vmatprep.subr.mxu0 0.0
        %1888 = vmatpush1.msra.mxu0 0.0
        %1889 = vmatprep.subr.mxu0 0.0
        %1890 = vmatpush1.msra.mxu0 0.0
        %1891 = vmatprep.subr.mxu0 0.0
        %1892 = vmatpush1.msra.mxu0 0.0
        %1893 = vmatprep.subr.mxu0 0.0
        %1894 = vmatpush1.msra.mxu0 0.0
        %1895 = vmatprep.subr.mxu0 0.0
        %1896 = vmatpush1.msra.mxu0 0.0
        %1897 = vmatprep.subr.mxu0 0.0
        %1898 = vmatpush1.msra.mxu0 0.0
        %1899 = vmatprep.subr.mxu0 0.0
        %1900 = vmatpush1.msra.mxu0 0.0
        %1901 = vmatprep.subr.mxu0 0.0
        %1902 = vmatpush1.msra.mxu0 0.0
        %1903 = vmatprep.mubr.f32.mxu0 0.0
        %1904 = vmatmul.mubr.f32.gmra.mrb[0].mxu0 %v1837
        %v1905 = vpop.f32.mrb[0].mxu0
        %v1906 = vadd.f32 %v363, %v1905
        %v1907 = vpop.f32.mrb[0].mxu0
        %v1908 = vadd.f32 %v367, %v1907
        %1909 = vdwg.mxu0
        %v1911 = vrot.slane %v1906, 2
        %v1912 = vrot.slane %v1906, 3
        %v1915 = vadd.f32 %v355, %v1911
        %v1916 = vadd.f32 %v356, %v1912
        %v1917 = vxor.u32 %v1915, 2147483648
        %v1918 = vxor.u32 %v1916, 2147483648
        %v1919 = vmul.f32 %v1917, 1.442695
        %v1920 = vpow.pop %v1919
        %v1921 = vmul.f32 %v1918, 1.442695
        %v1922 = vpow.pop %v1921
        %v1923 = vadd.f32 %v1920, 1.0
        %v1924 = vadd.f32 %v1922, 1.0
        %v1925 = vrcp.pop %v1923
        %v1926 = vmul.f32 1.0, %v1925
        %v1927 = vrcp.pop %v1924
        %v1928 = vmul.f32 1.0, %v1927
        %v1929 = vtanh.pop %v1915
        %v1930 = vtanh.pop %v1916
        %v1932 = vrot.slane %v1818, 7
        %1933 = vrot.lane.b32.xlu0 %v1932, 32
        %v1934 = vpop.permute.xlu0 %1933
        %1935 = vrot.lane.b32.xlu0 %v1818, 32
        %v1936 = vpop.permute.xlu0 %1935
        %v1939 = vmul.f32 %v1926, %v1934
        %v1940 = vmul.f32 %v1928, %v1936
        %1943 = vrot.lane.b32.xlu0 %v1929, 64
        %v1944 = vpop.permute.xlu0 %1943
        %1945 = vrot.lane.b32.xlu0 %v1930, 64
        %v1946 = vpop.permute.xlu0 %1945
        %v1949 = vmul.f32 %v1926, %v1944
        %v1950 = vmul.f32 %v1928, %v1946
        %1953 = vrot.lane.b32.xlu0 %v1949, 32
        %v1954 = vpop.permute.xlu0 %1953
        %1955 = vrot.lane.b32.xlu0 %v1950, 32
        %v1956 = vpop.permute.xlu0 %1955
        %v1959 = vadd.f32 %v1939, %v1954
        %v1960 = vadd.f32 %v1940, %v1956
        %v1961 = vtanh.pop %v1959
        %v1962 = vtanh.pop %v1960
        %1965 = vrot.lane.b32.xlu0 %v1961, 64
        %v1966 = vpop.permute.xlu0 %1965
        %1967 = vrot.lane.b32.xlu0 %v1962, 64
        %v1968 = vpop.permute.xlu0 %1967
        %v1971 = vmul.f32 %v1926, %v1966
        %v1972 = vmul.f32 %v1928, %v1968
        %v1974 = vrot.slane %v1908, 7
        %v1977 = vadd.f32 %v357, %v1974
        %v1978 = vadd.f32 %v358, %v1908
        %v1979 = vxor.u32 %v1977, 2147483648
        %v1980 = vxor.u32 %v1978, 2147483648
        %v1981 = vmul.f32 %v1979, 1.442695
        %v1982 = vpow.pop %v1981
        %v1983 = vmul.f32 %v1980, 1.442695
        %v1984 = vpow.pop %v1983
        %v1985 = vadd.f32 %v1982, 1.0
        %v1986 = vadd.f32 %v1984, 1.0
        %v1987 = vrcp.pop %v1985
        %v1988 = vmul.f32 1.0, %v1987
        %v1989 = vrcp.pop %v1986
        %v1990 = vmul.f32 1.0, %v1989
        %v1991 = vtanh.pop %v1977
        %v1992 = vtanh.pop %v1978
        %v1993 = vrot.slane %v1818, 4
        %v1994 = vrot.slane %v1818, 5
        %v1997 = vmul.f32 %v1988, %v1993
        %v1998 = vmul.f32 %v1990, %v1994
        %2001 = vrot.lane.b32.xlu0 %v1991, 64
        %v2002 = vpop.permute.xlu0 %2001
        %2003 = vrot.lane.b32.xlu0 %v1992, 64
        %v2004 = vpop.permute.xlu0 %2003
        %v2007 = vmul.f32 %v1988, %v2002
        %v2008 = vmul.f32 %v1990, %v2004
        %2011 = vrot.lane.b32.xlu0 %v2007, 32
        %v2012 = vpop.permute.xlu0 %2011
        %2013 = vrot.lane.b32.xlu0 %v2008, 32
        %v2014 = vpop.permute.xlu0 %2013
        %v2017 = vadd.f32 %v1997, %v2012
        %v2018 = vadd.f32 %v1998, %v2014
        %v2019 = vtanh.pop %v2017
        %v2020 = vtanh.pop %v2018
        %2023 = vrot.lane.b32.xlu0 %v2019, 64
        %v2024 = vpop.permute.xlu0 %2023
        %2025 = vrot.lane.b32.xlu0 %v2020, 64
        %v2026 = vpop.permute.xlu0 %2025
        %v2029 = vmul.f32 %v1988, %v2024
        %v2030 = vmul.f32 %v1990, %v2026
        %v2033 = vrot.slane %v1972, 7
        %vm2034 = vcmask 1047559
        %v2035 = vsel %vm2034, %v2033, %v1971
        %2036 = vrot.lane.b32.xlu0 %v2035, 32
        %v2037 = vpop.permute.xlu0 %2036
        %v2041 = vrot.slane %v2029, 3
        %v2042 = vrot.slane %v2030, 2
        %v2043 = vsel %vm2034, %v2042, %v2041
        %2044 = vrot.lane.b32.xlu0 %v2043, 64
        %v2045 = vpop.permute.xlu0 %2044
        %v2047 = vsel %vm581, %v2037, %v2045
        %v2050 = vrot.slane %v1960, 7
        %v2051 = vsel %vm2034, %v2050, %v1959
        %2052 = vrot.lane.b32.xlu0 %v2051, 96
        %v2053 = vpop.permute.xlu0 %2052
        %v2057 = vrot.slane %v2017, 3
        %v2058 = vrot.slane %v2018, 2
        %v2059 = vsel %vm2034, %v2058, %v2057
        %v2061 = vsel %vm581, %v2053, %v2059
        %2062 = vrot.lane.b32.xlu0 %v1971, 32
        %v2063 = vpop.permute.xlu0 %2062
        %2064 = vrot.lane.b32.xlu0 %v1972, 32
        %v2065 = vpop.permute.xlu0 %2064
        %2068 = vst.msk [vmem:[%s320] sm:$0x40] %vm856, %v2063
        %2069 = vst.msk [vmem:[%s320 + $0x8] sm:$0x40] %vm856, %v2065
        %2070 = vrot.lane.b32.xlu0 %v2029, 32
        %v2071 = vpop.permute.xlu0 %2070
        %2072 = vrot.lane.b32.xlu0 %v2030, 32
        %v2073 = vpop.permute.xlu0 %2072
        %2076 = vst.msk [vmem:[%s326] sm:$0x2] %vm847, %v2071
        %2077 = vst.msk [vmem:[%s326 + $0x8] sm:$0x2] %vm847, %v2073
        %v2079 = vrot.slane %v2047, 6
        %v2080 = vsel %vm370, %v2079, 0
        %2082 = vmatprep.subr.mxu0 %v339
        %2083 = vmatpush1.msra.mxu0 %v338
        %2084 = vmatprep.subr.mxu0 %v341
        %2085 = vmatpush1.msra.mxu0 %v340
        %2086 = vmatprep.subr.mxu0 %v343
        %2087 = vmatpush1.msra.mxu0 %v342
        %2088 = vmatprep.subr.mxu0 %v345
        %2089 = vmatpush1.msra.mxu0 %v344
        %2090 = vmatprep.subr.mxu0 %v347
        %2091 = vmatpush1.msra.mxu0 %v346
        %2092 = vmatprep.subr.mxu0 %v349
        %2093 = vmatpush1.msra.mxu0 %v348
        %2094 = vmatprep.subr.mxu0 %v351
        %2095 = vmatpush1.msra.mxu0 %v350
        %2096 = vmatprep.subr.mxu0 %v353
        %2097 = vmatpush1.msra.mxu0 %v352
        %2098 = vmatprep.subr.mxu0 0.0
        %2099 = vmatpush1.msra.mxu0 0.0
        %2100 = vmatprep.subr.mxu0 0.0
        %2101 = vmatpush1.msra.mxu0 0.0
        %2102 = vmatprep.subr.mxu0 0.0
        %2103 = vmatpush1.msra.mxu0 0.0
        %2104 = vmatprep.subr.mxu0 0.0
        %2105 = vmatpush1.msra.mxu0 0.0
        %2106 = vmatprep.subr.mxu0 0.0
        %2107 = vmatpush1.msra.mxu0 0.0
        %2108 = vmatprep.subr.mxu0 0.0
        %2109 = vmatpush1.msra.mxu0 0.0
        %2110 = vmatprep.subr.mxu0 0.0
        %2111 = vmatpush1.msra.mxu0 0.0
        %2112 = vmatprep.subr.mxu0 0.0
        %2113 = vmatpush1.msra.mxu0 0.0
        %2114 = vmatprep.subr.mxu0 0.0
        %2115 = vmatpush1.msra.mxu0 0.0
        %2116 = vmatprep.subr.mxu0 0.0
        %2117 = vmatpush1.msra.mxu0 0.0
        %2118 = vmatprep.subr.mxu0 0.0
        %2119 = vmatpush1.msra.mxu0 0.0
        %2120 = vmatprep.subr.mxu0 0.0
        %2121 = vmatpush1.msra.mxu0 0.0
        %2122 = vmatprep.subr.mxu0 0.0
        %2123 = vmatpush1.msra.mxu0 0.0
        %2124 = vmatprep.subr.mxu0 0.0
        %2125 = vmatpush1.msra.mxu0 0.0
        %2126 = vmatprep.subr.mxu0 0.0
        %2127 = vmatpush1.msra.mxu0 0.0
        %2128 = vmatprep.subr.mxu0 0.0
        %2129 = vmatpush1.msra.mxu0 0.0
        %2130 = vmatprep.subr.mxu0 0.0
        %2131 = vmatpush1.msra.mxu0 0.0
        %2132 = vmatprep.subr.mxu0 0.0
        %2133 = vmatpush1.msra.mxu0 0.0
        %2134 = vmatprep.subr.mxu0 0.0
        %2135 = vmatpush1.msra.mxu0 0.0
        %2136 = vmatprep.subr.mxu0 0.0
        %2137 = vmatpush1.msra.mxu0 0.0
        %2138 = vmatprep.subr.mxu0 0.0
        %2139 = vmatpush1.msra.mxu0 0.0
        %2140 = vmatprep.subr.mxu0 0.0
        %2141 = vmatpush1.msra.mxu0 0.0
        %2142 = vmatprep.subr.mxu0 0.0
        %2143 = vmatpush1.msra.mxu0 0.0
        %2144 = vmatprep.subr.mxu0 0.0
        %2145 = vmatpush1.msra.mxu0 0.0
        %2146 = vmatprep.mubr.f32.mxu0 0.0
        %2147 = vmatmul.mubr.f32.gmra.mrb[0].mxu0 %v2080
        %v2148 = vpop.f32.mrb[0].mxu0
        %v2149 = vadd.f32 %v363, %v2148
        %v2150 = vpop.f32.mrb[0].mxu0
        %v2151 = vadd.f32 %v367, %v2150
        %2152 = vdwg.mxu0
        %v2154 = vrot.slane %v2149, 1
        %v2155 = vrot.slane %v2149, 2
        %v2158 = vadd.f32 %v355, %v2154
        %v2159 = vadd.f32 %v356, %v2155
        %v2160 = vxor.u32 %v2158, 2147483648
        %v2161 = vxor.u32 %v2159, 2147483648
        %v2162 = vmul.f32 %v2160, 1.442695
        %v2163 = vpow.pop %v2162
        %v2164 = vmul.f32 %v2161, 1.442695
        %v2165 = vpow.pop %v2164
        %v2166 = vadd.f32 %v2163, 1.0
        %v2167 = vadd.f32 %v2165, 1.0
        %v2168 = vrcp.pop %v2166
        %v2169 = vmul.f32 1.0, %v2168
        %v2170 = vrcp.pop %v2167
        %v2171 = vmul.f32 1.0, %v2170
        %v2172 = vtanh.pop %v2158
        %v2173 = vtanh.pop %v2159
        %v2175 = vrot.slane %v2061, 7
        %2176 = vrot.lane.b32.xlu0 %v2175, 32
        %v2177 = vpop.permute.xlu0 %2176
        %2178 = vrot.lane.b32.xlu0 %v2061, 32
        %v2179 = vpop.permute.xlu0 %2178
        %v2182 = vmul.f32 %v2169, %v2177
        %v2183 = vmul.f32 %v2171, %v2179
        %2186 = vrot.lane.b32.xlu0 %v2172, 64
        %v2187 = vpop.permute.xlu0 %2186
        %2188 = vrot.lane.b32.xlu0 %v2173, 64
        %v2189 = vpop.permute.xlu0 %2188
        %v2192 = vmul.f32 %v2169, %v2187
        %v2193 = vmul.f32 %v2171, %v2189
        %2196 = vrot.lane.b32.xlu0 %v2192, 32
        %v2197 = vpop.permute.xlu0 %2196
        %2198 = vrot.lane.b32.xlu0 %v2193, 32
        %v2199 = vpop.permute.xlu0 %2198
        %v2202 = vadd.f32 %v2182, %v2197
        %v2203 = vadd.f32 %v2183, %v2199
        %v2204 = vtanh.pop %v2202
        %v2205 = vtanh.pop %v2203
        %2208 = vrot.lane.b32.xlu0 %v2204, 64
        %v2209 = vpop.permute.xlu0 %2208
        %2210 = vrot.lane.b32.xlu0 %v2205, 64
        %v2211 = vpop.permute.xlu0 %2210
        %v2214 = vmul.f32 %v2169, %v2209
        %v2215 = vmul.f32 %v2171, %v2211
        %v2217 = vrot.slane %v2151, 1
        %v2220 = vadd.f32 %v357, %v2151
        %v2221 = vadd.f32 %v358, %v2217
        %v2222 = vxor.u32 %v2220, 2147483648
        %v2223 = vxor.u32 %v2221, 2147483648
        %v2224 = vmul.f32 %v2222, 1.442695
        %v2225 = vpow.pop %v2224
        %v2226 = vmul.f32 %v2223, 1.442695
        %v2227 = vpow.pop %v2226
        %v2228 = vadd.f32 %v2225, 1.0
        %v2229 = vadd.f32 %v2227, 1.0
        %v2230 = vrcp.pop %v2228
        %v2231 = vmul.f32 1.0, %v2230
        %v2232 = vrcp.pop %v2229
        %v2233 = vmul.f32 1.0, %v2232
        %v2234 = vtanh.pop %v2220
        %v2235 = vtanh.pop %v2221
        %v2236 = vrot.slane %v2061, 6
        %v2239 = vmul.f32 %v2231, %v2236
        %v2240 = vmul.f32 %v2233, %v2175
        %2243 = vrot.lane.b32.xlu0 %v2234, 64
        %v2244 = vpop.permute.xlu0 %2243
        %2245 = vrot.lane.b32.xlu0 %v2235, 64
        %v2246 = vpop.permute.xlu0 %2245
        %v2249 = vmul.f32 %v2231, %v2244
        %v2250 = vmul.f32 %v2233, %v2246
        %2253 = vrot.lane.b32.xlu0 %v2249, 32
        %v2254 = vpop.permute.xlu0 %2253
        %2255 = vrot.lane.b32.xlu0 %v2250, 32
        %v2256 = vpop.permute.xlu0 %2255
        %v2259 = vadd.f32 %v2239, %v2254
        %v2260 = vadd.f32 %v2240, %v2256
        %v2261 = vtanh.pop %v2259
        %v2262 = vtanh.pop %v2260
        %2265 = vrot.lane.b32.xlu0 %v2261, 64
        %v2266 = vpop.permute.xlu0 %2265
        %2267 = vrot.lane.b32.xlu0 %v2262, 64
        %v2268 = vpop.permute.xlu0 %2267
        %v2271 = vmul.f32 %v2231, %v2266
        %v2272 = vmul.f32 %v2233, %v2268
        %v2275 = vrot.slane %v2215, 7
        %2276 = vrot.lane.b32.xlu0 %v2214, 32
        %v2277 = vpop.permute.xlu0 %2276
        %2278 = vrot.lane.b32.xlu0 %v2275, 32
        %v2279 = vpop.permute.xlu0 %2278
        %v2284 = vrot.slane %v2271, 1
        %2285 = vrot.lane.b32.xlu0 %v2284, 64
        %v2286 = vpop.permute.xlu0 %2285
        %2287 = vrot.lane.b32.xlu0 %v2272, 64
        %v2288 = vpop.permute.xlu0 %2287
        %v2291 = vsel %vm581, %v2277, %v2286
        %v2292 = vsel %vm581, %v2279, %v2288
        %v2295 = vrot.slane %v2203, 7
        %2296 = vrot.lane.b32.xlu0 %v2202, 96
        %v2297 = vpop.permute.xlu0 %2296
        %2298 = vrot.lane.b32.xlu0 %v2295, 96
        %v2299 = vpop.permute.xlu0 %2298
        %v2304 = vrot.slane %v2259, 1
        %v2307 = vsel %vm581, %v2297, %v2304
        %v2308 = vsel %vm581, %v2299, %v2260
        %2309 = vrot.lane.b32.xlu0 %v2215, 32
        %v2310 = vpop.permute.xlu0 %2309
        %2312 = vst.msk [vmem:[%s320] sm:$0x80] %vm612, %v2277
        %2313 = vst.msk [vmem:[%s320 + $0x8] sm:$0x80] %vm612, %v2310
        %2314 = vrot.lane.b32.xlu0 %v2271, 32
        %v2315 = vpop.permute.xlu0 %2314
        %2316 = vrot.lane.b32.xlu0 %v2272, 32
        %v2317 = vpop.permute.xlu0 %2316
        %2320 = vst.msk [vmem:[%s326] sm:$0x1] %vm603, %v2315
        %2321 = vst.msk [vmem:[%s326 + $0x8] sm:$0x1] %vm603, %v2317
        %vm2322 = vcmask 523271
        %2323 = vst.msk [vmem:[#allocation2 - $0x7] sm:$0x80] %vm2322, %v2291
        %vm2324 = vcmask 516096
        %2325 = vst.msk [vmem:[#allocation2 + $0x1] sm:$0x1] %vm2324, %v2292
        %2326 = vst.msk [vmem:[#allocation3 - $0x7] sm:$0x80] %vm2322, %v2307
        %2327 = vst.msk [vmem:[#allocation3 + $0x1] sm:$0x1] %vm2324, %v2308
        %s2328 = sand.u32 %s121, 1
        %s2329 = sand.u32 %s121, 1
        %s2330 = smul.addr %s2329, 16
        %s2331 = scalar_lea.vmem [#allocation6], %s2330
        %s2332 = sand.u32 %s149, 1
        %s2333 = sand.u32 %s149, 1
        %s2334 = smul.addr %s2333, 16
        %s2335 = scalar_lea.vmem [#allocation7], %s2334
        // Predicated region
        $region117: #{contextual_embedding.3} parent=103 // pred_check
          %p2336 = pneg %p131
        $region118: #{contextual_embedding.3} parent=103 // pred_check_branch
          %2338 = sbr.rel (%p2336) target = $region120
        $region119: #{contextual_embedding.3} parent=103 // pred_region
          %s2339 = smul.addr %s17, 8
          %s2340 = scalar_lea.vmem %s4, %s2339
          // Predicated region
          $region121: #{contextual_embedding.3} parent=119 // pred_check
            _
          $region122: #{contextual_embedding.3} parent=119 // pred_check_branch
            %2342 = sbr.rel (0) target = $region124
          $region123: #{contextual_embedding.3} parent=119 // pred_region
            // Predicated region
            $region125: #{contextual_embedding.3} parent=123 // pred_check
              _
            $region126: #{contextual_embedding.3} parent=123 // pred_check_branch
              %2344 = sbr.rel (0) target = $region128
            $region127: #{contextual_embedding.3} parent=123 // pred_region
              // Predicated region
              $region140: #{contextual_embedding.3} parent=127 // pred_check
                _
              $region141: #{contextual_embedding.3} parent=127 // pred_check_branch
                %2361 = sbr.rel (0) target = $region143
              $region142: #{contextual_embedding.3} parent=127 // pred_region
                loop: start=0, step=1, limit=1
                $region144: #{contextual_embedding.3} parent=142 // loop_pre_header
                  _
                $region145: #{contextual_embedding.3} parent=142 // loop_header
                  %s2363 = sphi 0, %s2367
                  %p2364 = scmp.ge.s32.totalorder %s2363, 1
                  %s2368 = sphi %s2331, %s2331
                  %s2369 = sphi %s2340, %s2340
                $region146: #{contextual_embedding.3} parent=142 // loop_header_branch
                  %2366 = sbr.rel (%p2364) target = $region150
                $region147: #{contextual_embedding.3} parent=142 // loop_body
                  %v2370 = vld [vmem:[%s2368] sm:$0xff]
                  %2371 = vst [vmem:[%s2369] sm:$0xff] %v2370
                  %v2372 = vld [vmem:[%s2368 + $0x8] sm:$0xff]
                  %2373 = vst [vmem:[%s2369 + $0x10] sm:$0xff] %v2372
                $region148: #{contextual_embedding.3} parent=142 // loop_footer
                  %s2367 = sadd.s32 1, %s2363
                $region149: #{contextual_embedding.3} parent=142 // loop_footer_branch
                  %2362 = sbr.rel target = $region145
                $region150: #{contextual_embedding.3} parent=142 // loop_exit
                  _
              $region143: #{contextual_embedding.3} parent=127 // pred_fallthru
                _
              // Predicated region
              $region151: #{contextual_embedding.3} parent=127 // pred_check
                _
              $region152: #{contextual_embedding.3} parent=127 // pred_check_branch
                %2375 = sbr.rel target = $region154
              $region153: #{contextual_embedding.3} parent=127 // pred_region
                _
              $region154: #{contextual_embedding.3} parent=127 // pred_fallthru
                _
            $region128: #{contextual_embedding.3} parent=123 // pred_fallthru
              _
            // Predicated region
            $region129: #{contextual_embedding.3} parent=123 // pred_check
              _
            $region130: #{contextual_embedding.3} parent=123 // pred_check_branch
              %2346 = sbr.rel target = $region132
            $region131: #{contextual_embedding.3} parent=123 // pred_region
              loop: start=0, step=1, limit=1
              $region133: #{contextual_embedding.3} parent=131 // loop_pre_header
                _
              $region134: #{contextual_embedding.3} parent=131 // loop_header
                %s2349 = sphi 0, %s2353
                %p2350 = scmp.ge.s32.totalorder %s2349, 1
                %s2354 = sphi %s2331, %s2331
                %s2355 = sphi %s2340, %s2340
              $region135: #{contextual_embedding.3} parent=131 // loop_header_branch
                %2352 = sbr.rel (%p2350) target = $region139
              $region136: #{contextual_embedding.3} parent=131 // loop_body
                %v2356 = vld [vmem:[%s2354] sm:$0xff]
                %2357 = vst [vmem:[%s2355] sm:$0xff] %v2356
                %v2358 = vld [vmem:[%s2354 + $0x8] sm:$0xff]
                %2359 = vst [vmem:[%s2355 + $0x10] sm:$0xff] %v2358
              $region137: #{contextual_embedding.3} parent=131 // loop_footer
                %s2353 = sadd.s32 1, %s2349
              $region138: #{contextual_embedding.3} parent=131 // loop_footer_branch
                %2348 = sbr.rel target = $region134
              $region139: #{contextual_embedding.3} parent=131 // loop_exit
                _
            $region132: #{contextual_embedding.3} parent=123 // pred_fallthru
              _
          $region124: #{contextual_embedding.3} parent=119 // pred_fallthru
            _
          %2376 = vnop
        $region120: #{contextual_embedding.3} parent=103 // pred_fallthru
          _
        // Predicated region
        $region155: #{contextual_embedding.3} parent=103 // pred_check
          %p2377 = pneg %p159
        $region156: #{contextual_embedding.3} parent=103 // pred_check_branch
          %2379 = sbr.rel (%p2377) target = $region158
        $region157: #{contextual_embedding.3} parent=103 // pred_region
          %s2380 = ssub.s32 1, %s17
          %s2381 = smul.addr %s2380, 8
          %s2382 = scalar_lea.vmem %s5, %s2381
          // Predicated region
          $region159: #{contextual_embedding.3} parent=157 // pred_check
            _
          $region160: #{contextual_embedding.3} parent=157 // pred_check_branch
            %2384 = sbr.rel (0) target = $region162
          $region161: #{contextual_embedding.3} parent=157 // pred_region
            // Predicated region
            $region163: #{contextual_embedding.3} parent=161 // pred_check
              _
            $region164: #{contextual_embedding.3} parent=161 // pred_check_branch
              %2386 = sbr.rel (0) target = $region166
            $region165: #{contextual_embedding.3} parent=161 // pred_region
              // Predicated region
              $region178: #{contextual_embedding.3} parent=165 // pred_check
                _
              $region179: #{contextual_embedding.3} parent=165 // pred_check_branch
                %2403 = sbr.rel (0) target = $region181
              $region180: #{contextual_embedding.3} parent=165 // pred_region
                loop: start=0, step=1, limit=1
                $region182: #{contextual_embedding.3} parent=180 // loop_pre_header
                  _
                $region183: #{contextual_embedding.3} parent=180 // loop_header
                  %s2405 = sphi 0, %s2409
                  %p2406 = scmp.ge.s32.totalorder %s2405, 1
                  %s2410 = sphi %s2335, %s2335
                  %s2411 = sphi %s2382, %s2382
                $region184: #{contextual_embedding.3} parent=180 // loop_header_branch
                  %2408 = sbr.rel (%p2406) target = $region188
                $region185: #{contextual_embedding.3} parent=180 // loop_body
                  %v2412 = vld [vmem:[%s2410] sm:$0xff]
                  %2413 = vst [vmem:[%s2411] sm:$0xff] %v2412
                  %v2414 = vld [vmem:[%s2410 + $0x8] sm:$0xff]
                  %2415 = vst [vmem:[%s2411 + $0x10] sm:$0xff] %v2414
                $region186: #{contextual_embedding.3} parent=180 // loop_footer
                  %s2409 = sadd.s32 1, %s2405
                $region187: #{contextual_embedding.3} parent=180 // loop_footer_branch
                  %2404 = sbr.rel target = $region183
                $region188: #{contextual_embedding.3} parent=180 // loop_exit
                  _
              $region181: #{contextual_embedding.3} parent=165 // pred_fallthru
                _
              // Predicated region
              $region189: #{contextual_embedding.3} parent=165 // pred_check
                _
              $region190: #{contextual_embedding.3} parent=165 // pred_check_branch
                %2417 = sbr.rel target = $region192
              $region191: #{contextual_embedding.3} parent=165 // pred_region
                _
              $region192: #{contextual_embedding.3} parent=165 // pred_fallthru
                _
            $region166: #{contextual_embedding.3} parent=161 // pred_fallthru
              _
            // Predicated region
            $region167: #{contextual_embedding.3} parent=161 // pred_check
              _
            $region168: #{contextual_embedding.3} parent=161 // pred_check_branch
              %2388 = sbr.rel target = $region170
            $region169: #{contextual_embedding.3} parent=161 // pred_region
              loop: start=0, step=1, limit=1
              $region171: #{contextual_embedding.3} parent=169 // loop_pre_header
                _
              $region172: #{contextual_embedding.3} parent=169 // loop_header
                %s2391 = sphi 0, %s2395
                %p2392 = scmp.ge.s32.totalorder %s2391, 1
                %s2396 = sphi %s2335, %s2335
                %s2397 = sphi %s2382, %s2382
              $region173: #{contextual_embedding.3} parent=169 // loop_header_branch
                %2394 = sbr.rel (%p2392) target = $region177
              $region174: #{contextual_embedding.3} parent=169 // loop_body
                %v2398 = vld [vmem:[%s2396] sm:$0xff]
                %2399 = vst [vmem:[%s2397] sm:$0xff] %v2398
                %v2400 = vld [vmem:[%s2396 + $0x8] sm:$0xff]
                %2401 = vst [vmem:[%s2397 + $0x10] sm:$0xff] %v2400
              $region175: #{contextual_embedding.3} parent=169 // loop_footer
                %s2395 = sadd.s32 1, %s2391
              $region176: #{contextual_embedding.3} parent=169 // loop_footer_branch
                %2390 = sbr.rel target = $region172
              $region177: #{contextual_embedding.3} parent=169 // loop_exit
                _
            $region170: #{contextual_embedding.3} parent=161 // pred_fallthru
              _
          $region162: #{contextual_embedding.3} parent=157 // pred_fallthru
            _
          %2418 = vnop
        $region158: #{contextual_embedding.3} parent=103 // pred_fallthru
          _
      $region104: #{contextual_embedding.3} parent=5 // pred_fallthru
        _
      %p2419 = scmp.le.s32.totalorder 2, %s12
      // Predicated region
      $region193: #{contextual_embedding.3} parent=5 // pred_check
        %p2420 = pneg %p2419
      $region194: #{contextual_embedding.3} parent=5 // pred_check_branch
        %2422 = sbr.rel (%p2420) target = $region196
      $region195: #{contextual_embedding.3} parent=5 // pred_region
        %s2423 = ssub.s32 %s12, 2
        // Predicated region
        $region197: #{contextual_embedding.3} parent=195 // pred_check
          %p2424 = pneg %p137
        $region198: #{contextual_embedding.3} parent=195 // pred_check_branch
          %2426 = sbr.rel (%p2424) target = $region200
        $region199: #{contextual_embedding.3} parent=195 // pred_region
          %s2427 = sand.u32 %s122, 1
          %s2428 = sand.u32 %s122, 1
          %s2429 = smul.addr %s2428, 16
          %s2430 = scalar_lea.vmem [#allocation6], %s2429
        $region200: #{contextual_embedding.3} parent=195 // pred_fallthru
          _
        // Predicated region
        $region201: #{contextual_embedding.3} parent=195 // pred_check
          %p2431 = pneg %p165
        $region202: #{contextual_embedding.3} parent=195 // pred_check_branch
          %2433 = sbr.rel (%p2431) target = $region204
        $region203: #{contextual_embedding.3} parent=195 // pred_region
          %s2434 = sand.u32 %s150, 1
          %s2435 = sand.u32 %s150, 1
          %s2436 = smul.addr %s2435, 16
          %s2437 = scalar_lea.vmem [#allocation7], %s2436
        $region204: #{contextual_embedding.3} parent=195 // pred_fallthru
          _
      $region196: #{contextual_embedding.3} parent=5 // pred_fallthru
        _
    $region6: #{contextual_embedding.3} parent=1 // loop_footer
      %s16 = sadd.s32 1, %s12
    $region7: #{contextual_embedding.3} parent=1 // loop_footer_branch
      %11 = sbr.rel target = $region3
    $region8: #{contextual_embedding.3} parent=1 // loop_exit
      _

</llo_original>
